<compile_context>
chip_gen: v6e
topology: v6e:2x2x1
jax: 0.10.0
libtpu: 0.0.40
codegen_flags: <defaults>
</compile_context>

<pallas_src>
import functools

import jax
import jax.numpy as jnp
from jax.experimental import pallas as pl
from jax.experimental.pallas import tpu as pltpu

NEG_INF = -1e30
SLOPE = 0.2          # leaky_relu negative slope
EPS = 1e-16


def _round_up(x, m):
    return ((x + m - 1) // m) * m


def _leaky_relu(x):
    return jnp.where(x >= 0, x, SLOPE * x)


def _linear(x, w, b):
    return jnp.dot(x, w, preferred_element_type=jnp.float32) + b


def _node_match(ids_row, n):
    """ids_row: (1, E) int32 node ids -> (n, E) f32, out[k, e] = (ids[e] == k)."""
    k = jax.lax.broadcasted_iota(jnp.int32, (n, ids_row.shape[-1]), 0)
    return (k == ids_row).astype(jnp.float32)


def _adj_from_matches(m_dst, m_src):
    """(Nd, E) x (Ns, E) -> (Nd, Ns) {0,1} adjacency (contract over the edge axis)."""
    cnt = jax.lax.dot_general(m_dst, m_src, (((1,), (1,)), ((), ())),
                              preferred_element_type=jnp.float32)
    return jnp.minimum(cnt, 1.0)


def _row_mask(n_valid, n_rows):
    r = jax.lax.broadcasted_iota(jnp.int32, (n_rows, 1), 0)
    return (r < n_valid).astype(jnp.float32)


def _place_cols(x, offset, total):
    """Embed x (N, F) into columns [offset, offset+F) of an (N, total) slab via the MXU."""
    f = x.shape[1]
    row = jax.lax.broadcasted_iota(jnp.int32, (f, total), 0)
    col = jax.lax.broadcasted_iota(jnp.int32, (f, total), 1)
    sel = (col == row + offset).astype(jnp.float32)
    return jnp.dot(x, sel, preferred_element_type=jnp.float32)


def _gat_aggregate(adj, neg, scores, msgs, extra_scale=1.0):
    """Masked row-softmax(scores) @ msgs. Single mask, scale-after-dot (EUP reciprocal).
    Rows without edges correctly yield 0 (as PyG scatter_add would)."""
    m = jnp.max(scores + neg, axis=-1, keepdims=True)          # masked row max
    p = jnp.exp(jnp.minimum(scores - m, 0.0)) * adj             # one mask multiply
    denom = jnp.sum(p, axis=-1, keepdims=True)
    aggr = jnp.dot(p, msgs, preferred_element_type=jnp.float32)
    return aggr * (pl.reciprocal(denom + EPS, approx=True) * extra_scale)


def _bipartite_gat(adj, x_msg, x_dst, att, bias):
    """BipartiteGAT propagate+update+residual (heads=1, attention_concat=False)."""
    s = _leaky_relu(jnp.einsum("hf,nf->hn", att, x_msg,
                               preferred_element_type=jnp.float32))   # (1, Nm)
    neg = NEG_INF * (1.0 - adj)
    aggr = _gat_aggregate(adj, neg, s, x_msg)
    return aggr + bias + x_dst


def _gat_conv(adj, x, asrc_ref, adst_ref, bias, heads, out_ch):
    """PyG GATConv aggregation (self-loops already in adj, concat=False -> head mean)."""
    neg = NEG_INF * (1.0 - adj)          # mask term hoisted out of the head loop
    inv_h = 1.0 / float(heads)           # head-mean folded into per-head row scale
    acc = jnp.zeros((adj.shape[0], out_ch), jnp.float32)
    for h in range(heads):               # static unroll (heads is 4 or 1)
        xh = x[:, h * out_ch:(h + 1) * out_ch]
        a_src = asrc_ref[h:h + 1, :]                                     # (1, C)
        a_dst = adst_ref[h:h + 1, :]
        s_src = jnp.einsum("hc,nc->hn", a_src, xh,
                           preferred_element_type=jnp.float32)           # (1, N)
        s_dst = jnp.sum(xh * a_dst, axis=-1, keepdims=True)              # (N, 1)
        s = _leaky_relu(s_dst + s_src)                                   # (N, N)
        acc = acc + _gat_aggregate(adj, neg, s, xh, extra_scale=inv_h)
    return acc + bias


# --------------------------------------------------------------------------------------
# Single fused kernel: whole DiMiMeNet forward (encoder + decoder)
# --------------------------------------------------------------------------------------
def dimime_net_kernel(
    # graph structure
    ebc_src, ebc_dst, eac_src, eac_dst, ecc_src, ecc_dst, pair_b, pair_a,
    # raw node features (row-padded to R in the wrapper)
    bfeat, afeat, cfeat,
    # BipartiteGAT B->C
    bc_wi, bc_bi, bc_wj, bc_bj, bc_att, bc_bias,
    # BipartiteGAT A->C
    ac_wi, ac_bi, ac_wj, ac_bj, ac_att, ac_bias,
    # GATConv 1 (heads=4, concat=False)
    g1_w, g1_asrc, g1_adst, g1_bias,
    # GATConv 2 (heads=1, concat=False)
    g2_w, g2_asrc, g2_adst, g2_bias,
    # BipartiteGAT C->B
    cb_wi, cb_bi, cb_wj, cb_bj, cb_att, cb_bias,
    # BipartiteGAT C->A
    ca_wi, ca_bi, ca_wj, ca_bj, ca_att, ca_bias,
    # decoder MLP
    d_w1, d_b1, d_w2, d_b2, d_w3t, d_b3,
    # outputs
    slab_ref, pred_ref,
    *, C_num, B_num, A_num, hidden, heads1,
):
    f32 = jnp.float32
    R = slab_ref.shape[0]
    lanes = slab_ref.shape[1]

    # ---- adjacency masks built in-kernel from edge lists (no XLA scatter / transpose) ----
    m_c_bc = _node_match(ebc_dst[...], R)            # (R, E): C endpoint match
    m_b_bc = _node_match(ebc_src[...], R)            # (R, E): B endpoint match
    adj_cb = _adj_from_matches(m_c_bc, m_b_bc)       # rows = C, cols = B
    adj_bc = _adj_from_matches(m_b_bc, m_c_bc)       # rows = B, cols = C

    m_c_ac = _node_match(eac_dst[...], R)
    m_a_ac = _node_match(eac_src[...], R)
    adj_ca = _adj_from_matches(m_c_ac, m_a_ac)
    adj_ac = _adj_from_matches(m_a_ac, m_c_ac)

    m_cd = _node_match(ecc_dst[...], R)
    m_cs = _node_match(ecc_src[...], R)
    adj_cc = _adj_from_matches(m_cd, m_cs)
    eye = (jax.lax.broadcasted_iota(jnp.int32, (R, R), 0)
           == jax.lax.broadcasted_iota(jnp.int32, (R, R), 1)).astype(f32)
    adj_cc = jnp.maximum(adj_cc, eye)                # forced self-loops (PyG default)

    Bf = bfeat[...]
    Af = afeat[...]
    Cf = cfeat[...]

    # ---- B_C_gat (flow source_to_target): messages from B into C, residual mlp_j(C) ----
    C_from_B = jnp.maximum(
        _bipartite_gat(adj_cb,
                       _linear(Bf, bc_wi[...], bc_bi[...]),
                       _linear(Cf, bc_wj[...], bc_bj[...]),
                       bc_att[...], bc_bias[...]), 0.0)

    # ---- A_C_gat ----
    C_from_A = jnp.maximum(
        _bipartite_gat(adj_ca,
                       _linear(Af, ac_wi[...], ac_bi[...]),
                       _linear(Cf, ac_wj[...], ac_bj[...]),
                       ac_att[...], ac_bias[...]), 0.0)

    # ---- C_C_gat1: cat([C_from_B, C_from_A], 1) @ W  done as a split matmul (no concat) ----
    x1 = (jnp.dot(C_from_B, g1_w[0:hidden, :], preferred_element_type=f32)
          + jnp.dot(C_from_A, g1_w[hidden:2 * hidden, :], preferred_element_type=f32))
    C_h = jnp.maximum(
        _gat_conv(adj_cc, x1, g1_asrc, g1_adst, g1_bias[...], heads1, hidden), 0.0)

    # ---- C_C_gat2 (heads=1) + tanh ----
    x2 = jnp.dot(C_h, g2_w[...], preferred_element_type=f32)
    C_h = jnp.tanh(_gat_conv(adj_cc, x2, g2_asrc, g2_adst, g2_bias[...], 1, hidden))

    # ---- C_B_gat (flow target_to_source): messages mlp_j(C_h) into B, residual mlp_i(B) ----
    B_out = jnp.maximum(
        _bipartite_gat(adj_bc,
                       _linear(C_h, cb_wj[...], cb_bj[...]),
                       _linear(Bf, cb_wi[...], cb_bi[...]),
                       cb_att[...], cb_bias[...]), 0.0)

    # ---- C_A_gat ----
    A_out = jnp.maximum(
        _bipartite_gat(adj_ac,
                       _linear(C_h, ca_wj[...], ca_bj[...]),
                       _linear(Af, ca_wi[...], ca_bi[...]),
                       ca_att[...], ca_bias[...]), 0.0)

    # ---- decoder MLP on requested (B, A) pairs: one-hot gather on the MXU ----
    P = pred_ref.shape[0]
    selB = (pair_b[...] == jax.lax.broadcasted_iota(jnp.int32, (P, R), 1)).astype(f32)
    selA = (pair_a[...] == jax.lax.broadcasted_iota(jnp.int32, (P, R), 1)).astype(f32)
    Bp = jnp.dot(selB, B_out, preferred_element_type=f32)        # (P, hidden)
    Ap = jnp.dot(selA, A_out, preferred_element_type=f32)        # (P, hidden)
    # cat([Bp, Ap], 1) @ w1 as a split matmul
    h1 = jnp.maximum(
        jnp.dot(Bp, d_w1[0:hidden, :], preferred_element_type=f32)
        + jnp.dot(Ap, d_w1[hidden:2 * hidden, :], preferred_element_type=f32)
        + d_b1[...], 0.0)
    h2 = jnp.maximum(_linear(h1, d_w2[...], d_b2[...]), 0.0)
    logit = jnp.sum(h2 * d_w3t[...], axis=-1, keepdims=True) + d_b3[...]   # (P, 1)
    pred_ref[...] = 1.0 / (1.0 + jnp.exp(-logit))
    # TODO(synk): F.dropout(p=0.1) / nn.Dropout2d(p=0.1) are inference-mode (identity).

    # ---- packed lane-dense feature slab: [ C_h | B_out | A_out | 0 ], one full-width store ----
    slab = (_place_cols(C_h * _row_mask(C_num, R), 0, lanes)
            + _place_cols(B_out * _row_mask(B_num, R), hidden, lanes)
            + _place_cols(A_out * _row_mask(A_num, R), 2 * hidden, lanes))
    slab_ref[...] = slab


# --------------------------------------------------------------------------------------
# Wrapper: pads node features to aligned row counts, passes edge lists / pair indices
# and all weights into ONE pallas_call, then slices the packed outputs back out.
# --------------------------------------------------------------------------------------
def dimime_net_forward(params, C_C, B_C, A_C, B_feature, A_feature, C_feature, pair,
                       C_num, B_num, A_num):
    hidden = params["B_C_gat"]["wi"].shape[1]
    heads1 = params["C_C_gat1"]["att_src"].shape[0]
    R = max(_round_up(max(C_num, B_num, A_num), 8), 8)
    lanes = max(128, _round_up(3 * hidden, 128))
    P = pair.shape[1]
    i32 = jnp.int32

    def pad_rows(x, rows):
        return jnp.pad(x.astype(jnp.float32), ((0, rows - x.shape[0]), (0, 0)))

    Bf = pad_rows(B_feature, R)
    Af = pad_rows(A_feature, R)
    Cf = pad_rows(C_feature, R)

    structure = (
        B_C[0:1, :].astype(i32), B_C[1:2, :].astype(i32),
        A_C[0:1, :].astype(i32), A_C[1:2, :].astype(i32),
        C_C[0:1, :].astype(i32), C_C[1:2, :].astype(i32),
        pair[0, :].reshape(P, 1).astype(i32), pair[1, :].reshape(P, 1).astype(i32),
    )

    p_bc = params["B_C_gat"]
    p_ac = params["A_C_gat"]
    p_g1 = params["C_C_gat1"]
    p_g2 = params["C_C_gat2"]
    p_cb = params["C_B_gat"]
    p_ca = params["C_A_gat"]
    p_d = params["decoder"]
    bip_keys = ("wi", "bi", "wj", "bj", "att", "bias")
    gat_keys = ("w", "att_src", "att_dst", "bias")

    operands = (structure + (Bf, Af, Cf)
                + tuple(p_bc[k] for k in bip_keys)
                + tuple(p_ac[k] for k in bip_keys)
                + tuple(p_g1[k] for k in gat_keys)
                + tuple(p_g2[k] for k in gat_keys)
                + tuple(p_cb[k] for k in bip_keys)
                + tuple(p_ca[k] for k in bip_keys)
                + tuple(p_d[k] for k in ("w1", "b1", "w2", "b2", "w3t", "b3")))

    kernel = functools.partial(dimime_net_kernel, C_num=C_num, B_num=B_num,
                               A_num=A_num, hidden=hidden, heads1=heads1)

    slab, pred = pl.pallas_call(
        kernel,
        out_shape=(jax.ShapeDtypeStruct((R, lanes), jnp.float32),
                   jax.ShapeDtypeStruct((P, 1), jnp.float32)),
        in_specs=[pl.BlockSpec(memory_space=pltpu.MemorySpace.VMEM)
                  for _ in range(len(operands))],
        out_specs=(pl.BlockSpec(memory_space=pltpu.MemorySpace.VMEM),
                   pl.BlockSpec(memory_space=pltpu.MemorySpace.VMEM)),
    )(*operands)

    prediction = pred.reshape(-1)
    C_out = slab[:C_num, 0:hidden]
    B_out = slab[:B_num, hidden:2 * hidden]
    A_out = slab[:A_num, 2 * hidden:3 * hidden]
    return prediction, B_out, A_out, C_out


# --------------------------------------------------------------------------------------
# Deterministic parameter init (shapes follow the modules' __init__)
# --------------------------------------------------------------------------------------
def init_params(key, hidden, B_f, A_f, C_f):
    keys = iter(jax.random.split(key, 64))

    def w(shape, scale=0.1):
        return jax.random.normal(next(keys), shape, jnp.float32) * scale

    def bip(fi, fj, h):
        return dict(
            wi=w((fi, h)), bi=w((1, h)),             # mlp_i
            wj=w((fj, h)), bj=w((1, h)),             # mlp_j
            att=w((1, h)),                           # att (1, heads=1, out)
            bias=jnp.zeros((1, h), jnp.float32),     # zeros(bias)
        )

    def gatc(fin, h, heads):
        return dict(
            w=w((fin, heads * h)),                   # lin (bias=False)
            att_src=w((heads, h)), att_dst=w((heads, h)),
            bias=jnp.zeros((1, h), jnp.float32),
        )

    return dict(
        B_C_gat=bip(B_f, C_f, hidden),
        A_C_gat=bip(A_f, C_f, hidden),
        C_C_gat1=gatc(2 * hidden, hidden, 4),
        C_C_gat2=gatc(hidden, hidden, 1),
        C_B_gat=bip(B_f, hidden, hidden),
        C_A_gat=bip(A_f, hidden, hidden),
        decoder=dict(                                # Mlp(input_dim=hidden)
            w1=w((2 * hidden, hidden)), b1=w((1, hidden)),
            w2=w((hidden, hidden // 2)), b2=w((1, hidden // 2)),
            w3t=w((1, hidden // 2)), b3=w((1, 1)),   # w3 stored transposed (1, h//2)
        ),
    )


if __name__ == "__main__":
    C_num, B_num, A_num = 16, 12, 10
    C_f, B_f, A_f = 8, 6, 5
    hidden = 32
    n_pairs = 8

    key = jax.random.PRNGKey(0)
    k1, k2, k3, k4, k5, k6, k7, kp = jax.random.split(key, 8)

    def edges_from_adj(adj):                  # adj[src, dst] -> edge_index (2, E)
        r, c = jnp.nonzero(adj)
        return jnp.stack([r, c]).astype(jnp.int32)

    B_C = edges_from_adj(jax.random.bernoulli(k1, 0.4, (B_num, C_num)))  # [B idx; C idx]
    A_C = edges_from_adj(jax.random.bernoulli(k2, 0.4, (A_num, C_num)))  # [A idx; C idx]
    C_C = edges_from_adj(jax.random.bernoulli(k3, 0.3, (C_num, C_num)))  # [src; dst]

    B_feature = jax.random.normal(k4, (B_num, B_f), jnp.float32)
    A_feature = jax.random.normal(k5, (A_num, A_f), jnp.float32)
    C_feature = jax.random.normal(k6, (C_num, C_f), jnp.float32)

    pair = jnp.stack([
        jax.random.randint(k7, (n_pairs,), 0, B_num),
        jax.random.randint(jax.random.fold_in(k7, 1), (n_pairs,), 0, A_num),
    ]).astype(jnp.int32)

    params = init_params(kp, hidden, B_f, A_f, C_f)

    pred, B_out, A_out, C_out = dimime_net_forward(
        params, C_C, B_C, A_C, B_feature, A_feature, C_feature, pair,
        C_num, B_num, A_num)
    jax.block_until_ready((pred, B_out, A_out, C_out))

    assert pred.shape == (n_pairs,)
    assert B_out.shape == (B_num, hidden)
    assert A_out.shape == (A_num, hidden)
    assert C_out.shape == (C_num, hidden)
    assert all(bool(jnp.all(jnp.isfinite(t))) for t in (pred, B_out, A_out, C_out))
    assert bool(jnp.all((pred >= 0.0) & (pred <= 1.0)))
    print("KERNEL_OK")
</pallas_src>

<mosaic_0001>
module attributes {stable_mosaic.version = 11 : i64} {
  func.func @dimime_net_kernel(%arg0: memref<1x81xi32, #tpu.memory_space<vmem>>, %arg1: memref<1x81xi32, #tpu.memory_space<vmem>>, %arg2: memref<1x70xi32, #tpu.memory_space<vmem>>, %arg3: memref<1x70xi32, #tpu.memory_space<vmem>>, %arg4: memref<1x80xi32, #tpu.memory_space<vmem>>, %arg5: memref<1x80xi32, #tpu.memory_space<vmem>>, %arg6: memref<8x1xi32, #tpu.memory_space<vmem>>, %arg7: memref<8x1xi32, #tpu.memory_space<vmem>>, %arg8: memref<16x6xf32, #tpu.memory_space<vmem>>, %arg9: memref<16x5xf32, #tpu.memory_space<vmem>>, %arg10: memref<16x8xf32, #tpu.memory_space<vmem>>, %arg11: memref<6x32xf32, #tpu.memory_space<vmem>>, %arg12: memref<1x32xf32, #tpu.memory_space<vmem>>, %arg13: memref<8x32xf32, #tpu.memory_space<vmem>>, %arg14: memref<1x32xf32, #tpu.memory_space<vmem>>, %arg15: memref<1x32xf32, #tpu.memory_space<vmem>>, %arg16: memref<1x32xf32, #tpu.memory_space<vmem>>, %arg17: memref<5x32xf32, #tpu.memory_space<vmem>>, %arg18: memref<1x32xf32, #tpu.memory_space<vmem>>, %arg19: memref<8x32xf32, #tpu.memory_space<vmem>>, %arg20: memref<1x32xf32, #tpu.memory_space<vmem>>, %arg21: memref<1x32xf32, #tpu.memory_space<vmem>>, %arg22: memref<1x32xf32, #tpu.memory_space<vmem>>, %arg23: memref<64x128xf32, #tpu.memory_space<vmem>>, %arg24: memref<4x32xf32, #tpu.memory_space<vmem>>, %arg25: memref<4x32xf32, #tpu.memory_space<vmem>>, %arg26: memref<1x32xf32, #tpu.memory_space<vmem>>, %arg27: memref<32x32xf32, #tpu.memory_space<vmem>>, %arg28: memref<1x32xf32, #tpu.memory_space<vmem>>, %arg29: memref<1x32xf32, #tpu.memory_space<vmem>>, %arg30: memref<1x32xf32, #tpu.memory_space<vmem>>, %arg31: memref<6x32xf32, #tpu.memory_space<vmem>>, %arg32: memref<1x32xf32, #tpu.memory_space<vmem>>, %arg33: memref<32x32xf32, #tpu.memory_space<vmem>>, %arg34: memref<1x32xf32, #tpu.memory_space<vmem>>, %arg35: memref<1x32xf32, #tpu.memory_space<vmem>>, %arg36: memref<1x32xf32, #tpu.memory_space<vmem>>, %arg37: memref<5x32xf32, #tpu.memory_space<vmem>>, %arg38: memref<1x32xf32, #tpu.memory_space<vmem>>, %arg39: memref<32x32xf32, #tpu.memory_space<vmem>>, %arg40: memref<1x32xf32, #tpu.memory_space<vmem>>, %arg41: memref<1x32xf32, #tpu.memory_space<vmem>>, %arg42: memref<1x32xf32, #tpu.memory_space<vmem>>, %arg43: memref<64x32xf32, #tpu.memory_space<vmem>>, %arg44: memref<1x32xf32, #tpu.memory_space<vmem>>, %arg45: memref<32x16xf32, #tpu.memory_space<vmem>>, %arg46: memref<1x16xf32, #tpu.memory_space<vmem>>, %arg47: memref<1x16xf32, #tpu.memory_space<vmem>>, %arg48: memref<1x1xf32, #tpu.memory_space<vmem>>, %arg49: memref<16x128xf32, #tpu.memory_space<vmem>>, %arg50: memref<8x1xf32, #tpu.memory_space<vmem>>) attributes {dimension_semantics = [], scalar_prefetch = 0 : i64, scratch_operands = 0 : i64, tpu.core_type = #tpu.core_type<tc>} {
    %c0 = arith.constant 0 : index
    %c0_0 = arith.constant 0 : index
    %0 = vector.load %arg1[%c0, %c0_0] : memref<1x81xi32, #tpu.memory_space<vmem>>, vector<1x81xi32>
    %1 = tpu.iota {dimensions = array<i32: 0>} : vector<16x81xi32>
    %2 = vector.broadcast %0 : vector<1x81xi32> to vector<16x81xi32>
    %3 = arith.cmpi eq, %1, %2 : vector<16x81xi32>
    %4 = arith.extui %3 : vector<16x81xi1> to vector<16x81xi32>
    %5 = arith.sitofp %4 : vector<16x81xi32> to vector<16x81xf32>
    %c0_1 = arith.constant 0 : index
    %c0_2 = arith.constant 0 : index
    %6 = vector.load %arg0[%c0_1, %c0_2] : memref<1x81xi32, #tpu.memory_space<vmem>>, vector<1x81xi32>
    %7 = tpu.iota {dimensions = array<i32: 0>} : vector<16x81xi32>
    %8 = vector.broadcast %6 : vector<1x81xi32> to vector<16x81xi32>
    %9 = arith.cmpi eq, %7, %8 : vector<16x81xi32>
    %10 = arith.extui %9 : vector<16x81xi1> to vector<16x81xi32>
    %11 = arith.sitofp %10 : vector<16x81xi32> to vector<16x81xf32>
    %cst = arith.constant dense<0.000000e+00> : vector<16x16xf32>
    %12 = tpu.matmul %5, %11, %cst {dimension_numbers = #tpu.dot_dimension_numbers<[1], [1], [0], [0], [0, 0, 1, 0], [], []>} : vector<16x81xf32>, vector<16x81xf32>, vector<16x16xf32> -> vector<16x16xf32>
    %cst_3 = arith.constant 1.000000e+00 : f32
    %13 = vector.broadcast %cst_3 : f32 to vector<16x16xf32>
    %14 = arith.minimumf %12, %13 : vector<16x16xf32>
    %cst_4 = arith.constant dense<0.000000e+00> : vector<16x16xf32>
    %15 = tpu.matmul %11, %5, %cst_4 {dimension_numbers = #tpu.dot_dimension_numbers<[1], [1], [0], [0], [0, 0, 1, 0], [], []>} : vector<16x81xf32>, vector<16x81xf32>, vector<16x16xf32> -> vector<16x16xf32>
    %cst_5 = arith.constant 1.000000e+00 : f32
    %16 = vector.broadcast %cst_5 : f32 to vector<16x16xf32>
    %17 = arith.minimumf %15, %16 : vector<16x16xf32>
    %c0_6 = arith.constant 0 : index
    %c0_7 = arith.constant 0 : index
    %18 = vector.load %arg3[%c0_6, %c0_7] : memref<1x70xi32, #tpu.memory_space<vmem>>, vector<1x70xi32>
    %19 = tpu.iota {dimensions = array<i32: 0>} : vector<16x70xi32>
    %20 = vector.broadcast %18 : vector<1x70xi32> to vector<16x70xi32>
    %21 = arith.cmpi eq, %19, %20 : vector<16x70xi32>
    %22 = arith.extui %21 : vector<16x70xi1> to vector<16x70xi32>
    %23 = arith.sitofp %22 : vector<16x70xi32> to vector<16x70xf32>
    %c0_8 = arith.constant 0 : index
    %c0_9 = arith.constant 0 : index
    %24 = vector.load %arg2[%c0_8, %c0_9] : memref<1x70xi32, #tpu.memory_space<vmem>>, vector<1x70xi32>
    %25 = tpu.iota {dimensions = array<i32: 0>} : vector<16x70xi32>
    %26 = vector.broadcast %24 : vector<1x70xi32> to vector<16x70xi32>
    %27 = arith.cmpi eq, %25, %26 : vector<16x70xi32>
    %28 = arith.extui %27 : vector<16x70xi1> to vector<16x70xi32>
    %29 = arith.sitofp %28 : vector<16x70xi32> to vector<16x70xf32>
    %cst_10 = arith.constant dense<0.000000e+00> : vector<16x16xf32>
    %30 = tpu.matmul %23, %29, %cst_10 {dimension_numbers = #tpu.dot_dimension_numbers<[1], [1], [0], [0], [0, 0, 1, 0], [], []>} : vector<16x70xf32>, vector<16x70xf32>, vector<16x16xf32> -> vector<16x16xf32>
    %cst_11 = arith.constant 1.000000e+00 : f32
    %31 = vector.broadcast %cst_11 : f32 to vector<16x16xf32>
    %32 = arith.minimumf %30, %31 : vector<16x16xf32>
    %cst_12 = arith.constant dense<0.000000e+00> : vector<16x16xf32>
    %33 = tpu.matmul %29, %23, %cst_12 {dimension_numbers = #tpu.dot_dimension_numbers<[1], [1], [0], [0], [0, 0, 1, 0], [], []>} : vector<16x70xf32>, vector<16x70xf32>, vector<16x16xf32> -> vector<16x16xf32>
    %cst_13 = arith.constant 1.000000e+00 : f32
    %34 = vector.broadcast %cst_13 : f32 to vector<16x16xf32>
    %35 = arith.minimumf %33, %34 : vector<16x16xf32>
    %c0_14 = arith.constant 0 : index
    %c0_15 = arith.constant 0 : index
    %36 = vector.load %arg5[%c0_14, %c0_15] : memref<1x80xi32, #tpu.memory_space<vmem>>, vector<1x80xi32>
    %37 = tpu.iota {dimensions = array<i32: 0>} : vector<16x80xi32>
    %38 = vector.broadcast %36 : vector<1x80xi32> to vector<16x80xi32>
    %39 = arith.cmpi eq, %37, %38 : vector<16x80xi32>
    %40 = arith.extui %39 : vector<16x80xi1> to vector<16x80xi32>
    %41 = arith.sitofp %40 : vector<16x80xi32> to vector<16x80xf32>
    %c0_16 = arith.constant 0 : index
    %c0_17 = arith.constant 0 : index
    %42 = vector.load %arg4[%c0_16, %c0_17] : memref<1x80xi32, #tpu.memory_space<vmem>>, vector<1x80xi32>
    %43 = tpu.iota {dimensions = array<i32: 0>} : vector<16x80xi32>
    %44 = vector.broadcast %42 : vector<1x80xi32> to vector<16x80xi32>
    %45 = arith.cmpi eq, %43, %44 : vector<16x80xi32>
    %46 = arith.extui %45 : vector<16x80xi1> to vector<16x80xi32>
    %47 = arith.sitofp %46 : vector<16x80xi32> to vector<16x80xf32>
    %cst_18 = arith.constant dense<0.000000e+00> : vector<16x16xf32>
    %48 = tpu.matmul %41, %47, %cst_18 {dimension_numbers = #tpu.dot_dimension_numbers<[1], [1], [0], [0], [0, 0, 1, 0], [], []>} : vector<16x80xf32>, vector<16x80xf32>, vector<16x16xf32> -> vector<16x16xf32>
    %cst_19 = arith.constant 1.000000e+00 : f32
    %49 = vector.broadcast %cst_19 : f32 to vector<16x16xf32>
    %50 = arith.minimumf %48, %49 : vector<16x16xf32>
    %51 = tpu.iota {dimensions = array<i32: 0>} : vector<16x16xi32>
    %52 = tpu.iota {dimensions = array<i32: 1>} : vector<16x16xi32>
    %53 = arith.cmpi eq, %51, %52 : vector<16x16xi32>
    %54 = arith.extui %53 : vector<16x16xi1> to vector<16x16xi32>
    %55 = arith.sitofp %54 : vector<16x16xi32> to vector<16x16xf32>
    %56 = arith.maximumf %50, %55 : vector<16x16xf32>
    %c0_20 = arith.constant 0 : index
    %c0_21 = arith.constant 0 : index
    %57 = vector.load %arg8[%c0_20, %c0_21] : memref<16x6xf32, #tpu.memory_space<vmem>>, vector<16x6xf32>
    %c0_22 = arith.constant 0 : index
    %c0_23 = arith.constant 0 : index
    %58 = vector.load %arg9[%c0_22, %c0_23] : memref<16x5xf32, #tpu.memory_space<vmem>>, vector<16x5xf32>
    %c0_24 = arith.constant 0 : index
    %c0_25 = arith.constant 0 : index
    %59 = vector.load %arg10[%c0_24, %c0_25] : memref<16x8xf32, #tpu.memory_space<vmem>>, vector<16x8xf32>
    %c0_26 = arith.constant 0 : index
    %c0_27 = arith.constant 0 : index
    %60 = vector.load %arg11[%c0_26, %c0_27] : memref<6x32xf32, #tpu.memory_space<vmem>>, vector<6x32xf32>
    %c0_28 = arith.constant 0 : index
    %c0_29 = arith.constant 0 : index
    %61 = vector.load %arg12[%c0_28, %c0_29] : memref<1x32xf32, #tpu.memory_space<vmem>>, vector<1x32xf32>
    %cst_30 = arith.constant dense<0.000000e+00> : vector<16x32xf32>
    %62 = tpu.matmul %57, %60, %cst_30 {dimension_numbers = #tpu.dot_dimension_numbers<[1], [0], [0], [1], [0, 0, 1, 1], [], []>} : vector<16x6xf32>, vector<6x32xf32>, vector<16x32xf32> -> vector<16x32xf32>
    %63 = vector.broadcast %61 : vector<1x32xf32> to vector<16x32xf32>
    %64 = arith.addf %62, %63 : vector<16x32xf32>
    %c0_31 = arith.constant 0 : index
    %c0_32 = arith.constant 0 : index
    %65 = vector.load %arg13[%c0_31, %c0_32] : memref<8x32xf32, #tpu.memory_space<vmem>>, vector<8x32xf32>
    %c0_33 = arith.constant 0 : index
    %c0_34 = arith.constant 0 : index
    %66 = vector.load %arg14[%c0_33, %c0_34] : memref<1x32xf32, #tpu.memory_space<vmem>>, vector<1x32xf32>
    %cst_35 = arith.constant dense<0.000000e+00> : vector<16x32xf32>
    %67 = tpu.matmul %59, %65, %cst_35 {dimension_numbers = #tpu.dot_dimension_numbers<[1], [0], [0], [1], [0, 0, 1, 1], [], []>} : vector<16x8xf32>, vector<8x32xf32>, vector<16x32xf32> -> vector<16x32xf32>
    %68 = vector.broadcast %66 : vector<1x32xf32> to vector<16x32xf32>
    %69 = arith.addf %67, %68 : vector<16x32xf32>
    %c0_36 = arith.constant 0 : index
    %c0_37 = arith.constant 0 : index
    %70 = vector.load %arg15[%c0_36, %c0_37] : memref<1x32xf32, #tpu.memory_space<vmem>>, vector<1x32xf32>
    %c0_38 = arith.constant 0 : index
    %c0_39 = arith.constant 0 : index
    %71 = vector.load %arg16[%c0_38, %c0_39] : memref<1x32xf32, #tpu.memory_space<vmem>>, vector<1x32xf32>
    "tpu.trace_start"() <{level = 10 : i32, message = "hf,nf->hn"}> : () -> ()
    %cst_40 = arith.constant dense<0.000000e+00> : vector<1x16xf32>
    %72 = tpu.matmul %70, %64, %cst_40 {dimension_numbers = #tpu.dot_dimension_numbers<[1], [1], [0], [0], [0, 0, 1, 0], [], []>} : vector<1x32xf32>, vector<16x32xf32>, vector<1x16xf32> -> vector<1x16xf32>
    %cst_41 = arith.constant 0.000000e+00 : f32
    "tpu.trace_stop"() : () -> ()
    %73 = vector.broadcast %cst_41 : f32 to vector<1x16xf32>
    %74 = arith.cmpf oge, %72, %73 : vector<1x16xf32>
    %cst_42 = arith.constant 2.000000e-01 : f32
    %75 = vector.broadcast %cst_42 : f32 to vector<1x16xf32>
    %76 = arith.mulf %75, %72 : vector<1x16xf32>
    %77 = arith.select %74, %72, %76 : vector<1x16xi1>, vector<1x16xf32>
    %cst_43 = arith.constant 1.000000e+00 : f32
    %78 = vector.broadcast %cst_43 : f32 to vector<16x16xf32>
    %79 = arith.subf %78, %14 : vector<16x16xf32>
    %cst_44 = arith.constant -1.000000e+30 : f32
    %80 = vector.broadcast %cst_44 : f32 to vector<16x16xf32>
    %81 = arith.mulf %80, %79 : vector<16x16xf32>
    %82 = vector.broadcast %77 : vector<1x16xf32> to vector<16x16xf32>
    %83 = arith.addf %82, %81 : vector<16x16xf32>
    %cst_45 = arith.constant dense<0xFF800000> : vector<16xf32>
    %84 = vector.multi_reduction <maximumf>, %83, %cst_45 [1] : vector<16x16xf32> to vector<16xf32>
    %85 = vector.shape_cast %84 : vector<16xf32> to vector<16x1xf32>
    %86 = vector.broadcast %77 : vector<1x16xf32> to vector<16x16xf32>
    %87 = vector.broadcast %85 : vector<16x1xf32> to vector<16x16xf32>
    %88 = arith.subf %86, %87 : vector<16x16xf32>
    %cst_46 = arith.constant 0.000000e+00 : f32
    %89 = vector.broadcast %cst_46 : f32 to vector<16x16xf32>
    %90 = arith.minimumf %88, %89 : vector<16x16xf32>
    %91 = math.exp %90 : vector<16x16xf32>
    %92 = arith.mulf %91, %14 : vector<16x16xf32>
    %cst_47 = arith.constant dense<0.000000e+00> : vector<16xf32>
    %93 = vector.multi_reduction <add>, %92, %cst_47 [1] : vector<16x16xf32> to vector<16xf32>
    %94 = vector.shape_cast %93 : vector<16xf32> to vector<16x1xf32>
    %cst_48 = arith.constant dense<0.000000e+00> : vector<16x32xf32>
    %95 = tpu.matmul %92, %64, %cst_48 {dimension_numbers = #tpu.dot_dimension_numbers<[1], [0], [0], [1], [0, 0, 1, 1], [], []>} : vector<16x16xf32>, vector<16x32xf32>, vector<16x32xf32> -> vector<16x32xf32>
    %cst_49 = arith.constant 1.000000e-16 : f32
    %96 = vector.broadcast %cst_49 : f32 to vector<16x1xf32>
    %97 = arith.addf %94, %96 : vector<16x1xf32>
    %98 = tpu.reciprocal %97 {approx = true} : vector<16x1xf32> -> vector<16x1xf32>
    %cst_50 = arith.constant 1.000000e+00 : f32
    %99 = vector.broadcast %cst_50 : f32 to vector<16x1xf32>
    %100 = arith.mulf %98, %99 : vector<16x1xf32>
    %101 = vector.broadcast %100 : vector<16x1xf32> to vector<16x32xf32>
    %102 = arith.mulf %95, %101 : vector<16x32xf32>
    %103 = vector.broadcast %71 : vector<1x32xf32> to vector<16x32xf32>
    %104 = arith.addf %102, %103 : vector<16x32xf32>
    %105 = arith.addf %104, %69 : vector<16x32xf32>
    %cst_51 = arith.constant 0.000000e+00 : f32
    %106 = vector.broadcast %cst_51 : f32 to vector<16x32xf32>
    %107 = arith.maximumf %105, %106 : vector<16x32xf32>
    %c0_52 = arith.constant 0 : index
    %c0_53 = arith.constant 0 : index
    %108 = vector.load %arg17[%c0_52, %c0_53] : memref<5x32xf32, #tpu.memory_space<vmem>>, vector<5x32xf32>
    %c0_54 = arith.constant 0 : index
    %c0_55 = arith.constant 0 : index
    %109 = vector.load %arg18[%c0_54, %c0_55] : memref<1x32xf32, #tpu.memory_space<vmem>>, vector<1x32xf32>
    %cst_56 = arith.constant dense<0.000000e+00> : vector<16x32xf32>
    %110 = tpu.matmul %58, %108, %cst_56 {dimension_numbers = #tpu.dot_dimension_numbers<[1], [0], [0], [1], [0, 0, 1, 1], [], []>} : vector<16x5xf32>, vector<5x32xf32>, vector<16x32xf32> -> vector<16x32xf32>
    %111 = vector.broadcast %109 : vector<1x32xf32> to vector<16x32xf32>
    %112 = arith.addf %110, %111 : vector<16x32xf32>
    %c0_57 = arith.constant 0 : index
    %c0_58 = arith.constant 0 : index
    %113 = vector.load %arg19[%c0_57, %c0_58] : memref<8x32xf32, #tpu.memory_space<vmem>>, vector<8x32xf32>
    %c0_59 = arith.constant 0 : index
    %c0_60 = arith.constant 0 : index
    %114 = vector.load %arg20[%c0_59, %c0_60] : memref<1x32xf32, #tpu.memory_space<vmem>>, vector<1x32xf32>
    %cst_61 = arith.constant dense<0.000000e+00> : vector<16x32xf32>
    %115 = tpu.matmul %59, %113, %cst_61 {dimension_numbers = #tpu.dot_dimension_numbers<[1], [0], [0], [1], [0, 0, 1, 1], [], []>} : vector<16x8xf32>, vector<8x32xf32>, vector<16x32xf32> -> vector<16x32xf32>
    %116 = vector.broadcast %114 : vector<1x32xf32> to vector<16x32xf32>
    %117 = arith.addf %115, %116 : vector<16x32xf32>
    %c0_62 = arith.constant 0 : index
    %c0_63 = arith.constant 0 : index
    %118 = vector.load %arg21[%c0_62, %c0_63] : memref<1x32xf32, #tpu.memory_space<vmem>>, vector<1x32xf32>
    %c0_64 = arith.constant 0 : index
    %c0_65 = arith.constant 0 : index
    %119 = vector.load %arg22[%c0_64, %c0_65] : memref<1x32xf32, #tpu.memory_space<vmem>>, vector<1x32xf32>
    "tpu.trace_start"() <{level = 10 : i32, message = "hf,nf->hn"}> : () -> ()
    %cst_66 = arith.constant dense<0.000000e+00> : vector<1x16xf32>
    %120 = tpu.matmul %118, %112, %cst_66 {dimension_numbers = #tpu.dot_dimension_numbers<[1], [1], [0], [0], [0, 0, 1, 0], [], []>} : vector<1x32xf32>, vector<16x32xf32>, vector<1x16xf32> -> vector<1x16xf32>
    %cst_67 = arith.constant 0.000000e+00 : f32
    "tpu.trace_stop"() : () -> ()
    %121 = vector.broadcast %cst_67 : f32 to vector<1x16xf32>
    %122 = arith.cmpf oge, %120, %121 : vector<1x16xf32>
    %cst_68 = arith.constant 2.000000e-01 : f32
    %123 = vector.broadcast %cst_68 : f32 to vector<1x16xf32>
    %124 = arith.mulf %123, %120 : vector<1x16xf32>
    %125 = arith.select %122, %120, %124 : vector<1x16xi1>, vector<1x16xf32>
    %cst_69 = arith.constant 1.000000e+00 : f32
    %126 = vector.broadcast %cst_69 : f32 to vector<16x16xf32>
    %127 = arith.subf %126, %32 : vector<16x16xf32>
    %cst_70 = arith.constant -1.000000e+30 : f32
    %128 = vector.broadcast %cst_70 : f32 to vector<16x16xf32>
    %129 = arith.mulf %128, %127 : vector<16x16xf32>
    %130 = vector.broadcast %125 : vector<1x16xf32> to vector<16x16xf32>
    %131 = arith.addf %130, %129 : vector<16x16xf32>
    %cst_71 = arith.constant dense<0xFF800000> : vector<16xf32>
    %132 = vector.multi_reduction <maximumf>, %131, %cst_71 [1] : vector<16x16xf32> to vector<16xf32>
    %133 = vector.shape_cast %132 : vector<16xf32> to vector<16x1xf32>
    %134 = vector.broadcast %125 : vector<1x16xf32> to vector<16x16xf32>
    %135 = vector.broadcast %133 : vector<16x1xf32> to vector<16x16xf32>
    %136 = arith.subf %134, %135 : vector<16x16xf32>
    %cst_72 = arith.constant 0.000000e+00 : f32
    %137 = vector.broadcast %cst_72 : f32 to vector<16x16xf32>
    %138 = arith.minimumf %136, %137 : vector<16x16xf32>
    %139 = math.exp %138 : vector<16x16xf32>
    %140 = arith.mulf %139, %32 : vector<16x16xf32>
    %cst_73 = arith.constant dense<0.000000e+00> : vector<16xf32>
    %141 = vector.multi_reduction <add>, %140, %cst_73 [1] : vector<16x16xf32> to vector<16xf32>
    %142 = vector.shape_cast %141 : vector<16xf32> to vector<16x1xf32>
    %cst_74 = arith.constant dense<0.000000e+00> : vector<16x32xf32>
    %143 = tpu.matmul %140, %112, %cst_74 {dimension_numbers = #tpu.dot_dimension_numbers<[1], [0], [0], [1], [0, 0, 1, 1], [], []>} : vector<16x16xf32>, vector<16x32xf32>, vector<16x32xf32> -> vector<16x32xf32>
    %cst_75 = arith.constant 1.000000e-16 : f32
    %144 = vector.broadcast %cst_75 : f32 to vector<16x1xf32>
    %145 = arith.addf %142, %144 : vector<16x1xf32>
    %146 = tpu.reciprocal %145 {approx = true} : vector<16x1xf32> -> vector<16x1xf32>
    %cst_76 = arith.constant 1.000000e+00 : f32
    %147 = vector.broadcast %cst_76 : f32 to vector<16x1xf32>
    %148 = arith.mulf %146, %147 : vector<16x1xf32>
    %149 = vector.broadcast %148 : vector<16x1xf32> to vector<16x32xf32>
    %150 = arith.mulf %143, %149 : vector<16x32xf32>
    %151 = vector.broadcast %119 : vector<1x32xf32> to vector<16x32xf32>
    %152 = arith.addf %150, %151 : vector<16x32xf32>
    %153 = arith.addf %152, %117 : vector<16x32xf32>
    %cst_77 = arith.constant 0.000000e+00 : f32
    %154 = vector.broadcast %cst_77 : f32 to vector<16x32xf32>
    %155 = arith.maximumf %153, %154 : vector<16x32xf32>
    %c0_78 = arith.constant 0 : index
    %c0_79 = arith.constant 0 : index
    %156 = vector.load %arg23[%c0_78, %c0_79] : memref<64x128xf32, #tpu.memory_space<vmem>>, vector<32x128xf32>
    %cst_80 = arith.constant dense<0.000000e+00> : vector<16x128xf32>
    %157 = tpu.matmul %107, %156, %cst_80 {dimension_numbers = #tpu.dot_dimension_numbers<[1], [0], [0], [1], [0, 0, 1, 1], [], []>} : vector<16x32xf32>, vector<32x128xf32>, vector<16x128xf32> -> vector<16x128xf32>
    %c32 = arith.constant 32 : index
    %c0_81 = arith.constant 0 : index
    %158 = vector.load %arg23[%c32, %c0_81] : memref<64x128xf32, #tpu.memory_space<vmem>>, vector<32x128xf32>
    %cst_82 = arith.constant dense<0.000000e+00> : vector<16x128xf32>
    %159 = tpu.matmul %155, %158, %cst_82 {dimension_numbers = #tpu.dot_dimension_numbers<[1], [0], [0], [1], [0, 0, 1, 1], [], []>} : vector<16x32xf32>, vector<32x128xf32>, vector<16x128xf32> -> vector<16x128xf32>
    %160 = arith.addf %157, %159 : vector<16x128xf32>
    %c0_83 = arith.constant 0 : index
    %c0_84 = arith.constant 0 : index
    %161 = vector.load %arg26[%c0_83, %c0_84] : memref<1x32xf32, #tpu.memory_space<vmem>>, vector<1x32xf32>
    %cst_85 = arith.constant 1.000000e+00 : f32
    %162 = vector.broadcast %cst_85 : f32 to vector<16x16xf32>
    %163 = arith.subf %162, %56 : vector<16x16xf32>
    %cst_86 = arith.constant -1.000000e+30 : f32
    %164 = vector.broadcast %cst_86 : f32 to vector<16x16xf32>
    %165 = arith.mulf %164, %163 : vector<16x16xf32>
    %cst_87 = arith.constant 0.000000e+00 : f32
    %166 = vector.broadcast %cst_87 : f32 to vector<16x32xf32>
    %167 = vector.extract_strided_slice %160 {offsets = [0, 0], sizes = [16, 32], strides = [1, 1]} : vector<16x128xf32> to vector<16x32xf32>
    %c0_88 = arith.constant 0 : index
    %c0_89 = arith.constant 0 : index
    %168 = vector.load %arg24[%c0_88, %c0_89] : memref<4x32xf32, #tpu.memory_space<vmem>>, vector<1x32xf32>
    %c0_90 = arith.constant 0 : index
    %c0_91 = arith.constant 0 : index
    %169 = vector.load %arg25[%c0_90, %c0_91] : memref<4x32xf32, #tpu.memory_space<vmem>>, vector<1x32xf32>
    "tpu.trace_start"() <{level = 10 : i32, message = "hc,nc->hn"}> : () -> ()
    %cst_92 = arith.constant dense<0.000000e+00> : vector<1x16xf32>
    %170 = tpu.matmul %168, %167, %cst_92 {dimension_numbers = #tpu.dot_dimension_numbers<[1], [1], [0], [0], [0, 0, 1, 0], [], []>} : vector<1x32xf32>, vector<16x32xf32>, vector<1x16xf32> -> vector<1x16xf32>
    "tpu.trace_stop"() : () -> ()
    %171 = vector.broadcast %169 : vector<1x32xf32> to vector<16x32xf32>
    %172 = arith.mulf %167, %171 : vector<16x32xf32>
    %cst_93 = arith.constant dense<0.000000e+00> : vector<16xf32>
    %173 = vector.multi_reduction <add>, %172, %cst_93 [1] : vector<16x32xf32> to vector<16xf32>
    %174 = vector.shape_cast %173 : vector<16xf32> to vector<16x1xf32>
    %175 = vector.broadcast %174 : vector<16x1xf32> to vector<16x16xf32>
    %176 = vector.broadcast %170 : vector<1x16xf32> to vector<16x16xf32>
    %177 = arith.addf %175, %176 : vector<16x16xf32>
    %cst_94 = arith.constant 0.000000e+00 : f32
    %178 = vector.broadcast %cst_94 : f32 to vector<16x16xf32>
    %179 = arith.cmpf oge, %177, %178 : vector<16x16xf32>
    %cst_95 = arith.constant 2.000000e-01 : f32
    %180 = vector.broadcast %cst_95 : f32 to vector<16x16xf32>
    %181 = arith.mulf %180, %177 : vector<16x16xf32>
    %182 = arith.select %179, %177, %181 : vector<16x16xi1>, vector<16x16xf32>
    %183 = arith.addf %182, %165 : vector<16x16xf32>
    %cst_96 = arith.constant dense<0xFF800000> : vector<16xf32>
    %184 = vector.multi_reduction <maximumf>, %183, %cst_96 [1] : vector<16x16xf32> to vector<16xf32>
    %185 = vector.shape_cast %184 : vector<16xf32> to vector<16x1xf32>
    %186 = vector.broadcast %185 : vector<16x1xf32> to vector<16x16xf32>
    %187 = arith.subf %182, %186 : vector<16x16xf32>
    %cst_97 = arith.constant 0.000000e+00 : f32
    %188 = vector.broadcast %cst_97 : f32 to vector<16x16xf32>
    %189 = arith.minimumf %187, %188 : vector<16x16xf32>
    %190 = math.exp %189 : vector<16x16xf32>
    %191 = arith.mulf %190, %56 : vector<16x16xf32>
    %cst_98 = arith.constant dense<0.000000e+00> : vector<16xf32>
    %192 = vector.multi_reduction <add>, %191, %cst_98 [1] : vector<16x16xf32> to vector<16xf32>
    %193 = vector.shape_cast %192 : vector<16xf32> to vector<16x1xf32>
    %cst_99 = arith.constant dense<0.000000e+00> : vector<16x32xf32>
    %194 = tpu.matmul %191, %167, %cst_99 {dimension_numbers = #tpu.dot_dimension_numbers<[1], [0], [0], [1], [0, 0, 1, 1], [], []>} : vector<16x16xf32>, vector<16x32xf32>, vector<16x32xf32> -> vector<16x32xf32>
    %cst_100 = arith.constant 1.000000e-16 : f32
    %195 = vector.broadcast %cst_100 : f32 to vector<16x1xf32>
    %196 = arith.addf %193, %195 : vector<16x1xf32>
    %197 = tpu.reciprocal %196 {approx = true} : vector<16x1xf32> -> vector<16x1xf32>
    %cst_101 = arith.constant 2.500000e-01 : f32
    %198 = vector.broadcast %cst_101 : f32 to vector<16x1xf32>
    %199 = arith.mulf %197, %198 : vector<16x1xf32>
    %200 = vector.broadcast %199 : vector<16x1xf32> to vector<16x32xf32>
    %201 = arith.mulf %194, %200 : vector<16x32xf32>
    %202 = arith.addf %166, %201 : vector<16x32xf32>
    %203 = vector.extract_strided_slice %160 {offsets = [0, 32], sizes = [16, 32], strides = [1, 1]} : vector<16x128xf32> to vector<16x32xf32>
    %c1 = arith.constant 1 : index
    %c0_102 = arith.constant 0 : index
    %204 = vector.load %arg24[%c1, %c0_102] : memref<4x32xf32, #tpu.memory_space<vmem>>, vector<1x32xf32>
    %c1_103 = arith.constant 1 : index
    %c0_104 = arith.constant 0 : index
    %205 = vector.load %arg25[%c1_103, %c0_104] : memref<4x32xf32, #tpu.memory_space<vmem>>, vector<1x32xf32>
    "tpu.trace_start"() <{level = 10 : i32, message = "hc,nc->hn"}> : () -> ()
    %cst_105 = arith.constant dense<0.000000e+00> : vector<1x16xf32>
    %206 = tpu.matmul %204, %203, %cst_105 {dimension_numbers = #tpu.dot_dimension_numbers<[1], [1], [0], [0], [0, 0, 1, 0], [], []>} : vector<1x32xf32>, vector<16x32xf32>, vector<1x16xf32> -> vector<1x16xf32>
    "tpu.trace_stop"() : () -> ()
    %207 = vector.broadcast %205 : vector<1x32xf32> to vector<16x32xf32>
    %208 = arith.mulf %203, %207 : vector<16x32xf32>
    %cst_106 = arith.constant dense<0.000000e+00> : vector<16xf32>
    %209 = vector.multi_reduction <add>, %208, %cst_106 [1] : vector<16x32xf32> to vector<16xf32>
    %210 = vector.shape_cast %209 : vector<16xf32> to vector<16x1xf32>
    %211 = vector.broadcast %210 : vector<16x1xf32> to vector<16x16xf32>
    %212 = vector.broadcast %206 : vector<1x16xf32> to vector<16x16xf32>
    %213 = arith.addf %211, %212 : vector<16x16xf32>
    %cst_107 = arith.constant 0.000000e+00 : f32
    %214 = vector.broadcast %cst_107 : f32 to vector<16x16xf32>
    %215 = arith.cmpf oge, %213, %214 : vector<16x16xf32>
    %cst_108 = arith.constant 2.000000e-01 : f32
    %216 = vector.broadcast %cst_108 : f32 to vector<16x16xf32>
    %217 = arith.mulf %216, %213 : vector<16x16xf32>
    %218 = arith.select %215, %213, %217 : vector<16x16xi1>, vector<16x16xf32>
    %219 = arith.addf %218, %165 : vector<16x16xf32>
    %cst_109 = arith.constant dense<0xFF800000> : vector<16xf32>
    %220 = vector.multi_reduction <maximumf>, %219, %cst_109 [1] : vector<16x16xf32> to vector<16xf32>
    %221 = vector.shape_cast %220 : vector<16xf32> to vector<16x1xf32>
    %222 = vector.broadcast %221 : vector<16x1xf32> to vector<16x16xf32>
    %223 = arith.subf %218, %222 : vector<16x16xf32>
    %cst_110 = arith.constant 0.000000e+00 : f32
    %224 = vector.broadcast %cst_110 : f32 to vector<16x16xf32>
    %225 = arith.minimumf %223, %224 : vector<16x16xf32>
    %226 = math.exp %225 : vector<16x16xf32>
    %227 = arith.mulf %226, %56 : vector<16x16xf32>
    %cst_111 = arith.constant dense<0.000000e+00> : vector<16xf32>
    %228 = vector.multi_reduction <add>, %227, %cst_111 [1] : vector<16x16xf32> to vector<16xf32>
    %229 = vector.shape_cast %228 : vector<16xf32> to vector<16x1xf32>
    %cst_112 = arith.constant dense<0.000000e+00> : vector<16x32xf32>
    %230 = tpu.matmul %227, %203, %cst_112 {dimension_numbers = #tpu.dot_dimension_numbers<[1], [0], [0], [1], [0, 0, 1, 1], [], []>} : vector<16x16xf32>, vector<16x32xf32>, vector<16x32xf32> -> vector<16x32xf32>
    %cst_113 = arith.constant 1.000000e-16 : f32
    %231 = vector.broadcast %cst_113 : f32 to vector<16x1xf32>
    %232 = arith.addf %229, %231 : vector<16x1xf32>
    %233 = tpu.reciprocal %232 {approx = true} : vector<16x1xf32> -> vector<16x1xf32>
    %cst_114 = arith.constant 2.500000e-01 : f32
    %234 = vector.broadcast %cst_114 : f32 to vector<16x1xf32>
    %235 = arith.mulf %233, %234 : vector<16x1xf32>
    %236 = vector.broadcast %235 : vector<16x1xf32> to vector<16x32xf32>
    %237 = arith.mulf %230, %236 : vector<16x32xf32>
    %238 = arith.addf %202, %237 : vector<16x32xf32>
    %239 = vector.extract_strided_slice %160 {offsets = [0, 64], sizes = [16, 32], strides = [1, 1]} : vector<16x128xf32> to vector<16x32xf32>
    %c2 = arith.constant 2 : index
    %c0_115 = arith.constant 0 : index
    %240 = vector.load %arg24[%c2, %c0_115] : memref<4x32xf32, #tpu.memory_space<vmem>>, vector<1x32xf32>
    %c2_116 = arith.constant 2 : index
    %c0_117 = arith.constant 0 : index
    %241 = vector.load %arg25[%c2_116, %c0_117] : memref<4x32xf32, #tpu.memory_space<vmem>>, vector<1x32xf32>
    "tpu.trace_start"() <{level = 10 : i32, message = "hc,nc->hn"}> : () -> ()
    %cst_118 = arith.constant dense<0.000000e+00> : vector<1x16xf32>
    %242 = tpu.matmul %240, %239, %cst_118 {dimension_numbers = #tpu.dot_dimension_numbers<[1], [1], [0], [0], [0, 0, 1, 0], [], []>} : vector<1x32xf32>, vector<16x32xf32>, vector<1x16xf32> -> vector<1x16xf32>
    "tpu.trace_stop"() : () -> ()
    %243 = vector.broadcast %241 : vector<1x32xf32> to vector<16x32xf32>
    %244 = arith.mulf %239, %243 : vector<16x32xf32>
    %cst_119 = arith.constant dense<0.000000e+00> : vector<16xf32>
    %245 = vector.multi_reduction <add>, %244, %cst_119 [1] : vector<16x32xf32> to vector<16xf32>
    %246 = vector.shape_cast %245 : vector<16xf32> to vector<16x1xf32>
    %247 = vector.broadcast %246 : vector<16x1xf32> to vector<16x16xf32>
    %248 = vector.broadcast %242 : vector<1x16xf32> to vector<16x16xf32>
    %249 = arith.addf %247, %248 : vector<16x16xf32>
    %cst_120 = arith.constant 0.000000e+00 : f32
    %250 = vector.broadcast %cst_120 : f32 to vector<16x16xf32>
    %251 = arith.cmpf oge, %249, %250 : vector<16x16xf32>
    %cst_121 = arith.constant 2.000000e-01 : f32
    %252 = vector.broadcast %cst_121 : f32 to vector<16x16xf32>
    %253 = arith.mulf %252, %249 : vector<16x16xf32>
    %254 = arith.select %251, %249, %253 : vector<16x16xi1>, vector<16x16xf32>
    %255 = arith.addf %254, %165 : vector<16x16xf32>
    %cst_122 = arith.constant dense<0xFF800000> : vector<16xf32>
    %256 = vector.multi_reduction <maximumf>, %255, %cst_122 [1] : vector<16x16xf32> to vector<16xf32>
    %257 = vector.shape_cast %256 : vector<16xf32> to vector<16x1xf32>
    %258 = vector.broadcast %257 : vector<16x1xf32> to vector<16x16xf32>
    %259 = arith.subf %254, %258 : vector<16x16xf32>
    %cst_123 = arith.constant 0.000000e+00 : f32
    %260 = vector.broadcast %cst_123 : f32 to vector<16x16xf32>
    %261 = arith.minimumf %259, %260 : vector<16x16xf32>
    %262 = math.exp %261 : vector<16x16xf32>
    %263 = arith.mulf %262, %56 : vector<16x16xf32>
    %cst_124 = arith.constant dense<0.000000e+00> : vector<16xf32>
    %264 = vector.multi_reduction <add>, %263, %cst_124 [1] : vector<16x16xf32> to vector<16xf32>
    %265 = vector.shape_cast %264 : vector<16xf32> to vector<16x1xf32>
    %cst_125 = arith.constant dense<0.000000e+00> : vector<16x32xf32>
    %266 = tpu.matmul %263, %239, %cst_125 {dimension_numbers = #tpu.dot_dimension_numbers<[1], [0], [0], [1], [0, 0, 1, 1], [], []>} : vector<16x16xf32>, vector<16x32xf32>, vector<16x32xf32> -> vector<16x32xf32>
    %cst_126 = arith.constant 1.000000e-16 : f32
    %267 = vector.broadcast %cst_126 : f32 to vector<16x1xf32>
    %268 = arith.addf %265, %267 : vector<16x1xf32>
    %269 = tpu.reciprocal %268 {approx = true} : vector<16x1xf32> -> vector<16x1xf32>
    %cst_127 = arith.constant 2.500000e-01 : f32
    %270 = vector.broadcast %cst_127 : f32 to vector<16x1xf32>
    %271 = arith.mulf %269, %270 : vector<16x1xf32>
    %272 = vector.broadcast %271 : vector<16x1xf32> to vector<16x32xf32>
    %273 = arith.mulf %266, %272 : vector<16x32xf32>
    %274 = arith.addf %238, %273 : vector<16x32xf32>
    %275 = vector.extract_strided_slice %160 {offsets = [0, 96], sizes = [16, 32], strides = [1, 1]} : vector<16x128xf32> to vector<16x32xf32>
    %c3 = arith.constant 3 : index
    %c0_128 = arith.constant 0 : index
    %276 = vector.load %arg24[%c3, %c0_128] : memref<4x32xf32, #tpu.memory_space<vmem>>, vector<1x32xf32>
    %c3_129 = arith.constant 3 : index
    %c0_130 = arith.constant 0 : index
    %277 = vector.load %arg25[%c3_129, %c0_130] : memref<4x32xf32, #tpu.memory_space<vmem>>, vector<1x32xf32>
    "tpu.trace_start"() <{level = 10 : i32, message = "hc,nc->hn"}> : () -> ()
    %cst_131 = arith.constant dense<0.000000e+00> : vector<1x16xf32>
    %278 = tpu.matmul %276, %275, %cst_131 {dimension_numbers = #tpu.dot_dimension_numbers<[1], [1], [0], [0], [0, 0, 1, 0], [], []>} : vector<1x32xf32>, vector<16x32xf32>, vector<1x16xf32> -> vector<1x16xf32>
    "tpu.trace_stop"() : () -> ()
    %279 = vector.broadcast %277 : vector<1x32xf32> to vector<16x32xf32>
    %280 = arith.mulf %275, %279 : vector<16x32xf32>
    %cst_132 = arith.constant dense<0.000000e+00> : vector<16xf32>
    %281 = vector.multi_reduction <add>, %280, %cst_132 [1] : vector<16x32xf32> to vector<16xf32>
    %282 = vector.shape_cast %281 : vector<16xf32> to vector<16x1xf32>
    %283 = vector.broadcast %282 : vector<16x1xf32> to vector<16x16xf32>
    %284 = vector.broadcast %278 : vector<1x16xf32> to vector<16x16xf32>
    %285 = arith.addf %283, %284 : vector<16x16xf32>
    %cst_133 = arith.constant 0.000000e+00 : f32
    %286 = vector.broadcast %cst_133 : f32 to vector<16x16xf32>
    %287 = arith.cmpf oge, %285, %286 : vector<16x16xf32>
    %cst_134 = arith.constant 2.000000e-01 : f32
    %288 = vector.broadcast %cst_134 : f32 to vector<16x16xf32>
    %289 = arith.mulf %288, %285 : vector<16x16xf32>
    %290 = arith.select %287, %285, %289 : vector<16x16xi1>, vector<16x16xf32>
    %291 = arith.addf %290, %165 : vector<16x16xf32>
    %cst_135 = arith.constant dense<0xFF800000> : vector<16xf32>
    %292 = vector.multi_reduction <maximumf>, %291, %cst_135 [1] : vector<16x16xf32> to vector<16xf32>
    %293 = vector.shape_cast %292 : vector<16xf32> to vector<16x1xf32>
    %294 = vector.broadcast %293 : vector<16x1xf32> to vector<16x16xf32>
    %295 = arith.subf %290, %294 : vector<16x16xf32>
    %cst_136 = arith.constant 0.000000e+00 : f32
    %296 = vector.broadcast %cst_136 : f32 to vector<16x16xf32>
    %297 = arith.minimumf %295, %296 : vector<16x16xf32>
    %298 = math.exp %297 : vector<16x16xf32>
    %299 = arith.mulf %298, %56 : vector<16x16xf32>
    %cst_137 = arith.constant dense<0.000000e+00> : vector<16xf32>
    %300 = vector.multi_reduction <add>, %299, %cst_137 [1] : vector<16x16xf32> to vector<16xf32>
    %301 = vector.shape_cast %300 : vector<16xf32> to vector<16x1xf32>
    %cst_138 = arith.constant dense<0.000000e+00> : vector<16x32xf32>
    %302 = tpu.matmul %299, %275, %cst_138 {dimension_numbers = #tpu.dot_dimension_numbers<[1], [0], [0], [1], [0, 0, 1, 1], [], []>} : vector<16x16xf32>, vector<16x32xf32>, vector<16x32xf32> -> vector<16x32xf32>
    %cst_139 = arith.constant 1.000000e-16 : f32
    %303 = vector.broadcast %cst_139 : f32 to vector<16x1xf32>
    %304 = arith.addf %301, %303 : vector<16x1xf32>
    %305 = tpu.reciprocal %304 {approx = true} : vector<16x1xf32> -> vector<16x1xf32>
    %cst_140 = arith.constant 2.500000e-01 : f32
    %306 = vector.broadcast %cst_140 : f32 to vector<16x1xf32>
    %307 = arith.mulf %305, %306 : vector<16x1xf32>
    %308 = vector.broadcast %307 : vector<16x1xf32> to vector<16x32xf32>
    %309 = arith.mulf %302, %308 : vector<16x32xf32>
    %310 = arith.addf %274, %309 : vector<16x32xf32>
    %311 = vector.broadcast %161 : vector<1x32xf32> to vector<16x32xf32>
    %312 = arith.addf %310, %311 : vector<16x32xf32>
    %cst_141 = arith.constant 0.000000e+00 : f32
    %313 = vector.broadcast %cst_141 : f32 to vector<16x32xf32>
    %314 = arith.maximumf %312, %313 : vector<16x32xf32>
    %c0_142 = arith.constant 0 : index
    %c0_143 = arith.constant 0 : index
    %315 = vector.load %arg27[%c0_142, %c0_143] : memref<32x32xf32, #tpu.memory_space<vmem>>, vector<32x32xf32>
    %cst_144 = arith.constant dense<0.000000e+00> : vector<16x32xf32>
    %316 = tpu.matmul %314, %315, %cst_144 {dimension_numbers = #tpu.dot_dimension_numbers<[1], [0], [0], [1], [0, 0, 1, 1], [], []>} : vector<16x32xf32>, vector<32x32xf32>, vector<16x32xf32> -> vector<16x32xf32>
    %c0_145 = arith.constant 0 : index
    %c0_146 = arith.constant 0 : index
    %317 = vector.load %arg30[%c0_145, %c0_146] : memref<1x32xf32, #tpu.memory_space<vmem>>, vector<1x32xf32>
    %cst_147 = arith.constant 1.000000e+00 : f32
    %318 = vector.broadcast %cst_147 : f32 to vector<16x16xf32>
    %319 = arith.subf %318, %56 : vector<16x16xf32>
    %cst_148 = arith.constant -1.000000e+30 : f32
    %320 = vector.broadcast %cst_148 : f32 to vector<16x16xf32>
    %321 = arith.mulf %320, %319 : vector<16x16xf32>
    %cst_149 = arith.constant 0.000000e+00 : f32
    %322 = vector.broadcast %cst_149 : f32 to vector<16x32xf32>
    %c0_150 = arith.constant 0 : index
    %c0_151 = arith.constant 0 : index
    %323 = vector.load %arg28[%c0_150, %c0_151] : memref<1x32xf32, #tpu.memory_space<vmem>>, vector<1x32xf32>
    %c0_152 = arith.constant 0 : index
    %c0_153 = arith.constant 0 : index
    %324 = vector.load %arg29[%c0_152, %c0_153] : memref<1x32xf32, #tpu.memory_space<vmem>>, vector<1x32xf32>
    "tpu.trace_start"() <{level = 10 : i32, message = "hc,nc->hn"}> : () -> ()
    %cst_154 = arith.constant dense<0.000000e+00> : vector<1x16xf32>
    %325 = tpu.matmul %323, %316, %cst_154 {dimension_numbers = #tpu.dot_dimension_numbers<[1], [1], [0], [0], [0, 0, 1, 0], [], []>} : vector<1x32xf32>, vector<16x32xf32>, vector<1x16xf32> -> vector<1x16xf32>
    "tpu.trace_stop"() : () -> ()
    %326 = vector.broadcast %324 : vector<1x32xf32> to vector<16x32xf32>
    %327 = arith.mulf %316, %326 : vector<16x32xf32>
    %cst_155 = arith.constant dense<0.000000e+00> : vector<16xf32>
    %328 = vector.multi_reduction <add>, %327, %cst_155 [1] : vector<16x32xf32> to vector<16xf32>
    %329 = vector.shape_cast %328 : vector<16xf32> to vector<16x1xf32>
    %330 = vector.broadcast %329 : vector<16x1xf32> to vector<16x16xf32>
    %331 = vector.broadcast %325 : vector<1x16xf32> to vector<16x16xf32>
    %332 = arith.addf %330, %331 : vector<16x16xf32>
    %cst_156 = arith.constant 0.000000e+00 : f32
    %333 = vector.broadcast %cst_156 : f32 to vector<16x16xf32>
    %334 = arith.cmpf oge, %332, %333 : vector<16x16xf32>
    %cst_157 = arith.constant 2.000000e-01 : f32
    %335 = vector.broadcast %cst_157 : f32 to vector<16x16xf32>
    %336 = arith.mulf %335, %332 : vector<16x16xf32>
    %337 = arith.select %334, %332, %336 : vector<16x16xi1>, vector<16x16xf32>
    %338 = arith.addf %337, %321 : vector<16x16xf32>
    %cst_158 = arith.constant dense<0xFF800000> : vector<16xf32>
    %339 = vector.multi_reduction <maximumf>, %338, %cst_158 [1] : vector<16x16xf32> to vector<16xf32>
    %340 = vector.shape_cast %339 : vector<16xf32> to vector<16x1xf32>
    %341 = vector.broadcast %340 : vector<16x1xf32> to vector<16x16xf32>
    %342 = arith.subf %337, %341 : vector<16x16xf32>
    %cst_159 = arith.constant 0.000000e+00 : f32
    %343 = vector.broadcast %cst_159 : f32 to vector<16x16xf32>
    %344 = arith.minimumf %342, %343 : vector<16x16xf32>
    %345 = math.exp %344 : vector<16x16xf32>
    %346 = arith.mulf %345, %56 : vector<16x16xf32>
    %cst_160 = arith.constant dense<0.000000e+00> : vector<16xf32>
    %347 = vector.multi_reduction <add>, %346, %cst_160 [1] : vector<16x16xf32> to vector<16xf32>
    %348 = vector.shape_cast %347 : vector<16xf32> to vector<16x1xf32>
    %cst_161 = arith.constant dense<0.000000e+00> : vector<16x32xf32>
    %349 = tpu.matmul %346, %316, %cst_161 {dimension_numbers = #tpu.dot_dimension_numbers<[1], [0], [0], [1], [0, 0, 1, 1], [], []>} : vector<16x16xf32>, vector<16x32xf32>, vector<16x32xf32> -> vector<16x32xf32>
    %cst_162 = arith.constant 1.000000e-16 : f32
    %350 = vector.broadcast %cst_162 : f32 to vector<16x1xf32>
    %351 = arith.addf %348, %350 : vector<16x1xf32>
    %352 = tpu.reciprocal %351 {approx = true} : vector<16x1xf32> -> vector<16x1xf32>
    %cst_163 = arith.constant 1.000000e+00 : f32
    %353 = vector.broadcast %cst_163 : f32 to vector<16x1xf32>
    %354 = arith.mulf %352, %353 : vector<16x1xf32>
    %355 = vector.broadcast %354 : vector<16x1xf32> to vector<16x32xf32>
    %356 = arith.mulf %349, %355 : vector<16x32xf32>
    %357 = arith.addf %322, %356 : vector<16x32xf32>
    %358 = vector.broadcast %317 : vector<1x32xf32> to vector<16x32xf32>
    %359 = arith.addf %357, %358 : vector<16x32xf32>
    %360 = math.tanh %359 : vector<16x32xf32>
    %c0_164 = arith.constant 0 : index
    %c0_165 = arith.constant 0 : index
    %361 = vector.load %arg33[%c0_164, %c0_165] : memref<32x32xf32, #tpu.memory_space<vmem>>, vector<32x32xf32>
    %c0_166 = arith.constant 0 : index
    %c0_167 = arith.constant 0 : index
    %362 = vector.load %arg34[%c0_166, %c0_167] : memref<1x32xf32, #tpu.memory_space<vmem>>, vector<1x32xf32>
    %cst_168 = arith.constant dense<0.000000e+00> : vector<16x32xf32>
    %363 = tpu.matmul %360, %361, %cst_168 {dimension_numbers = #tpu.dot_dimension_numbers<[1], [0], [0], [1], [0, 0, 1, 1], [], []>} : vector<16x32xf32>, vector<32x32xf32>, vector<16x32xf32> -> vector<16x32xf32>
    %364 = vector.broadcast %362 : vector<1x32xf32> to vector<16x32xf32>
    %365 = arith.addf %363, %364 : vector<16x32xf32>
    %c0_169 = arith.constant 0 : index
    %c0_170 = arith.constant 0 : index
    %366 = vector.load %arg31[%c0_169, %c0_170] : memref<6x32xf32, #tpu.memory_space<vmem>>, vector<6x32xf32>
    %c0_171 = arith.constant 0 : index
    %c0_172 = arith.constant 0 : index
    %367 = vector.load %arg32[%c0_171, %c0_172] : memref<1x32xf32, #tpu.memory_space<vmem>>, vector<1x32xf32>
    %cst_173 = arith.constant dense<0.000000e+00> : vector<16x32xf32>
    %368 = tpu.matmul %57, %366, %cst_173 {dimension_numbers = #tpu.dot_dimension_numbers<[1], [0], [0], [1], [0, 0, 1, 1], [], []>} : vector<16x6xf32>, vector<6x32xf32>, vector<16x32xf32> -> vector<16x32xf32>
    %369 = vector.broadcast %367 : vector<1x32xf32> to vector<16x32xf32>
    %370 = arith.addf %368, %369 : vector<16x32xf32>
    %c0_174 = arith.constant 0 : index
    %c0_175 = arith.constant 0 : index
    %371 = vector.load %arg35[%c0_174, %c0_175] : memref<1x32xf32, #tpu.memory_space<vmem>>, vector<1x32xf32>
    %c0_176 = arith.constant 0 : index
    %c0_177 = arith.constant 0 : index
    %372 = vector.load %arg36[%c0_176, %c0_177] : memref<1x32xf32, #tpu.memory_space<vmem>>, vector<1x32xf32>
    "tpu.trace_start"() <{level = 10 : i32, message = "hf,nf->hn"}> : () -> ()
    %cst_178 = arith.constant dense<0.000000e+00> : vector<1x16xf32>
    %373 = tpu.matmul %371, %365, %cst_178 {dimension_numbers = #tpu.dot_dimension_numbers<[1], [1], [0], [0], [0, 0, 1, 0], [], []>} : vector<1x32xf32>, vector<16x32xf32>, vector<1x16xf32> -> vector<1x16xf32>
    %cst_179 = arith.constant 0.000000e+00 : f32
    "tpu.trace_stop"() : () -> ()
    %374 = vector.broadcast %cst_179 : f32 to vector<1x16xf32>
    %375 = arith.cmpf oge, %373, %374 : vector<1x16xf32>
    %cst_180 = arith.constant 2.000000e-01 : f32
    %376 = vector.broadcast %cst_180 : f32 to vector<1x16xf32>
    %377 = arith.mulf %376, %373 : vector<1x16xf32>
    %378 = arith.select %375, %373, %377 : vector<1x16xi1>, vector<1x16xf32>
    %cst_181 = arith.constant 1.000000e+00 : f32
    %379 = vector.broadcast %cst_181 : f32 to vector<16x16xf32>
    %380 = arith.subf %379, %17 : vector<16x16xf32>
    %cst_182 = arith.constant -1.000000e+30 : f32
    %381 = vector.broadcast %cst_182 : f32 to vector<16x16xf32>
    %382 = arith.mulf %381, %380 : vector<16x16xf32>
    %383 = vector.broadcast %378 : vector<1x16xf32> to vector<16x16xf32>
    %384 = arith.addf %383, %382 : vector<16x16xf32>
    %cst_183 = arith.constant dense<0xFF800000> : vector<16xf32>
    %385 = vector.multi_reduction <maximumf>, %384, %cst_183 [1] : vector<16x16xf32> to vector<16xf32>
    %386 = vector.shape_cast %385 : vector<16xf32> to vector<16x1xf32>
    %387 = vector.broadcast %378 : vector<1x16xf32> to vector<16x16xf32>
    %388 = vector.broadcast %386 : vector<16x1xf32> to vector<16x16xf32>
    %389 = arith.subf %387, %388 : vector<16x16xf32>
    %cst_184 = arith.constant 0.000000e+00 : f32
    %390 = vector.broadcast %cst_184 : f32 to vector<16x16xf32>
    %391 = arith.minimumf %389, %390 : vector<16x16xf32>
    %392 = math.exp %391 : vector<16x16xf32>
    %393 = arith.mulf %392, %17 : vector<16x16xf32>
    %cst_185 = arith.constant dense<0.000000e+00> : vector<16xf32>
    %394 = vector.multi_reduction <add>, %393, %cst_185 [1] : vector<16x16xf32> to vector<16xf32>
    %395 = vector.shape_cast %394 : vector<16xf32> to vector<16x1xf32>
    %cst_186 = arith.constant dense<0.000000e+00> : vector<16x32xf32>
    %396 = tpu.matmul %393, %365, %cst_186 {dimension_numbers = #tpu.dot_dimension_numbers<[1], [0], [0], [1], [0, 0, 1, 1], [], []>} : vector<16x16xf32>, vector<16x32xf32>, vector<16x32xf32> -> vector<16x32xf32>
    %cst_187 = arith.constant 1.000000e-16 : f32
    %397 = vector.broadcast %cst_187 : f32 to vector<16x1xf32>
    %398 = arith.addf %395, %397 : vector<16x1xf32>
    %399 = tpu.reciprocal %398 {approx = true} : vector<16x1xf32> -> vector<16x1xf32>
    %cst_188 = arith.constant 1.000000e+00 : f32
    %400 = vector.broadcast %cst_188 : f32 to vector<16x1xf32>
    %401 = arith.mulf %399, %400 : vector<16x1xf32>
    %402 = vector.broadcast %401 : vector<16x1xf32> to vector<16x32xf32>
    %403 = arith.mulf %396, %402 : vector<16x32xf32>
    %404 = vector.broadcast %372 : vector<1x32xf32> to vector<16x32xf32>
    %405 = arith.addf %403, %404 : vector<16x32xf32>
    %406 = arith.addf %405, %370 : vector<16x32xf32>
    %cst_189 = arith.constant 0.000000e+00 : f32
    %407 = vector.broadcast %cst_189 : f32 to vector<16x32xf32>
    %408 = arith.maximumf %406, %407 : vector<16x32xf32>
    %c0_190 = arith.constant 0 : index
    %c0_191 = arith.constant 0 : index
    %409 = vector.load %arg39[%c0_190, %c0_191] : memref<32x32xf32, #tpu.memory_space<vmem>>, vector<32x32xf32>
    %c0_192 = arith.constant 0 : index
    %c0_193 = arith.constant 0 : index
    %410 = vector.load %arg40[%c0_192, %c0_193] : memref<1x32xf32, #tpu.memory_space<vmem>>, vector<1x32xf32>
    %cst_194 = arith.constant dense<0.000000e+00> : vector<16x32xf32>
    %411 = tpu.matmul %360, %409, %cst_194 {dimension_numbers = #tpu.dot_dimension_numbers<[1], [0], [0], [1], [0, 0, 1, 1], [], []>} : vector<16x32xf32>, vector<32x32xf32>, vector<16x32xf32> -> vector<16x32xf32>
    %412 = vector.broadcast %410 : vector<1x32xf32> to vector<16x32xf32>
    %413 = arith.addf %411, %412 : vector<16x32xf32>
    %c0_195 = arith.constant 0 : index
    %c0_196 = arith.constant 0 : index
    %414 = vector.load %arg37[%c0_195, %c0_196] : memref<5x32xf32, #tpu.memory_space<vmem>>, vector<5x32xf32>
    %c0_197 = arith.constant 0 : index
    %c0_198 = arith.constant 0 : index
    %415 = vector.load %arg38[%c0_197, %c0_198] : memref<1x32xf32, #tpu.memory_space<vmem>>, vector<1x32xf32>
    %cst_199 = arith.constant dense<0.000000e+00> : vector<16x32xf32>
    %416 = tpu.matmul %58, %414, %cst_199 {dimension_numbers = #tpu.dot_dimension_numbers<[1], [0], [0], [1], [0, 0, 1, 1], [], []>} : vector<16x5xf32>, vector<5x32xf32>, vector<16x32xf32> -> vector<16x32xf32>
    %417 = vector.broadcast %415 : vector<1x32xf32> to vector<16x32xf32>
    %418 = arith.addf %416, %417 : vector<16x32xf32>
    %c0_200 = arith.constant 0 : index
    %c0_201 = arith.constant 0 : index
    %419 = vector.load %arg41[%c0_200, %c0_201] : memref<1x32xf32, #tpu.memory_space<vmem>>, vector<1x32xf32>
    %c0_202 = arith.constant 0 : index
    %c0_203 = arith.constant 0 : index
    %420 = vector.load %arg42[%c0_202, %c0_203] : memref<1x32xf32, #tpu.memory_space<vmem>>, vector<1x32xf32>
    "tpu.trace_start"() <{level = 10 : i32, message = "hf,nf->hn"}> : () -> ()
    %cst_204 = arith.constant dense<0.000000e+00> : vector<1x16xf32>
    %421 = tpu.matmul %419, %413, %cst_204 {dimension_numbers = #tpu.dot_dimension_numbers<[1], [1], [0], [0], [0, 0, 1, 0], [], []>} : vector<1x32xf32>, vector<16x32xf32>, vector<1x16xf32> -> vector<1x16xf32>
    %cst_205 = arith.constant 0.000000e+00 : f32
    "tpu.trace_stop"() : () -> ()
    %422 = vector.broadcast %cst_205 : f32 to vector<1x16xf32>
    %423 = arith.cmpf oge, %421, %422 : vector<1x16xf32>
    %cst_206 = arith.constant 2.000000e-01 : f32
    %424 = vector.broadcast %cst_206 : f32 to vector<1x16xf32>
    %425 = arith.mulf %424, %421 : vector<1x16xf32>
    %426 = arith.select %423, %421, %425 : vector<1x16xi1>, vector<1x16xf32>
    %cst_207 = arith.constant 1.000000e+00 : f32
    %427 = vector.broadcast %cst_207 : f32 to vector<16x16xf32>
    %428 = arith.subf %427, %35 : vector<16x16xf32>
    %cst_208 = arith.constant -1.000000e+30 : f32
    %429 = vector.broadcast %cst_208 : f32 to vector<16x16xf32>
    %430 = arith.mulf %429, %428 : vector<16x16xf32>
    %431 = vector.broadcast %426 : vector<1x16xf32> to vector<16x16xf32>
    %432 = arith.addf %431, %430 : vector<16x16xf32>
    %cst_209 = arith.constant dense<0xFF800000> : vector<16xf32>
    %433 = vector.multi_reduction <maximumf>, %432, %cst_209 [1] : vector<16x16xf32> to vector<16xf32>
    %434 = vector.shape_cast %433 : vector<16xf32> to vector<16x1xf32>
    %435 = vector.broadcast %426 : vector<1x16xf32> to vector<16x16xf32>
    %436 = vector.broadcast %434 : vector<16x1xf32> to vector<16x16xf32>
    %437 = arith.subf %435, %436 : vector<16x16xf32>
    %cst_210 = arith.constant 0.000000e+00 : f32
    %438 = vector.broadcast %cst_210 : f32 to vector<16x16xf32>
    %439 = arith.minimumf %437, %438 : vector<16x16xf32>
    %440 = math.exp %439 : vector<16x16xf32>
    %441 = arith.mulf %440, %35 : vector<16x16xf32>
    %cst_211 = arith.constant dense<0.000000e+00> : vector<16xf32>
    %442 = vector.multi_reduction <add>, %441, %cst_211 [1] : vector<16x16xf32> to vector<16xf32>
    %443 = vector.shape_cast %442 : vector<16xf32> to vector<16x1xf32>
    %cst_212 = arith.constant dense<0.000000e+00> : vector<16x32xf32>
    %444 = tpu.matmul %441, %413, %cst_212 {dimension_numbers = #tpu.dot_dimension_numbers<[1], [0], [0], [1], [0, 0, 1, 1], [], []>} : vector<16x16xf32>, vector<16x32xf32>, vector<16x32xf32> -> vector<16x32xf32>
    %cst_213 = arith.constant 1.000000e-16 : f32
    %445 = vector.broadcast %cst_213 : f32 to vector<16x1xf32>
    %446 = arith.addf %443, %445 : vector<16x1xf32>
    %447 = tpu.reciprocal %446 {approx = true} : vector<16x1xf32> -> vector<16x1xf32>
    %cst_214 = arith.constant 1.000000e+00 : f32
    %448 = vector.broadcast %cst_214 : f32 to vector<16x1xf32>
    %449 = arith.mulf %447, %448 : vector<16x1xf32>
    %450 = vector.broadcast %449 : vector<16x1xf32> to vector<16x32xf32>
    %451 = arith.mulf %444, %450 : vector<16x32xf32>
    %452 = vector.broadcast %420 : vector<1x32xf32> to vector<16x32xf32>
    %453 = arith.addf %451, %452 : vector<16x32xf32>
    %454 = arith.addf %453, %418 : vector<16x32xf32>
    %cst_215 = arith.constant 0.000000e+00 : f32
    %455 = vector.broadcast %cst_215 : f32 to vector<16x32xf32>
    %456 = arith.maximumf %454, %455 : vector<16x32xf32>
    %c0_216 = arith.constant 0 : index
    %c0_217 = arith.constant 0 : index
    %457 = vector.load %arg6[%c0_216, %c0_217] : memref<8x1xi32, #tpu.memory_space<vmem>>, vector<8x1xi32>
    %458 = tpu.iota {dimensions = array<i32: 1>} : vector<8x16xi32>
    %459 = vector.broadcast %457 : vector<8x1xi32> to vector<8x16xi32>
    %460 = arith.cmpi eq, %459, %458 : vector<8x16xi32>
    %461 = arith.extui %460 : vector<8x16xi1> to vector<8x16xi32>
    %462 = arith.sitofp %461 : vector<8x16xi32> to vector<8x16xf32>
    %c0_218 = arith.constant 0 : index
    %c0_219 = arith.constant 0 : index
    %463 = vector.load %arg7[%c0_218, %c0_219] : memref<8x1xi32, #tpu.memory_space<vmem>>, vector<8x1xi32>
    %464 = tpu.iota {dimensions = array<i32: 1>} : vector<8x16xi32>
    %465 = vector.broadcast %463 : vector<8x1xi32> to vector<8x16xi32>
    %466 = arith.cmpi eq, %465, %464 : vector<8x16xi32>
    %467 = arith.extui %466 : vector<8x16xi1> to vector<8x16xi32>
    %468 = arith.sitofp %467 : vector<8x16xi32> to vector<8x16xf32>
    %cst_220 = arith.constant dense<0.000000e+00> : vector<8x32xf32>
    %469 = tpu.matmul %462, %408, %cst_220 {dimension_numbers = #tpu.dot_dimension_numbers<[1], [0], [0], [1], [0, 0, 1, 1], [], []>} : vector<8x16xf32>, vector<16x32xf32>, vector<8x32xf32> -> vector<8x32xf32>
    %cst_221 = arith.constant dense<0.000000e+00> : vector<8x32xf32>
    %470 = tpu.matmul %468, %456, %cst_221 {dimension_numbers = #tpu.dot_dimension_numbers<[1], [0], [0], [1], [0, 0, 1, 1], [], []>} : vector<8x16xf32>, vector<16x32xf32>, vector<8x32xf32> -> vector<8x32xf32>
    %c0_222 = arith.constant 0 : index
    %c0_223 = arith.constant 0 : index
    %471 = vector.load %arg43[%c0_222, %c0_223] : memref<64x32xf32, #tpu.memory_space<vmem>>, vector<32x32xf32>
    %cst_224 = arith.constant dense<0.000000e+00> : vector<8x32xf32>
    %472 = tpu.matmul %469, %471, %cst_224 {dimension_numbers = #tpu.dot_dimension_numbers<[1], [0], [0], [1], [0, 0, 1, 1], [], []>} : vector<8x32xf32>, vector<32x32xf32>, vector<8x32xf32> -> vector<8x32xf32>
    %c32_225 = arith.constant 32 : index
    %c0_226 = arith.constant 0 : index
    %473 = vector.load %arg43[%c32_225, %c0_226] : memref<64x32xf32, #tpu.memory_space<vmem>>, vector<32x32xf32>
    %cst_227 = arith.constant dense<0.000000e+00> : vector<8x32xf32>
    %474 = tpu.matmul %470, %473, %cst_227 {dimension_numbers = #tpu.dot_dimension_numbers<[1], [0], [0], [1], [0, 0, 1, 1], [], []>} : vector<8x32xf32>, vector<32x32xf32>, vector<8x32xf32> -> vector<8x32xf32>
    %475 = arith.addf %472, %474 : vector<8x32xf32>
    %c0_228 = arith.constant 0 : index
    %c0_229 = arith.constant 0 : index
    %476 = vector.load %arg44[%c0_228, %c0_229] : memref<1x32xf32, #tpu.memory_space<vmem>>, vector<1x32xf32>
    %477 = vector.broadcast %476 : vector<1x32xf32> to vector<8x32xf32>
    %478 = arith.addf %475, %477 : vector<8x32xf32>
    %cst_230 = arith.constant 0.000000e+00 : f32
    %479 = vector.broadcast %cst_230 : f32 to vector<8x32xf32>
    %480 = arith.maximumf %478, %479 : vector<8x32xf32>
    %c0_231 = arith.constant 0 : index
    %c0_232 = arith.constant 0 : index
    %481 = vector.load %arg45[%c0_231, %c0_232] : memref<32x16xf32, #tpu.memory_space<vmem>>, vector<32x16xf32>
    %c0_233 = arith.constant 0 : index
    %c0_234 = arith.constant 0 : index
    %482 = vector.load %arg46[%c0_233, %c0_234] : memref<1x16xf32, #tpu.memory_space<vmem>>, vector<1x16xf32>
    %cst_235 = arith.constant dense<0.000000e+00> : vector<8x16xf32>
    %483 = tpu.matmul %480, %481, %cst_235 {dimension_numbers = #tpu.dot_dimension_numbers<[1], [0], [0], [1], [0, 0, 1, 1], [], []>} : vector<8x32xf32>, vector<32x16xf32>, vector<8x16xf32> -> vector<8x16xf32>
    %484 = vector.broadcast %482 : vector<1x16xf32> to vector<8x16xf32>
    %485 = arith.addf %483, %484 : vector<8x16xf32>
    %cst_236 = arith.constant 0.000000e+00 : f32
    %486 = vector.broadcast %cst_236 : f32 to vector<8x16xf32>
    %487 = arith.maximumf %485, %486 : vector<8x16xf32>
    %c0_237 = arith.constant 0 : index
    %c0_238 = arith.constant 0 : index
    %488 = vector.load %arg47[%c0_237, %c0_238] : memref<1x16xf32, #tpu.memory_space<vmem>>, vector<1x16xf32>
    %489 = vector.broadcast %488 : vector<1x16xf32> to vector<8x16xf32>
    %490 = arith.mulf %487, %489 : vector<8x16xf32>
    %cst_239 = arith.constant dense<0.000000e+00> : vector<8xf32>
    %491 = vector.multi_reduction <add>, %490, %cst_239 [1] : vector<8x16xf32> to vector<8xf32>
    %492 = vector.shape_cast %491 : vector<8xf32> to vector<8x1xf32>
    %c0_240 = arith.constant 0 : index
    %c0_241 = arith.constant 0 : index
    %493 = vector.load %arg48[%c0_240, %c0_241] : memref<1x1xf32, #tpu.memory_space<vmem>>, vector<1x1xf32>
    %494 = vector.broadcast %493 : vector<1x1xf32> to vector<8x1xf32>
    %495 = arith.addf %492, %494 : vector<8x1xf32>
    %cst_242 = arith.constant 0.000000e+00 : f32
    %496 = vector.broadcast %cst_242 : f32 to vector<8x1xf32>
    %497 = arith.subf %496, %495 : vector<8x1xf32>
    %498 = math.exp %497 : vector<8x1xf32>
    %cst_243 = arith.constant 1.000000e+00 : f32
    %499 = vector.broadcast %cst_243 : f32 to vector<8x1xf32>
    %500 = arith.addf %499, %498 : vector<8x1xf32>
    %cst_244 = arith.constant 1.000000e+00 : f32
    %501 = vector.broadcast %cst_244 : f32 to vector<8x1xf32>
    %502 = arith.divf %501, %500 : vector<8x1xf32>
    %c0_245 = arith.constant 0 : index
    %c0_246 = arith.constant 0 : index
    %503 = vector.load %arg50[%c0_245, %c0_246] : memref<8x1xf32, #tpu.memory_space<vmem>>, vector<8x1xf32>
    tpu.vector_store %arg50[%c0_245, %c0_246], %502 {strides = array<i32>} : memref<8x1xf32, #tpu.memory_space<vmem>>, vector<8x1xf32>,
    %504 = tpu.iota {dimensions = array<i32: 0>} : vector<16x1xi32>
    %c16_i32 = arith.constant 16 : i32
    %505 = vector.broadcast %c16_i32 : i32 to vector<16x1xi32>
    %506 = arith.cmpi slt, %504, %505 : vector<16x1xi32>
    %507 = arith.extui %506 : vector<16x1xi1> to vector<16x1xi32>
    %508 = arith.sitofp %507 : vector<16x1xi32> to vector<16x1xf32>
    %509 = vector.broadcast %508 : vector<16x1xf32> to vector<16x32xf32>
    %510 = arith.mulf %360, %509 : vector<16x32xf32>
    %511 = tpu.iota {dimensions = array<i32: 0>} : vector<32x128xi32>
    %512 = tpu.iota {dimensions = array<i32: 1>} : vector<32x128xi32>
    %c0_i32 = arith.constant 0 : i32
    %513 = vector.broadcast %c0_i32 : i32 to vector<32x128xi32>
    %514 = arith.addi %511, %513 : vector<32x128xi32>
    %515 = arith.cmpi eq, %512, %514 : vector<32x128xi32>
    %516 = arith.extui %515 : vector<32x128xi1> to vector<32x128xi32>
    %517 = arith.sitofp %516 : vector<32x128xi32> to vector<32x128xf32>
    %cst_247 = arith.constant dense<0.000000e+00> : vector<16x128xf32>
    %518 = tpu.matmul %510, %517, %cst_247 {dimension_numbers = #tpu.dot_dimension_numbers<[1], [0], [0], [1], [0, 0, 1, 1], [], []>} : vector<16x32xf32>, vector<32x128xf32>, vector<16x128xf32> -> vector<16x128xf32>
    %519 = tpu.iota {dimensions = array<i32: 0>} : vector<16x1xi32>
    %c12_i32 = arith.constant 12 : i32
    %520 = vector.broadcast %c12_i32 : i32 to vector<16x1xi32>
    %521 = arith.cmpi slt, %519, %520 : vector<16x1xi32>
    %522 = arith.extui %521 : vector<16x1xi1> to vector<16x1xi32>
    %523 = arith.sitofp %522 : vector<16x1xi32> to vector<16x1xf32>
    %524 = vector.broadcast %523 : vector<16x1xf32> to vector<16x32xf32>
    %525 = arith.mulf %408, %524 : vector<16x32xf32>
    %526 = tpu.iota {dimensions = array<i32: 0>} : vector<32x128xi32>
    %527 = tpu.iota {dimensions = array<i32: 1>} : vector<32x128xi32>
    %c32_i32 = arith.constant 32 : i32
    %528 = vector.broadcast %c32_i32 : i32 to vector<32x128xi32>
    %529 = arith.addi %526, %528 : vector<32x128xi32>
    %530 = arith.cmpi eq, %527, %529 : vector<32x128xi32>
    %531 = arith.extui %530 : vector<32x128xi1> to vector<32x128xi32>
    %532 = arith.sitofp %531 : vector<32x128xi32> to vector<32x128xf32>
    %cst_248 = arith.constant dense<0.000000e+00> : vector<16x128xf32>
    %533 = tpu.matmul %525, %532, %cst_248 {dimension_numbers = #tpu.dot_dimension_numbers<[1], [0], [0], [1], [0, 0, 1, 1], [], []>} : vector<16x32xf32>, vector<32x128xf32>, vector<16x128xf32> -> vector<16x128xf32>
    %534 = arith.addf %518, %533 : vector<16x128xf32>
    %535 = tpu.iota {dimensions = array<i32: 0>} : vector<16x1xi32>
    %c10_i32 = arith.constant 10 : i32
    %536 = vector.broadcast %c10_i32 : i32 to vector<16x1xi32>
    %537 = arith.cmpi slt, %535, %536 : vector<16x1xi32>
    %538 = arith.extui %537 : vector<16x1xi1> to vector<16x1xi32>
    %539 = arith.sitofp %538 : vector<16x1xi32> to vector<16x1xf32>
    %540 = vector.broadcast %539 : vector<16x1xf32> to vector<16x32xf32>
    %541 = arith.mulf %456, %540 : vector<16x32xf32>
    %542 = tpu.iota {dimensions = array<i32: 0>} : vector<32x128xi32>
    %543 = tpu.iota {dimensions = array<i32: 1>} : vector<32x128xi32>
    %c64_i32 = arith.constant 64 : i32
    %544 = vector.broadcast %c64_i32 : i32 to vector<32x128xi32>
    %545 = arith.addi %542, %544 : vector<32x128xi32>
    %546 = arith.cmpi eq, %543, %545 : vector<32x128xi32>
    %547 = arith.extui %546 : vector<32x128xi1> to vector<32x128xi32>
    %548 = arith.sitofp %547 : vector<32x128xi32> to vector<32x128xf32>
    %cst_249 = arith.constant dense<0.000000e+00> : vector<16x128xf32>
    %549 = tpu.matmul %541, %548, %cst_249 {dimension_numbers = #tpu.dot_dimension_numbers<[1], [0], [0], [1], [0, 0, 1, 1], [], []>} : vector<16x32xf32>, vector<32x128xf32>, vector<16x128xf32> -> vector<16x128xf32>
    %550 = arith.addf %534, %549 : vector<16x128xf32>
    %c0_250 = arith.constant 0 : index
    %c0_251 = arith.constant 0 : index
    %551 = vector.load %arg49[%c0_250, %c0_251] : memref<16x128xf32, #tpu.memory_space<vmem>>, vector<16x128xf32>
    tpu.vector_store %arg49[%c0_250, %c0_251], %550 {strides = array<i32>} : memref<16x128xf32, #tpu.memory_space<vmem>>, vector<16x128xf32>,
    return
  }
}

</mosaic_0001>

<llo_original>
// kernel: tpu_custom_call.1
$region0: #{tpu_custom_call.1}
  #allocation0 [shape = 'u32[]', space=smem, size = 0x4, offset = 0x4, fixed_abs, tag = 'smem constant byte address 0x4 - core index']
  #allocation1 [shape = 'u32[144,128]{1,0:T(1,128)}', space=vmem, size = 0x12000, scoped, tag = 'internal scratch']
  #allocation2 [shape = 'f32[1,1]{1,0:T(1,128)S(1)}', space=vmem, size = 0x200, scoped, tag = 'scoped memory for tpu_custom_call.1']
  %s0 = inlined_call_operand.smem [shape: u32[51], index: -1, kind: input, shape index: {}]
  %s1 = sld [smem:[%s0]]
  %s2 = scalar_lea.smem %s0, 1
  %s3 = sld [smem:[%s2]]
  %s4 = scalar_lea.smem %s0, 2
  %s5 = sld [smem:[%s4]]
  %s6 = scalar_lea.smem %s0, 3
  %s7 = sld [smem:[%s6]]
  %s8 = scalar_lea.smem %s0, 4
  %s9 = sld [smem:[%s8]]
  %s10 = scalar_lea.smem %s0, 5
  %s11 = sld [smem:[%s10]]
  %s12 = scalar_lea.smem %s0, 6
  %s13 = sld [smem:[%s12]]
  %s14 = scalar_lea.smem %s0, 7
  %s15 = sld [smem:[%s14]]
  %s16 = scalar_lea.smem %s0, 8
  %s17 = sld [smem:[%s16]]
  %s18 = scalar_lea.smem %s0, 9
  %s19 = sld [smem:[%s18]]
  %s20 = scalar_lea.smem %s0, 10
  %s21 = sld [smem:[%s20]]
  %s22 = scalar_lea.smem %s0, 11
  %s23 = sld [smem:[%s22]]
  %s24 = scalar_lea.smem %s0, 12
  %s25 = sld [smem:[%s24]]
  %s26 = scalar_lea.smem %s0, 13
  %s27 = sld [smem:[%s26]]
  %s28 = scalar_lea.smem %s0, 14
  %s29 = sld [smem:[%s28]]
  %s30 = scalar_lea.smem %s0, 15
  %s31 = sld [smem:[%s30]]
  %s32 = scalar_lea.smem %s0, 16
  %s33 = sld [smem:[%s32]]
  %s34 = scalar_lea.smem %s0, 17
  %s35 = sld [smem:[%s34]]
  %s36 = scalar_lea.smem %s0, 18
  %s37 = sld [smem:[%s36]]
  %s38 = scalar_lea.smem %s0, 19
  %s39 = sld [smem:[%s38]]
  %s40 = scalar_lea.smem %s0, 20
  %s41 = sld [smem:[%s40]]
  %s42 = scalar_lea.smem %s0, 21
  %s43 = sld [smem:[%s42]]
  %s44 = scalar_lea.smem %s0, 22
  %s45 = sld [smem:[%s44]]
  %s46 = scalar_lea.smem %s0, 23
  %s47 = sld [smem:[%s46]]
  %s48 = scalar_lea.smem %s0, 24
  %s49 = sld [smem:[%s48]]
  %s50 = scalar_lea.smem %s0, 25
  %s51 = sld [smem:[%s50]]
  %s52 = scalar_lea.smem %s0, 26
  %s53 = sld [smem:[%s52]]
  %s54 = scalar_lea.smem %s0, 27
  %s55 = sld [smem:[%s54]]
  %s56 = scalar_lea.smem %s0, 28
  %s57 = sld [smem:[%s56]]
  %s58 = scalar_lea.smem %s0, 29
  %s59 = sld [smem:[%s58]]
  %s60 = scalar_lea.smem %s0, 30
  %s61 = sld [smem:[%s60]]
  %s62 = scalar_lea.smem %s0, 31
  %s63 = sld [smem:[%s62]]
  %s64 = scalar_lea.smem %s0, 32
  %s65 = sld [smem:[%s64]]
  %s66 = scalar_lea.smem %s0, 33
  %s67 = sld [smem:[%s66]]
  %s68 = scalar_lea.smem %s0, 34
  %s69 = sld [smem:[%s68]]
  %s70 = scalar_lea.smem %s0, 35
  %s71 = sld [smem:[%s70]]
  %s72 = scalar_lea.smem %s0, 36
  %s73 = sld [smem:[%s72]]
  %s74 = scalar_lea.smem %s0, 37
  %s75 = sld [smem:[%s74]]
  %s76 = scalar_lea.smem %s0, 38
  %s77 = sld [smem:[%s76]]
  %s78 = scalar_lea.smem %s0, 39
  %s79 = sld [smem:[%s78]]
  %s80 = scalar_lea.smem %s0, 40
  %s81 = sld [smem:[%s80]]
  %s82 = scalar_lea.smem %s0, 41
  %s83 = sld [smem:[%s82]]
  %s84 = scalar_lea.smem %s0, 42
  %s85 = sld [smem:[%s84]]
  %s86 = scalar_lea.smem %s0, 43
  %s87 = sld [smem:[%s86]]
  %s88 = scalar_lea.smem %s0, 44
  %s89 = sld [smem:[%s88]]
  %s90 = scalar_lea.smem %s0, 45
  %s91 = sld [smem:[%s90]]
  %s92 = scalar_lea.smem %s0, 46
  %s93 = sld [smem:[%s92]]
  %s94 = scalar_lea.smem %s0, 47
  %s95 = sld [smem:[%s94]]
  %s96 = scalar_lea.smem %s0, 48
  %s97 = sld [smem:[%s96]]
  %s98 = scalar_lea.smem %s0, 49
  %s99 = sld [smem:[%s98]]
  %s100 = scalar_lea.smem %s0, 50
  %s101 = sld [smem:[%s100]]
  %102 = xla_tuple %s99, %s101
  %s103 = sld [smem:[#allocation0]]
  $region278: #{tpu_custom_call.1} parent=0
    _
  %s105 = ssub.s32 1, %s103
  %s106 = scalar_select 0, %s105, %s103
  %v107 = vstv %s97
  %108 = vst [vmem:[#allocation2] sm:$0x1] %v107
  $region1: #{tpu_custom_call.1} parent=0
    #allocation3 [shape = 'u8[512]{0}', space=vmem, size = 0x400, scoped, tag = 'input window, operand 0, single buffered']
    #allocation4 [shape = 's32[1]{0}', space=sflag, size = 0x4, scoped, tag = 'scoped memory for tpu_custom_call.1']
    #allocation5 [shape = 's32[1]{0}', space=sflag, size = 0x4, scoped, tag = 'scoped memory for tpu_custom_call.1']
    #allocation6 [shape = 'u8[512]{0}', space=vmem, size = 0x400, scoped, tag = 'input window, operand 1, single buffered']
    #allocation7 [shape = 's32[1]{0}', space=sflag, size = 0x4, scoped, tag = 'scoped memory for tpu_custom_call.1']
    #allocation8 [shape = 'u8[512]{0}', space=vmem, size = 0x400, scoped, tag = 'input window, operand 2, single buffered']
    #allocation9 [shape = 'u8[512]{0}', space=vmem, size = 0x400, scoped, tag = 'input window, operand 3, single buffered']
    #allocation10 [shape = 's32[1]{0}', space=sflag, size = 0x4, scoped, tag = 'scoped memory for tpu_custom_call.1']
    #allocation11 [shape = 'u8[512]{0}', space=vmem, size = 0x400, scoped, tag = 'input window, operand 4, single buffered']
    #allocation12 [shape = 'u8[512]{0}', space=vmem, size = 0x400, scoped, tag = 'input window, operand 5, single buffered']
    #allocation13 [shape = 's32[1]{0}', space=sflag, size = 0x4, scoped, tag = 'scoped memory for tpu_custom_call.1']
    #allocation14 [shape = 'u8[512]{0}', space=vmem, size = 0x400, scoped, tag = 'input window, operand 12, single buffered']
    #allocation15 [shape = 'u8[512]{0}', space=vmem, size = 0x400, scoped, tag = 'input window, operand 15, single buffered']
    #allocation16 [shape = 's32[1]{0}', space=sflag, size = 0x4, scoped, tag = 'scoped memory for tpu_custom_call.1']
    #allocation17 [shape = 'u8[512]{0}', space=vmem, size = 0x400, scoped, tag = 'input window, operand 16, single buffered']
    #allocation18 [shape = 'u8[512]{0}', space=vmem, size = 0x400, scoped, tag = 'input window, operand 18, single buffered']
    #allocation19 [shape = 's32[1]{0}', space=sflag, size = 0x4, scoped, tag = 'scoped memory for tpu_custom_call.1']
    #allocation20 [shape = 'u8[512]{0}', space=vmem, size = 0x400, scoped, tag = 'input window, operand 20, single buffered']
    #allocation21 [shape = 'u8[512]{0}', space=vmem, size = 0x400, scoped, tag = 'input window, operand 21, single buffered']
    #allocation22 [shape = 's32[1]{0}', space=sflag, size = 0x4, scoped, tag = 'scoped memory for tpu_custom_call.1']
    #allocation23 [shape = 'u8[512]{0}', space=vmem, size = 0x400, scoped, tag = 'input window, operand 22, single buffered']
    #allocation24 [shape = 'u8[2048]{0}', space=vmem, size = 0x800, scoped, tag = 'input window, operand 24, single buffered']
    #allocation25 [shape = 's32[1]{0}', space=sflag, size = 0x4, scoped, tag = 'scoped memory for tpu_custom_call.1']
    #allocation26 [shape = 'u8[2048]{0}', space=vmem, size = 0x800, scoped, tag = 'input window, operand 25, single buffered']
    #allocation27 [shape = 'u8[512]{0}', space=vmem, size = 0x400, scoped, tag = 'input window, operand 26, single buffered']
    #allocation28 [shape = 's32[1]{0}', space=sflag, size = 0x4, scoped, tag = 'scoped memory for tpu_custom_call.1']
    #allocation29 [shape = 'u8[8192]{0}', space=vmem, size = 0x2000, scoped, tag = 'output window, operand 0, single buffered']
    %109 = vsyncpa [#allocation4], 0
    %110 = vsyncpa [#allocation7], 0
    %111 = vsyncpa [#allocation10], 0
    %112 = vsyncpa [#allocation13], 0
    %113 = vsyncpa [#allocation16], 0
    %114 = vsyncpa [#allocation19], 0
    %115 = vsyncpa [#allocation22], 0
    %116 = vsyncpa [#allocation25], 0
    %117 = vsyncpa [#allocation28], 0
    %118 = vsyncpa [#allocation5], 0
    // Predicated region
    $region2: #{tpu_custom_call.1} parent=1 // pred_check
      _
    $region3: #{tpu_custom_call.1} parent=1 // pred_check_branch
      %120 = sbr.rel (0) target = $region5
    $region4: #{tpu_custom_call.1} parent=1 // pred_region
      %s122 = ssub.s32 16, 16
      %123 = vsyncadd [#allocation4], %s122
      %s125 = sshll.u32 [#allocation3], 4
      %s126 = int_to_ptr.vmem [resolvable:$true] %s125
      %128 = dma.hbm_to_vmem [thread:$0]  %s1, 16, %s126, [#allocation4]
    $region5: #{tpu_custom_call.1} parent=1 // pred_fallthru
      _
    // Predicated region
    $region6: #{tpu_custom_call.1} parent=1 // pred_check
      _
    $region7: #{tpu_custom_call.1} parent=1 // pred_check_branch
      %130 = sbr.rel (0) target = $region9
    $region8: #{tpu_custom_call.1} parent=1 // pred_region
      %s132 = ssub.s32 16, 16
      %133 = vsyncadd [#allocation7], %s132
      %s135 = sshll.u32 [#allocation6], 4
      %s136 = int_to_ptr.vmem [resolvable:$true] %s135
      %138 = dma.hbm_to_vmem [thread:$0]  %s3, 16, %s136, [#allocation7]
    $region9: #{tpu_custom_call.1} parent=1 // pred_fallthru
      _
    // Predicated region
    $region10: #{tpu_custom_call.1} parent=1 // pred_check
      _
    $region11: #{tpu_custom_call.1} parent=1 // pred_check_branch
      %140 = sbr.rel (0) target = $region13
    $region12: #{tpu_custom_call.1} parent=1 // pred_region
      %s142 = ssub.s32 16, 16
      %143 = vsyncadd [#allocation7], %s142
      %s145 = sshll.u32 [#allocation8], 4
      %s146 = int_to_ptr.vmem [resolvable:$true] %s145
      %148 = dma.hbm_to_vmem [thread:$0]  %s5, 16, %s146, [#allocation7]
    $region13: #{tpu_custom_call.1} parent=1 // pred_fallthru
      _
    // Predicated region
    $region14: #{tpu_custom_call.1} parent=1 // pred_check
      _
    $region15: #{tpu_custom_call.1} parent=1 // pred_check_branch
      %150 = sbr.rel (0) target = $region17
    $region16: #{tpu_custom_call.1} parent=1 // pred_region
      %s152 = ssub.s32 16, 16
      %153 = vsyncadd [#allocation10], %s152
      %s155 = sshll.u32 [#allocation9], 4
      %s156 = int_to_ptr.vmem [resolvable:$true] %s155
      %158 = dma.hbm_to_vmem [thread:$0]  %s7, 16, %s156, [#allocation10]
    $region17: #{tpu_custom_call.1} parent=1 // pred_fallthru
      _
    // Predicated region
    $region18: #{tpu_custom_call.1} parent=1 // pred_check
      _
    $region19: #{tpu_custom_call.1} parent=1 // pred_check_branch
      %160 = sbr.rel (0) target = $region21
    $region20: #{tpu_custom_call.1} parent=1 // pred_region
      %s162 = ssub.s32 16, 16
      %163 = vsyncadd [#allocation10], %s162
      %s165 = sshll.u32 [#allocation11], 4
      %s166 = int_to_ptr.vmem [resolvable:$true] %s165
      %168 = dma.hbm_to_vmem [thread:$0]  %s9, 16, %s166, [#allocation10]
    $region21: #{tpu_custom_call.1} parent=1 // pred_fallthru
      _
    // Predicated region
    $region22: #{tpu_custom_call.1} parent=1 // pred_check
      _
    $region23: #{tpu_custom_call.1} parent=1 // pred_check_branch
      %170 = sbr.rel (0) target = $region25
    $region24: #{tpu_custom_call.1} parent=1 // pred_region
      %s172 = ssub.s32 16, 16
      %173 = vsyncadd [#allocation13], %s172
      %s175 = sshll.u32 [#allocation12], 4
      %s176 = int_to_ptr.vmem [resolvable:$true] %s175
      %178 = dma.hbm_to_vmem [thread:$0]  %s11, 16, %s176, [#allocation13]
    $region25: #{tpu_custom_call.1} parent=1 // pred_fallthru
      _
    // Predicated region
    $region26: #{tpu_custom_call.1} parent=1 // pred_check
      _
    $region27: #{tpu_custom_call.1} parent=1 // pred_check_branch
      %180 = sbr.rel (0) target = $region29
    $region28: #{tpu_custom_call.1} parent=1 // pred_region
      _
    $region29: #{tpu_custom_call.1} parent=1 // pred_fallthru
      _
    // Predicated region
    $region30: #{tpu_custom_call.1} parent=1 // pred_check
      _
    $region31: #{tpu_custom_call.1} parent=1 // pred_check_branch
      %182 = sbr.rel (0) target = $region33
    $region32: #{tpu_custom_call.1} parent=1 // pred_region
      _
    $region33: #{tpu_custom_call.1} parent=1 // pred_fallthru
      _
    // Predicated region
    $region34: #{tpu_custom_call.1} parent=1 // pred_check
      _
    $region35: #{tpu_custom_call.1} parent=1 // pred_check_branch
      %184 = sbr.rel (0) target = $region37
    $region36: #{tpu_custom_call.1} parent=1 // pred_region
      _
    $region37: #{tpu_custom_call.1} parent=1 // pred_fallthru
      _
    // Predicated region
    $region38: #{tpu_custom_call.1} parent=1 // pred_check
      _
    $region39: #{tpu_custom_call.1} parent=1 // pred_check_branch
      %186 = sbr.rel (0) target = $region41
    $region40: #{tpu_custom_call.1} parent=1 // pred_region
      _
    $region41: #{tpu_custom_call.1} parent=1 // pred_fallthru
      _
    // Predicated region
    $region42: #{tpu_custom_call.1} parent=1 // pred_check
      _
    $region43: #{tpu_custom_call.1} parent=1 // pred_check_branch
      %188 = sbr.rel (0) target = $region45
    $region44: #{tpu_custom_call.1} parent=1 // pred_region
      _
    $region45: #{tpu_custom_call.1} parent=1 // pred_fallthru
      _
    // Predicated region
    $region46: #{tpu_custom_call.1} parent=1 // pred_check
      _
    $region47: #{tpu_custom_call.1} parent=1 // pred_check_branch
      %190 = sbr.rel (0) target = $region49
    $region48: #{tpu_custom_call.1} parent=1 // pred_region
      _
    $region49: #{tpu_custom_call.1} parent=1 // pred_fallthru
      _
    // Predicated region
    $region50: #{tpu_custom_call.1} parent=1 // pred_check
      _
    $region51: #{tpu_custom_call.1} parent=1 // pred_check_branch
      %192 = sbr.rel (0) target = $region53
    $region52: #{tpu_custom_call.1} parent=1 // pred_region
      %s194 = ssub.s32 16, 16
      %195 = vsyncadd [#allocation13], %s194
      %s197 = sshll.u32 [#allocation14], 4
      %s198 = int_to_ptr.vmem [resolvable:$true] %s197
      %200 = dma.hbm_to_vmem [thread:$0]  %s25, 16, %s198, [#allocation13]
    $region53: #{tpu_custom_call.1} parent=1 // pred_fallthru
      _
    // Predicated region
    $region54: #{tpu_custom_call.1} parent=1 // pred_check
      _
    $region55: #{tpu_custom_call.1} parent=1 // pred_check_branch
      %202 = sbr.rel (0) target = $region57
    $region56: #{tpu_custom_call.1} parent=1 // pred_region
      _
    $region57: #{tpu_custom_call.1} parent=1 // pred_fallthru
      _
    // Predicated region
    $region58: #{tpu_custom_call.1} parent=1 // pred_check
      _
    $region59: #{tpu_custom_call.1} parent=1 // pred_check_branch
      %204 = sbr.rel (0) target = $region61
    $region60: #{tpu_custom_call.1} parent=1 // pred_region
      _
    $region61: #{tpu_custom_call.1} parent=1 // pred_fallthru
      _
    // Predicated region
    $region62: #{tpu_custom_call.1} parent=1 // pred_check
      _
    $region63: #{tpu_custom_call.1} parent=1 // pred_check_branch
      %206 = sbr.rel (0) target = $region65
    $region64: #{tpu_custom_call.1} parent=1 // pred_region
      %s208 = ssub.s32 16, 16
      %209 = vsyncadd [#allocation16], %s208
      %s211 = sshll.u32 [#allocation15], 4
      %s212 = int_to_ptr.vmem [resolvable:$true] %s211
      %214 = dma.hbm_to_vmem [thread:$0]  %s31, 16, %s212, [#allocation16]
    $region65: #{tpu_custom_call.1} parent=1 // pred_fallthru
      _
    // Predicated region
    $region66: #{tpu_custom_call.1} parent=1 // pred_check
      _
    $region67: #{tpu_custom_call.1} parent=1 // pred_check_branch
      %216 = sbr.rel (0) target = $region69
    $region68: #{tpu_custom_call.1} parent=1 // pred_region
      %s218 = ssub.s32 16, 16
      %219 = vsyncadd [#allocation16], %s218
      %s221 = sshll.u32 [#allocation17], 4
      %s222 = int_to_ptr.vmem [resolvable:$true] %s221
      %224 = dma.hbm_to_vmem [thread:$0]  %s33, 16, %s222, [#allocation16]
    $region69: #{tpu_custom_call.1} parent=1 // pred_fallthru
      _
    // Predicated region
    $region70: #{tpu_custom_call.1} parent=1 // pred_check
      _
    $region71: #{tpu_custom_call.1} parent=1 // pred_check_branch
      %226 = sbr.rel (0) target = $region73
    $region72: #{tpu_custom_call.1} parent=1 // pred_region
      _
    $region73: #{tpu_custom_call.1} parent=1 // pred_fallthru
      _
    // Predicated region
    $region74: #{tpu_custom_call.1} parent=1 // pred_check
      _
    $region75: #{tpu_custom_call.1} parent=1 // pred_check_branch
      %228 = sbr.rel (0) target = $region77
    $region76: #{tpu_custom_call.1} parent=1 // pred_region
      %s230 = ssub.s32 16, 16
      %231 = vsyncadd [#allocation19], %s230
      %s233 = sshll.u32 [#allocation18], 4
      %s234 = int_to_ptr.vmem [resolvable:$true] %s233
      %236 = dma.hbm_to_vmem [thread:$0]  %s37, 16, %s234, [#allocation19]
    $region77: #{tpu_custom_call.1} parent=1 // pred_fallthru
      _
    // Predicated region
    $region78: #{tpu_custom_call.1} parent=1 // pred_check
      _
    $region79: #{tpu_custom_call.1} parent=1 // pred_check_branch
      %238 = sbr.rel (0) target = $region81
    $region80: #{tpu_custom_call.1} parent=1 // pred_region
      _
    $region81: #{tpu_custom_call.1} parent=1 // pred_fallthru
      _
    // Predicated region
    $region82: #{tpu_custom_call.1} parent=1 // pred_check
      _
    $region83: #{tpu_custom_call.1} parent=1 // pred_check_branch
      %240 = sbr.rel (0) target = $region85
    $region84: #{tpu_custom_call.1} parent=1 // pred_region
      %s242 = ssub.s32 16, 16
      %243 = vsyncadd [#allocation19], %s242
      %s245 = sshll.u32 [#allocation20], 4
      %s246 = int_to_ptr.vmem [resolvable:$true] %s245
      %248 = dma.hbm_to_vmem [thread:$0]  %s41, 16, %s246, [#allocation19]
    $region85: #{tpu_custom_call.1} parent=1 // pred_fallthru
      _
    // Predicated region
    $region86: #{tpu_custom_call.1} parent=1 // pred_check
      _
    $region87: #{tpu_custom_call.1} parent=1 // pred_check_branch
      %250 = sbr.rel (0) target = $region89
    $region88: #{tpu_custom_call.1} parent=1 // pred_region
      %s252 = ssub.s32 16, 16
      %253 = vsyncadd [#allocation22], %s252
      %s255 = sshll.u32 [#allocation21], 4
      %s256 = int_to_ptr.vmem [resolvable:$true] %s255
      %258 = dma.hbm_to_vmem [thread:$0]  %s43, 16, %s256, [#allocation22]
    $region89: #{tpu_custom_call.1} parent=1 // pred_fallthru
      _
    // Predicated region
    $region90: #{tpu_custom_call.1} parent=1 // pred_check
      _
    $region91: #{tpu_custom_call.1} parent=1 // pred_check_branch
      %260 = sbr.rel (0) target = $region93
    $region92: #{tpu_custom_call.1} parent=1 // pred_region
      %s262 = ssub.s32 16, 16
      %263 = vsyncadd [#allocation22], %s262
      %s265 = sshll.u32 [#allocation23], 4
      %s266 = int_to_ptr.vmem [resolvable:$true] %s265
      %268 = dma.hbm_to_vmem [thread:$0]  %s45, 16, %s266, [#allocation22]
    $region93: #{tpu_custom_call.1} parent=1 // pred_fallthru
      _
    // Predicated region
    $region94: #{tpu_custom_call.1} parent=1 // pred_check
      _
    $region95: #{tpu_custom_call.1} parent=1 // pred_check_branch
      %270 = sbr.rel (0) target = $region97
    $region96: #{tpu_custom_call.1} parent=1 // pred_region
      _
    $region97: #{tpu_custom_call.1} parent=1 // pred_fallthru
      _
    // Predicated region
    $region98: #{tpu_custom_call.1} parent=1 // pred_check
      _
    $region99: #{tpu_custom_call.1} parent=1 // pred_check_branch
      %272 = sbr.rel (0) target = $region101
    $region100: #{tpu_custom_call.1} parent=1 // pred_region
      %s274 = ssub.s32 64, 64
      %275 = vsyncadd [#allocation25], %s274
      %s277 = sshll.u32 [#allocation24], 4
      %s278 = int_to_ptr.vmem [resolvable:$true] %s277
      %280 = dma.hbm_to_vmem [thread:$0]  %s49, 64, %s278, [#allocation25]
    $region101: #{tpu_custom_call.1} parent=1 // pred_fallthru
      _
    // Predicated region
    $region102: #{tpu_custom_call.1} parent=1 // pred_check
      _
    $region103: #{tpu_custom_call.1} parent=1 // pred_check_branch
      %282 = sbr.rel (0) target = $region105
    $region104: #{tpu_custom_call.1} parent=1 // pred_region
      %s284 = ssub.s32 64, 64
      %285 = vsyncadd [#allocation25], %s284
      %s287 = sshll.u32 [#allocation26], 4
      %s288 = int_to_ptr.vmem [resolvable:$true] %s287
      %290 = dma.hbm_to_vmem [thread:$0]  %s51, 64, %s288, [#allocation25]
    $region105: #{tpu_custom_call.1} parent=1 // pred_fallthru
      _
    // Predicated region
    $region106: #{tpu_custom_call.1} parent=1 // pred_check
      _
    $region107: #{tpu_custom_call.1} parent=1 // pred_check_branch
      %292 = sbr.rel (0) target = $region109
    $region108: #{tpu_custom_call.1} parent=1 // pred_region
      %s294 = ssub.s32 16, 16
      %295 = vsyncadd [#allocation28], %s294
      %s297 = sshll.u32 [#allocation27], 4
      %s298 = int_to_ptr.vmem [resolvable:$true] %s297
      %300 = dma.hbm_to_vmem [thread:$0]  %s53, 16, %s298, [#allocation28]
    $region109: #{tpu_custom_call.1} parent=1 // pred_fallthru
      _
    // Predicated region
    $region110: #{tpu_custom_call.1} parent=1 // pred_check
      _
    $region111: #{tpu_custom_call.1} parent=1 // pred_check_branch
      %302 = sbr.rel (0) target = $region113
    $region112: #{tpu_custom_call.1} parent=1 // pred_region
      _
    $region113: #{tpu_custom_call.1} parent=1 // pred_fallthru
      _
    // Predicated region
    $region114: #{tpu_custom_call.1} parent=1 // pred_check
      _
    $region115: #{tpu_custom_call.1} parent=1 // pred_check_branch
      %304 = sbr.rel (0) target = $region117
    $region116: #{tpu_custom_call.1} parent=1 // pred_region
      _
    $region117: #{tpu_custom_call.1} parent=1 // pred_fallthru
      _
    // Predicated region
    $region118: #{tpu_custom_call.1} parent=1 // pred_check
      _
    $region119: #{tpu_custom_call.1} parent=1 // pred_check_branch
      %306 = sbr.rel (0) target = $region121
    $region120: #{tpu_custom_call.1} parent=1 // pred_region
      _
    $region121: #{tpu_custom_call.1} parent=1 // pred_fallthru
      _
    // Predicated region
    $region122: #{tpu_custom_call.1} parent=1 // pred_check
      _
    $region123: #{tpu_custom_call.1} parent=1 // pred_check_branch
      %308 = sbr.rel (0) target = $region125
    $region124: #{tpu_custom_call.1} parent=1 // pred_region
      _
    $region125: #{tpu_custom_call.1} parent=1 // pred_fallthru
      _
    // Predicated region
    $region126: #{tpu_custom_call.1} parent=1 // pred_check
      _
    $region127: #{tpu_custom_call.1} parent=1 // pred_check_branch
      %310 = sbr.rel (0) target = $region129
    $region128: #{tpu_custom_call.1} parent=1 // pred_region
      _
    $region129: #{tpu_custom_call.1} parent=1 // pred_fallthru
      _
    // Predicated region
    $region130: #{tpu_custom_call.1} parent=1 // pred_check
      _
    $region131: #{tpu_custom_call.1} parent=1 // pred_check_branch
      %312 = sbr.rel (0) target = $region133
    $region132: #{tpu_custom_call.1} parent=1 // pred_region
      _
    $region133: #{tpu_custom_call.1} parent=1 // pred_fallthru
      _
    // Predicated region
    $region134: #{tpu_custom_call.1} parent=1 // pred_check
      _
    $region135: #{tpu_custom_call.1} parent=1 // pred_check_branch
      %314 = sbr.rel (0) target = $region137
    $region136: #{tpu_custom_call.1} parent=1 // pred_region
      _
    $region137: #{tpu_custom_call.1} parent=1 // pred_fallthru
      _
    // Predicated region
    $region138: #{tpu_custom_call.1} parent=1 // pred_check
      _
    $region139: #{tpu_custom_call.1} parent=1 // pred_check_branch
      %316 = sbr.rel (0) target = $region141
    $region140: #{tpu_custom_call.1} parent=1 // pred_region
      _
    $region141: #{tpu_custom_call.1} parent=1 // pred_fallthru
      _
    // Predicated region
    $region142: #{tpu_custom_call.1} parent=1 // pred_check
      _
    $region143: #{tpu_custom_call.1} parent=1 // pred_check_branch
      %318 = sbr.rel (0) target = $region145
    $region144: #{tpu_custom_call.1} parent=1 // pred_region
      _
    $region145: #{tpu_custom_call.1} parent=1 // pred_fallthru
      _
    // Predicated region
    $region146: #{tpu_custom_call.1} parent=1 // pred_check
      _
    $region147: #{tpu_custom_call.1} parent=1 // pred_check_branch
      %320 = sbr.rel (0) target = $region149
    $region148: #{tpu_custom_call.1} parent=1 // pred_region
      _
    $region149: #{tpu_custom_call.1} parent=1 // pred_fallthru
      _
    // Predicated region
    $region150: #{tpu_custom_call.1} parent=1 // pred_check
      _
    $region151: #{tpu_custom_call.1} parent=1 // pred_check_branch
      %322 = sbr.rel (0) target = $region153
    $region152: #{tpu_custom_call.1} parent=1 // pred_region
      _
    $region153: #{tpu_custom_call.1} parent=1 // pred_fallthru
      _
    // Predicated region
    $region154: #{tpu_custom_call.1} parent=1 // pred_check
      _
    $region155: #{tpu_custom_call.1} parent=1 // pred_check_branch
      %324 = sbr.rel (0) target = $region157
    $region156: #{tpu_custom_call.1} parent=1 // pred_region
      _
    $region157: #{tpu_custom_call.1} parent=1 // pred_fallthru
      _
    // Predicated region
    $region158: #{tpu_custom_call.1} parent=1 // pred_check
      _
    $region159: #{tpu_custom_call.1} parent=1 // pred_check_branch
      %326 = sbr.rel (0) target = $region161
    $region160: #{tpu_custom_call.1} parent=1 // pred_region
      _
    $region161: #{tpu_custom_call.1} parent=1 // pred_fallthru
      _
    // Predicated region
    $region162: #{tpu_custom_call.1} parent=1 // pred_check
      _
    $region163: #{tpu_custom_call.1} parent=1 // pred_check_branch
      %328 = sbr.rel (0) target = $region165
    $region164: #{tpu_custom_call.1} parent=1 // pred_region
      _
    $region165: #{tpu_custom_call.1} parent=1 // pred_fallthru
      _
    // Predicated region
    $region166: #{tpu_custom_call.1} parent=1 // pred_check
      _
    $region167: #{tpu_custom_call.1} parent=1 // pred_check_branch
      %330 = sbr.rel (0) target = $region169
    $region168: #{tpu_custom_call.1} parent=1 // pred_region
      _
    $region169: #{tpu_custom_call.1} parent=1 // pred_fallthru
      _
    // Predicated region
    $region170: #{tpu_custom_call.1} parent=1 // pred_check
      _
    $region171: #{tpu_custom_call.1} parent=1 // pred_check_branch
      %332 = sbr.rel (0) target = $region173
    $region172: #{tpu_custom_call.1} parent=1 // pred_region
      _
    $region173: #{tpu_custom_call.1} parent=1 // pred_fallthru
      _
    // Predicated region
    $region174: #{tpu_custom_call.1} parent=1 // pred_check
      _
    $region175: #{tpu_custom_call.1} parent=1 // pred_check_branch
      %334 = sbr.rel (0) target = $region177
    $region176: #{tpu_custom_call.1} parent=1 // pred_region
      _
    $region177: #{tpu_custom_call.1} parent=1 // pred_fallthru
      _
    // Predicated region
    $region178: #{tpu_custom_call.1} parent=1 // pred_check
      _
    $region179: #{tpu_custom_call.1} parent=1 // pred_check_branch
      %336 = sbr.rel (0) target = $region181
    $region180: #{tpu_custom_call.1} parent=1 // pred_region
      _
    $region181: #{tpu_custom_call.1} parent=1 // pred_fallthru
      _
    // Predicated region
    $region182: #{tpu_custom_call.1} parent=1 // pred_check
      _
    $region183: #{tpu_custom_call.1} parent=1 // pred_check_branch
      %338 = sbr.rel (0) target = $region185
    $region184: #{tpu_custom_call.1} parent=1 // pred_region
      _
    $region185: #{tpu_custom_call.1} parent=1 // pred_fallthru
      _
    // Predicated region
    $region186: #{tpu_custom_call.1} parent=1 // pred_check
      _
    $region187: #{tpu_custom_call.1} parent=1 // pred_check_branch
      %340 = sbr.rel (0) target = $region189
    $region188: #{tpu_custom_call.1} parent=1 // pred_region
      _
    $region189: #{tpu_custom_call.1} parent=1 // pred_fallthru
      _
    // Predicated region
    $region190: #{tpu_custom_call.1} parent=1 // pred_check
      _
    $region191: #{tpu_custom_call.1} parent=1 // pred_check_branch
      %342 = sbr.rel (0) target = $region193
    $region192: #{tpu_custom_call.1} parent=1 // pred_region
      _
    $region193: #{tpu_custom_call.1} parent=1 // pred_fallthru
      _
    // Predicated region
    $region194: #{tpu_custom_call.1} parent=1 // pred_check
      _
    $region195: #{tpu_custom_call.1} parent=1 // pred_check_branch
      %344 = sbr.rel (0) target = $region197
    $region196: #{tpu_custom_call.1} parent=1 // pred_region
      _
    $region197: #{tpu_custom_call.1} parent=1 // pred_fallthru
      _
    // Predicated region
    $region198: #{tpu_custom_call.1} parent=1 // pred_check
      _
    $region199: #{tpu_custom_call.1} parent=1 // pred_check_branch
      %346 = sbr.rel (0) target = $region201
    $region200: #{tpu_custom_call.1} parent=1 // pred_region
      %347 = dma.done [#allocation4], 16
    $region201: #{tpu_custom_call.1} parent=1 // pred_fallthru
      _
    // Predicated region
    $region202: #{tpu_custom_call.1} parent=1 // pred_check
      _
    $region203: #{tpu_custom_call.1} parent=1 // pred_check_branch
      %349 = sbr.rel (0) target = $region205
    $region204: #{tpu_custom_call.1} parent=1 // pred_region
      %350 = dma.done [#allocation7], 16
    $region205: #{tpu_custom_call.1} parent=1 // pred_fallthru
      _
    // Predicated region
    $region206: #{tpu_custom_call.1} parent=1 // pred_check
      _
    $region207: #{tpu_custom_call.1} parent=1 // pred_check_branch
      %352 = sbr.rel (0) target = $region209
    $region208: #{tpu_custom_call.1} parent=1 // pred_region
      %353 = dma.done [#allocation7], 16
    $region209: #{tpu_custom_call.1} parent=1 // pred_fallthru
      _
    // Predicated region
    $region210: #{tpu_custom_call.1} parent=1 // pred_check
      _
    $region211: #{tpu_custom_call.1} parent=1 // pred_check_branch
      %355 = sbr.rel (0) target = $region213
    $region212: #{tpu_custom_call.1} parent=1 // pred_region
      %356 = dma.done [#allocation10], 16
    $region213: #{tpu_custom_call.1} parent=1 // pred_fallthru
      _
    // Predicated region
    $region214: #{tpu_custom_call.1} parent=1 // pred_check
      _
    $region215: #{tpu_custom_call.1} parent=1 // pred_check_branch
      %358 = sbr.rel (0) target = $region217
    $region216: #{tpu_custom_call.1} parent=1 // pred_region
      %359 = dma.done [#allocation10], 16
    $region217: #{tpu_custom_call.1} parent=1 // pred_fallthru
      _
    // Predicated region
    $region218: #{tpu_custom_call.1} parent=1 // pred_check
      _
    $region219: #{tpu_custom_call.1} parent=1 // pred_check_branch
      %361 = sbr.rel (0) target = $region221
    $region220: #{tpu_custom_call.1} parent=1 // pred_region
      %362 = dma.done [#allocation13], 16
    $region221: #{tpu_custom_call.1} parent=1 // pred_fallthru
      _
    // Predicated region
    $region222: #{tpu_custom_call.1} parent=1 // pred_check
      _
    $region223: #{tpu_custom_call.1} parent=1 // pred_check_branch
      %364 = sbr.rel (0) target = $region225
    $region224: #{tpu_custom_call.1} parent=1 // pred_region
      %365 = dma.done [#allocation13], 16
    $region225: #{tpu_custom_call.1} parent=1 // pred_fallthru
      _
    // Predicated region
    $region226: #{tpu_custom_call.1} parent=1 // pred_check
      _
    $region227: #{tpu_custom_call.1} parent=1 // pred_check_branch
      %367 = sbr.rel (0) target = $region229
    $region228: #{tpu_custom_call.1} parent=1 // pred_region
      %368 = dma.done [#allocation16], 16
    $region229: #{tpu_custom_call.1} parent=1 // pred_fallthru
      _
    // Predicated region
    $region230: #{tpu_custom_call.1} parent=1 // pred_check
      _
    $region231: #{tpu_custom_call.1} parent=1 // pred_check_branch
      %370 = sbr.rel (0) target = $region233
    $region232: #{tpu_custom_call.1} parent=1 // pred_region
      %371 = dma.done [#allocation16], 16
    $region233: #{tpu_custom_call.1} parent=1 // pred_fallthru
      _
    // Predicated region
    $region234: #{tpu_custom_call.1} parent=1 // pred_check
      _
    $region235: #{tpu_custom_call.1} parent=1 // pred_check_branch
      %373 = sbr.rel (0) target = $region237
    $region236: #{tpu_custom_call.1} parent=1 // pred_region
      %374 = dma.done [#allocation19], 16
    $region237: #{tpu_custom_call.1} parent=1 // pred_fallthru
      _
    // Predicated region
    $region238: #{tpu_custom_call.1} parent=1 // pred_check
      _
    $region239: #{tpu_custom_call.1} parent=1 // pred_check_branch
      %376 = sbr.rel (0) target = $region241
    $region240: #{tpu_custom_call.1} parent=1 // pred_region
      %377 = dma.done [#allocation19], 16
    $region241: #{tpu_custom_call.1} parent=1 // pred_fallthru
      _
    // Predicated region
    $region242: #{tpu_custom_call.1} parent=1 // pred_check
      _
    $region243: #{tpu_custom_call.1} parent=1 // pred_check_branch
      %379 = sbr.rel (0) target = $region245
    $region244: #{tpu_custom_call.1} parent=1 // pred_region
      %380 = dma.done [#allocation22], 16
    $region245: #{tpu_custom_call.1} parent=1 // pred_fallthru
      _
    // Predicated region
    $region246: #{tpu_custom_call.1} parent=1 // pred_check
      _
    $region247: #{tpu_custom_call.1} parent=1 // pred_check_branch
      %382 = sbr.rel (0) target = $region249
    $region248: #{tpu_custom_call.1} parent=1 // pred_region
      %383 = dma.done [#allocation22], 16
    $region249: #{tpu_custom_call.1} parent=1 // pred_fallthru
      _
    // Predicated region
    $region250: #{tpu_custom_call.1} parent=1 // pred_check
      _
    $region251: #{tpu_custom_call.1} parent=1 // pred_check_branch
      %385 = sbr.rel (0) target = $region253
    $region252: #{tpu_custom_call.1} parent=1 // pred_region
      %386 = dma.done [#allocation25], 64
    $region253: #{tpu_custom_call.1} parent=1 // pred_fallthru
      _
    // Predicated region
    $region254: #{tpu_custom_call.1} parent=1 // pred_check
      _
    $region255: #{tpu_custom_call.1} parent=1 // pred_check_branch
      %388 = sbr.rel (0) target = $region257
    $region256: #{tpu_custom_call.1} parent=1 // pred_region
      %389 = dma.done [#allocation25], 64
    $region257: #{tpu_custom_call.1} parent=1 // pred_fallthru
      _
    // Predicated region
    $region258: #{tpu_custom_call.1} parent=1 // pred_check
      _
    $region259: #{tpu_custom_call.1} parent=1 // pred_check_branch
      %391 = sbr.rel (0) target = $region261
    $region260: #{tpu_custom_call.1} parent=1 // pred_region
      %392 = dma.done [#allocation28], 16
    $region261: #{tpu_custom_call.1} parent=1 // pred_fallthru
      _
    %v393 = vld [vmem:[#allocation6] sm:$0x1]
    %v394 = vlaneseq
    %v395 = vshrl.u32 %v394, 7
    %v396 = vadd.s32 %v395, 8
    %v397 = vlaneseq
    %v398 = vshrl.u32 %v397, 7
    %v399 = vsub.s32 0, %v398
    %v400 = vrot.slane %v393, %v399
    %vm401 = vcmp.eq.s32.totalorder %v395, %v400
    %vm402 = vcmp.eq.s32.totalorder %v396, %v400
    %v403 = vsel %vm401, 1, 0
    %v404 = vsel %vm402, 1, 0
    %v405 = vcvt.s32.f32 %v403
    %v406 = vcvt.s32.f32 %v404
    %v407 = vld [vmem:[#allocation3] sm:$0x1]
    %v408 = vlaneseq
    %v409 = vshrl.u32 %v408, 7
    %v410 = vsub.s32 0, %v409
    %v411 = vrot.slane %v407, %v410
    %vm412 = vcmp.eq.s32.totalorder %v395, %v411
    %vm413 = vcmp.eq.s32.totalorder %v396, %v411
    %v414 = vsel %vm412, 1, 0
    %v415 = vsel %vm413, 1, 0
    %v416 = vcvt.s32.f32 %v414
    %v417 = vcvt.s32.f32 %v415
    %vm418 = vcmask 662528
    %v420 = vsel %vm418, %v405, 0
    %v423 = vsel %vm418, %v406, 0
    %v426 = vsel %vm418, %v416, 0
    %v429 = vsel %vm418, %v417, 0
    %431 = vmatprep.subr.mxu0 0.0
    %432 = vmatpush1.xpose.msra.mxu0 0.0
    %433 = vmatprep.subr.mxu0 0.0
    %434 = vmatpush1.xpose.msra.mxu0 0.0
    %435 = vmatprep.subr.mxu0 0.0
    %436 = vmatpush1.xpose.msra.mxu0 0.0
    %437 = vmatprep.subr.mxu0 0.0
    %438 = vmatpush1.xpose.msra.mxu0 0.0
    %439 = vmatprep.subr.mxu0 0.0
    %440 = vmatpush1.xpose.msra.mxu0 0.0
    %441 = vmatprep.subr.mxu0 0.0
    %442 = vmatpush1.xpose.msra.mxu0 0.0
    %443 = vmatprep.subr.mxu0 0.0
    %444 = vmatpush1.xpose.msra.mxu0 0.0
    %445 = vmatprep.subr.mxu0 0.0
    %446 = vmatpush1.xpose.msra.mxu0 0.0
    %447 = vmatprep.subr.mxu0 0.0
    %448 = vmatpush1.xpose.msra.mxu0 0.0
    %449 = vmatprep.subr.mxu0 0.0
    %450 = vmatpush1.xpose.msra.mxu0 0.0
    %451 = vmatprep.subr.mxu0 0.0
    %452 = vmatpush1.xpose.msra.mxu0 0.0
    %453 = vmatprep.subr.mxu0 0.0
    %454 = vmatpush1.xpose.msra.mxu0 0.0
    %455 = vmatprep.subr.mxu0 0.0
    %456 = vmatpush1.xpose.msra.mxu0 0.0
    %457 = vmatprep.subr.mxu0 0.0
    %458 = vmatpush1.xpose.msra.mxu0 0.0
    %459 = vmatprep.subr.mxu0 0.0
    %460 = vmatpush1.xpose.msra.mxu0 %v429
    %461 = vmatprep.subr.mxu0 0.0
    %462 = vmatpush1.xpose.msra.mxu0 %v426
    %463 = vmatprep.subr.mxu0 0.0
    %464 = vmatpush2.xpose.msra.mxu0 0.0
    %465 = vmatprep.subr.mxu0 0.0
    %466 = vmatpush2.xpose.msra.mxu0 0.0
    %467 = vmatprep.subr.mxu0 0.0
    %468 = vmatpush2.xpose.msra.mxu0 0.0
    %469 = vmatprep.subr.mxu0 0.0
    %470 = vmatpush2.xpose.msra.mxu0 0.0
    %471 = vmatprep.subr.mxu0 0.0
    %472 = vmatpush2.xpose.msra.mxu0 0.0
    %473 = vmatprep.subr.mxu0 0.0
    %474 = vmatpush2.xpose.msra.mxu0 0.0
    %475 = vmatprep.subr.mxu0 0.0
    %476 = vmatpush2.xpose.msra.mxu0 0.0
    %477 = vmatprep.subr.mxu0 0.0
    %478 = vmatpush2.xpose.msra.mxu0 0.0
    %479 = vmatprep.subr.mxu0 0.0
    %480 = vmatpush2.xpose.msra.mxu0 0.0
    %481 = vmatprep.subr.mxu0 0.0
    %482 = vmatpush2.xpose.msra.mxu0 0.0
    %483 = vmatprep.subr.mxu0 0.0
    %484 = vmatpush2.xpose.msra.mxu0 0.0
    %485 = vmatprep.subr.mxu0 0.0
    %486 = vmatpush2.xpose.msra.mxu0 0.0
    %487 = vmatprep.subr.mxu0 0.0
    %488 = vmatpush2.xpose.msra.mxu0 0.0
    %489 = vmatprep.subr.mxu0 0.0
    %490 = vmatpush2.xpose.msra.mxu0 0.0
    %491 = vmatprep.subr.mxu0 0.0
    %492 = vmatpush2.xpose.msra.mxu0 0.0
    %493 = vmatprep.subr.mxu0 0.0
    %494 = vmatpush2.xpose.msra.mxu0 0.0
    %495 = vmatprep.mubr.f32.mxu0 0.0
    %496 = vmatmul.mubr.f32.gmra.mxu0 %v420
    %v497 = vpop.f32.mrf.mxu0
    %v498 = vadd.f32 0.0, %v497
    %v499 = vpop.f32.mrf.mxu0
    %500 = vmatprep.mubr.f32.mxu0 0.0
    %501 = vmatmul.mubr.f32.gmra.mxu0 %v423
    %v502 = vpop.f32.mrf.mxu0
    %v503 = vadd.f32 0.0, %v502
    %v504 = vpop.f32.mrf.mxu0
    %505 = vdwg.mxu0
    %v506 = vmin.f32 %v498, 1.0
    %v507 = vmin.f32 %v503, 1.0
    %508 = vmatprep.subr.mxu0 0.0
    %509 = vmatpush1.xpose.msra.mxu0 0.0
    %510 = vmatprep.subr.mxu0 0.0
    %511 = vmatpush1.xpose.msra.mxu0 0.0
    %512 = vmatprep.subr.mxu0 0.0
    %513 = vmatpush1.xpose.msra.mxu0 0.0
    %514 = vmatprep.subr.mxu0 0.0
    %515 = vmatpush1.xpose.msra.mxu0 0.0
    %516 = vmatprep.subr.mxu0 0.0
    %517 = vmatpush1.xpose.msra.mxu0 0.0
    %518 = vmatprep.subr.mxu0 0.0
    %519 = vmatpush1.xpose.msra.mxu0 0.0
    %520 = vmatprep.subr.mxu0 0.0
    %521 = vmatpush1.xpose.msra.mxu0 0.0
    %522 = vmatprep.subr.mxu0 0.0
    %523 = vmatpush1.xpose.msra.mxu0 0.0
    %524 = vmatprep.subr.mxu0 0.0
    %525 = vmatpush1.xpose.msra.mxu0 0.0
    %526 = vmatprep.subr.mxu0 0.0
    %527 = vmatpush1.xpose.msra.mxu0 0.0
    %528 = vmatprep.subr.mxu0 0.0
    %529 = vmatpush1.xpose.msra.mxu0 0.0
    %530 = vmatprep.subr.mxu0 0.0
    %531 = vmatpush1.xpose.msra.mxu0 0.0
    %532 = vmatprep.subr.mxu0 0.0
    %533 = vmatpush1.xpose.msra.mxu0 0.0
    %534 = vmatprep.subr.mxu0 0.0
    %535 = vmatpush1.xpose.msra.mxu0 0.0
    %536 = vmatprep.subr.mxu0 0.0
    %537 = vmatpush1.xpose.msra.mxu0 %v423
    %538 = vmatprep.subr.mxu0 0.0
    %539 = vmatpush1.xpose.msra.mxu0 %v420
    %540 = vmatprep.subr.mxu0 0.0
    %541 = vmatpush2.xpose.msra.mxu0 0.0
    %542 = vmatprep.subr.mxu0 0.0
    %543 = vmatpush2.xpose.msra.mxu0 0.0
    %544 = vmatprep.subr.mxu0 0.0
    %545 = vmatpush2.xpose.msra.mxu0 0.0
    %546 = vmatprep.subr.mxu0 0.0
    %547 = vmatpush2.xpose.msra.mxu0 0.0
    %548 = vmatprep.subr.mxu0 0.0
    %549 = vmatpush2.xpose.msra.mxu0 0.0
    %550 = vmatprep.subr.mxu0 0.0
    %551 = vmatpush2.xpose.msra.mxu0 0.0
    %552 = vmatprep.subr.mxu0 0.0
    %553 = vmatpush2.xpose.msra.mxu0 0.0
    %554 = vmatprep.subr.mxu0 0.0
    %555 = vmatpush2.xpose.msra.mxu0 0.0
    %556 = vmatprep.subr.mxu0 0.0
    %557 = vmatpush2.xpose.msra.mxu0 0.0
    %558 = vmatprep.subr.mxu0 0.0
    %559 = vmatpush2.xpose.msra.mxu0 0.0
    %560 = vmatprep.subr.mxu0 0.0
    %561 = vmatpush2.xpose.msra.mxu0 0.0
    %562 = vmatprep.subr.mxu0 0.0
    %563 = vmatpush2.xpose.msra.mxu0 0.0
    %564 = vmatprep.subr.mxu0 0.0
    %565 = vmatpush2.xpose.msra.mxu0 0.0
    %566 = vmatprep.subr.mxu0 0.0
    %567 = vmatpush2.xpose.msra.mxu0 0.0
    %568 = vmatprep.subr.mxu0 0.0
    %569 = vmatpush2.xpose.msra.mxu0 0.0
    %570 = vmatprep.subr.mxu0 0.0
    %571 = vmatpush2.xpose.msra.mxu0 0.0
    %572 = vmatprep.mubr.f32.mxu0 0.0
    %573 = vmatmul.mubr.f32.gmra.mxu0 %v426
    %v574 = vpop.f32.mrf.mxu0
    %v575 = vadd.f32 0.0, %v574
    %v576 = vpop.f32.mrf.mxu0
    %577 = vmatprep.mubr.f32.mxu0 0.0
    %578 = vmatmul.mubr.f32.gmra.mxu0 %v429
    %v579 = vpop.f32.mrf.mxu0
    %v580 = vadd.f32 0.0, %v579
    %v581 = vpop.f32.mrf.mxu0
    %582 = vdwg.mxu0
    %v583 = vmin.f32 %v575, 1.0
    %v584 = vmin.f32 %v580, 1.0
    %v585 = vld [vmem:[#allocation9] sm:$0x1]
    %v586 = vlaneseq
    %v587 = vshrl.u32 %v586, 7
    %v588 = vsub.s32 0, %v587
    %v589 = vrot.slane %v585, %v588
    %vm590 = vcmp.eq.s32.totalorder %v395, %v589
    %vm591 = vcmp.eq.s32.totalorder %v396, %v589
    %v592 = vsel %vm590, 1, 0
    %v593 = vsel %vm591, 1, 0
    %v594 = vcvt.s32.f32 %v592
    %v595 = vcvt.s32.f32 %v593
    %v596 = vld [vmem:[#allocation8] sm:$0x1]
    %v597 = vlaneseq
    %v598 = vshrl.u32 %v597, 7
    %v599 = vsub.s32 0, %v598
    %v600 = vrot.slane %v596, %v599
    %vm601 = vcmp.eq.s32.totalorder %v395, %v600
    %vm602 = vcmp.eq.s32.totalorder %v396, %v600
    %v603 = vsel %vm601, 1, 0
    %v604 = vsel %vm602, 1, 0
    %v605 = vcvt.s32.f32 %v603
    %v606 = vcvt.s32.f32 %v604
    %vm607 = vcmask 572416
    %v609 = vsel %vm607, %v594, 0
    %v612 = vsel %vm607, %v595, 0
    %v615 = vsel %vm607, %v605, 0
    %v618 = vsel %vm607, %v606, 0
    %620 = vmatprep.subr.mxu0 0.0
    %621 = vmatpush1.xpose.msra.mxu0 0.0
    %622 = vmatprep.subr.mxu0 0.0
    %623 = vmatpush1.xpose.msra.mxu0 0.0
    %624 = vmatprep.subr.mxu0 0.0
    %625 = vmatpush1.xpose.msra.mxu0 0.0
    %626 = vmatprep.subr.mxu0 0.0
    %627 = vmatpush1.xpose.msra.mxu0 0.0
    %628 = vmatprep.subr.mxu0 0.0
    %629 = vmatpush1.xpose.msra.mxu0 0.0
    %630 = vmatprep.subr.mxu0 0.0
    %631 = vmatpush1.xpose.msra.mxu0 0.0
    %632 = vmatprep.subr.mxu0 0.0
    %633 = vmatpush1.xpose.msra.mxu0 0.0
    %634 = vmatprep.subr.mxu0 0.0
    %635 = vmatpush1.xpose.msra.mxu0 0.0
    %636 = vmatprep.subr.mxu0 0.0
    %637 = vmatpush1.xpose.msra.mxu0 0.0
    %638 = vmatprep.subr.mxu0 0.0
    %639 = vmatpush1.xpose.msra.mxu0 0.0
    %640 = vmatprep.subr.mxu0 0.0
    %641 = vmatpush1.xpose.msra.mxu0 0.0
    %642 = vmatprep.subr.mxu0 0.0
    %643 = vmatpush1.xpose.msra.mxu0 0.0
    %644 = vmatprep.subr.mxu0 0.0
    %645 = vmatpush1.xpose.msra.mxu0 0.0
    %646 = vmatprep.subr.mxu0 0.0
    %647 = vmatpush1.xpose.msra.mxu0 0.0
    %648 = vmatprep.subr.mxu0 0.0
    %649 = vmatpush1.xpose.msra.mxu0 %v618
    %650 = vmatprep.subr.mxu0 0.0
    %651 = vmatpush1.xpose.msra.mxu0 %v615
    %652 = vmatprep.subr.mxu0 0.0
    %653 = vmatpush2.xpose.msra.mxu0 0.0
    %654 = vmatprep.subr.mxu0 0.0
    %655 = vmatpush2.xpose.msra.mxu0 0.0
    %656 = vmatprep.subr.mxu0 0.0
    %657 = vmatpush2.xpose.msra.mxu0 0.0
    %658 = vmatprep.subr.mxu0 0.0
    %659 = vmatpush2.xpose.msra.mxu0 0.0
    %660 = vmatprep.subr.mxu0 0.0
    %661 = vmatpush2.xpose.msra.mxu0 0.0
    %662 = vmatprep.subr.mxu0 0.0
    %663 = vmatpush2.xpose.msra.mxu0 0.0
    %664 = vmatprep.subr.mxu0 0.0
    %665 = vmatpush2.xpose.msra.mxu0 0.0
    %666 = vmatprep.subr.mxu0 0.0
    %667 = vmatpush2.xpose.msra.mxu0 0.0
    %668 = vmatprep.subr.mxu0 0.0
    %669 = vmatpush2.xpose.msra.mxu0 0.0
    %670 = vmatprep.subr.mxu0 0.0
    %671 = vmatpush2.xpose.msra.mxu0 0.0
    %672 = vmatprep.subr.mxu0 0.0
    %673 = vmatpush2.xpose.msra.mxu0 0.0
    %674 = vmatprep.subr.mxu0 0.0
    %675 = vmatpush2.xpose.msra.mxu0 0.0
    %676 = vmatprep.subr.mxu0 0.0
    %677 = vmatpush2.xpose.msra.mxu0 0.0
    %678 = vmatprep.subr.mxu0 0.0
    %679 = vmatpush2.xpose.msra.mxu0 0.0
    %680 = vmatprep.subr.mxu0 0.0
    %681 = vmatpush2.xpose.msra.mxu0 0.0
    %682 = vmatprep.subr.mxu0 0.0
    %683 = vmatpush2.xpose.msra.mxu0 0.0
    %684 = vmatprep.mubr.f32.mxu0 0.0
    %685 = vmatmul.mubr.f32.gmra.mxu0 %v609
    %v686 = vpop.f32.mrf.mxu0
    %v687 = vadd.f32 0.0, %v686
    %v688 = vpop.f32.mrf.mxu0
    %689 = vmatprep.mubr.f32.mxu0 0.0
    %690 = vmatmul.mubr.f32.gmra.mxu0 %v612
    %v691 = vpop.f32.mrf.mxu0
    %v692 = vadd.f32 0.0, %v691
    %v693 = vpop.f32.mrf.mxu0
    %694 = vdwg.mxu0
    %v695 = vmin.f32 %v687, 1.0
    %v696 = vmin.f32 %v692, 1.0
    %697 = vmatprep.subr.mxu0 0.0
    %698 = vmatpush1.xpose.msra.mxu0 0.0
    %699 = vmatprep.subr.mxu0 0.0
    %700 = vmatpush1.xpose.msra.mxu0 0.0
    %701 = vmatprep.subr.mxu0 0.0
    %702 = vmatpush1.xpose.msra.mxu0 0.0
    %703 = vmatprep.subr.mxu0 0.0
    %704 = vmatpush1.xpose.msra.mxu0 0.0
    %705 = vmatprep.subr.mxu0 0.0
    %706 = vmatpush1.xpose.msra.mxu0 0.0
    %707 = vmatprep.subr.mxu0 0.0
    %708 = vmatpush1.xpose.msra.mxu0 0.0
    %709 = vmatprep.subr.mxu0 0.0
    %710 = vmatpush1.xpose.msra.mxu0 0.0
    %711 = vmatprep.subr.mxu0 0.0
    %712 = vmatpush1.xpose.msra.mxu0 0.0
    %713 = vmatprep.subr.mxu0 0.0
    %714 = vmatpush1.xpose.msra.mxu0 0.0
    %715 = vmatprep.subr.mxu0 0.0
    %716 = vmatpush1.xpose.msra.mxu0 0.0
    %717 = vmatprep.subr.mxu0 0.0
    %718 = vmatpush1.xpose.msra.mxu0 0.0
    %719 = vmatprep.subr.mxu0 0.0
    %720 = vmatpush1.xpose.msra.mxu0 0.0
    %721 = vmatprep.subr.mxu0 0.0
    %722 = vmatpush1.xpose.msra.mxu0 0.0
    %723 = vmatprep.subr.mxu0 0.0
    %724 = vmatpush1.xpose.msra.mxu0 0.0
    %725 = vmatprep.subr.mxu0 0.0
    %726 = vmatpush1.xpose.msra.mxu0 %v612
    %727 = vmatprep.subr.mxu0 0.0
    %728 = vmatpush1.xpose.msra.mxu0 %v609
    %729 = vmatprep.subr.mxu0 0.0
    %730 = vmatpush2.xpose.msra.mxu0 0.0
    %731 = vmatprep.subr.mxu0 0.0
    %732 = vmatpush2.xpose.msra.mxu0 0.0
    %733 = vmatprep.subr.mxu0 0.0
    %734 = vmatpush2.xpose.msra.mxu0 0.0
    %735 = vmatprep.subr.mxu0 0.0
    %736 = vmatpush2.xpose.msra.mxu0 0.0
    %737 = vmatprep.subr.mxu0 0.0
    %738 = vmatpush2.xpose.msra.mxu0 0.0
    %739 = vmatprep.subr.mxu0 0.0
    %740 = vmatpush2.xpose.msra.mxu0 0.0
    %741 = vmatprep.subr.mxu0 0.0
    %742 = vmatpush2.xpose.msra.mxu0 0.0
    %743 = vmatprep.subr.mxu0 0.0
    %744 = vmatpush2.xpose.msra.mxu0 0.0
    %745 = vmatprep.subr.mxu0 0.0
    %746 = vmatpush2.xpose.msra.mxu0 0.0
    %747 = vmatprep.subr.mxu0 0.0
    %748 = vmatpush2.xpose.msra.mxu0 0.0
    %749 = vmatprep.subr.mxu0 0.0
    %750 = vmatpush2.xpose.msra.mxu0 0.0
    %751 = vmatprep.subr.mxu0 0.0
    %752 = vmatpush2.xpose.msra.mxu0 0.0
    %753 = vmatprep.subr.mxu0 0.0
    %754 = vmatpush2.xpose.msra.mxu0 0.0
    %755 = vmatprep.subr.mxu0 0.0
    %756 = vmatpush2.xpose.msra.mxu0 0.0
    %757 = vmatprep.subr.mxu0 0.0
    %758 = vmatpush2.xpose.msra.mxu0 0.0
    %759 = vmatprep.subr.mxu0 0.0
    %760 = vmatpush2.xpose.msra.mxu0 0.0
    %761 = vmatprep.mubr.f32.mxu0 0.0
    %762 = vmatmul.mubr.f32.gmra.mxu0 %v615
    %v763 = vpop.f32.mrf.mxu0
    %v764 = vadd.f32 0.0, %v763
    %v765 = vpop.f32.mrf.mxu0
    %766 = vmatprep.mubr.f32.mxu0 0.0
    %767 = vmatmul.mubr.f32.gmra.mxu0 %v618
    %v768 = vpop.f32.mrf.mxu0
    %v769 = vadd.f32 0.0, %v768
    %v770 = vpop.f32.mrf.mxu0
    %771 = vdwg.mxu0
    %v772 = vmin.f32 %v764, 1.0
    %v773 = vmin.f32 %v769, 1.0
    %v774 = vld [vmem:[#allocation12] sm:$0x1]
    %v775 = vlaneseq
    %v776 = vshrl.u32 %v775, 7
    %v777 = vsub.s32 0, %v776
    %v778 = vrot.slane %v774, %v777
    %vm779 = vcmp.eq.s32.totalorder %v395, %v778
    %vm780 = vcmp.eq.s32.totalorder %v396, %v778
    %v781 = vsel %vm779, 1, 0
    %v782 = vsel %vm780, 1, 0
    %v783 = vcvt.s32.f32 %v781
    %v784 = vcvt.s32.f32 %v782
    %v785 = vld [vmem:[#allocation11] sm:$0x1]
    %v786 = vlaneseq
    %v787 = vshrl.u32 %v786, 7
    %v788 = vsub.s32 0, %v787
    %v789 = vrot.slane %v785, %v788
    %vm790 = vcmp.eq.s32.totalorder %v395, %v789
    %vm791 = vcmp.eq.s32.totalorder %v396, %v789
    %v792 = vsel %vm790, 1, 0
    %v793 = vsel %vm791, 1, 0
    %v794 = vcvt.s32.f32 %v792
    %v795 = vcvt.s32.f32 %v793
    %vm796 = vcmask 654336
    %v798 = vsel %vm796, %v783, 0
    %v801 = vsel %vm796, %v784, 0
    %v804 = vsel %vm796, %v794, 0
    %v807 = vsel %vm796, %v795, 0
    %809 = vmatprep.subr.mxu0 0.0
    %810 = vmatpush1.xpose.msra.mxu0 0.0
    %811 = vmatprep.subr.mxu0 0.0
    %812 = vmatpush1.xpose.msra.mxu0 0.0
    %813 = vmatprep.subr.mxu0 0.0
    %814 = vmatpush1.xpose.msra.mxu0 0.0
    %815 = vmatprep.subr.mxu0 0.0
    %816 = vmatpush1.xpose.msra.mxu0 0.0
    %817 = vmatprep.subr.mxu0 0.0
    %818 = vmatpush1.xpose.msra.mxu0 0.0
    %819 = vmatprep.subr.mxu0 0.0
    %820 = vmatpush1.xpose.msra.mxu0 0.0
    %821 = vmatprep.subr.mxu0 0.0
    %822 = vmatpush1.xpose.msra.mxu0 0.0
    %823 = vmatprep.subr.mxu0 0.0
    %824 = vmatpush1.xpose.msra.mxu0 0.0
    %825 = vmatprep.subr.mxu0 0.0
    %826 = vmatpush1.xpose.msra.mxu0 0.0
    %827 = vmatprep.subr.mxu0 0.0
    %828 = vmatpush1.xpose.msra.mxu0 0.0
    %829 = vmatprep.subr.mxu0 0.0
    %830 = vmatpush1.xpose.msra.mxu0 0.0
    %831 = vmatprep.subr.mxu0 0.0
    %832 = vmatpush1.xpose.msra.mxu0 0.0
    %833 = vmatprep.subr.mxu0 0.0
    %834 = vmatpush1.xpose.msra.mxu0 0.0
    %835 = vmatprep.subr.mxu0 0.0
    %836 = vmatpush1.xpose.msra.mxu0 0.0
    %837 = vmatprep.subr.mxu0 0.0
    %838 = vmatpush1.xpose.msra.mxu0 %v807
    %839 = vmatprep.subr.mxu0 0.0
    %840 = vmatpush1.xpose.msra.mxu0 %v804
    %841 = vmatprep.subr.mxu0 0.0
    %842 = vmatpush2.xpose.msra.mxu0 0.0
    %843 = vmatprep.subr.mxu0 0.0
    %844 = vmatpush2.xpose.msra.mxu0 0.0
    %845 = vmatprep.subr.mxu0 0.0
    %846 = vmatpush2.xpose.msra.mxu0 0.0
    %847 = vmatprep.subr.mxu0 0.0
    %848 = vmatpush2.xpose.msra.mxu0 0.0
    %849 = vmatprep.subr.mxu0 0.0
    %850 = vmatpush2.xpose.msra.mxu0 0.0
    %851 = vmatprep.subr.mxu0 0.0
    %852 = vmatpush2.xpose.msra.mxu0 0.0
    %853 = vmatprep.subr.mxu0 0.0
    %854 = vmatpush2.xpose.msra.mxu0 0.0
    %855 = vmatprep.subr.mxu0 0.0
    %856 = vmatpush2.xpose.msra.mxu0 0.0
    %857 = vmatprep.subr.mxu0 0.0
    %858 = vmatpush2.xpose.msra.mxu0 0.0
    %859 = vmatprep.subr.mxu0 0.0
    %860 = vmatpush2.xpose.msra.mxu0 0.0
    %861 = vmatprep.subr.mxu0 0.0
    %862 = vmatpush2.xpose.msra.mxu0 0.0
    %863 = vmatprep.subr.mxu0 0.0
    %864 = vmatpush2.xpose.msra.mxu0 0.0
    %865 = vmatprep.subr.mxu0 0.0
    %866 = vmatpush2.xpose.msra.mxu0 0.0
    %867 = vmatprep.subr.mxu0 0.0
    %868 = vmatpush2.xpose.msra.mxu0 0.0
    %869 = vmatprep.subr.mxu0 0.0
    %870 = vmatpush2.xpose.msra.mxu0 0.0
    %871 = vmatprep.subr.mxu0 0.0
    %872 = vmatpush2.xpose.msra.mxu0 0.0
    %873 = vmatprep.mubr.f32.mxu0 0.0
    %874 = vmatmul.mubr.f32.gmra.mxu0 %v798
    %v875 = vpop.f32.mrf.mxu0
    %v876 = vadd.f32 0.0, %v875
    %v877 = vpop.f32.mrf.mxu0
    %878 = vmatprep.mubr.f32.mxu0 0.0
    %879 = vmatmul.mubr.f32.gmra.mxu0 %v801
    %v880 = vpop.f32.mrf.mxu0
    %v881 = vadd.f32 0.0, %v880
    %v882 = vpop.f32.mrf.mxu0
    %883 = vdwg.mxu0
    %v884 = vmin.f32 %v876, 1.0
    %v885 = vmin.f32 %v881, 1.0
    %v886 = vlaneseq
    %v887 = vand.u32 %v886, 127
    %vm888 = vcmp.eq.s32.totalorder %v395, %v887
    %vm889 = vcmp.eq.s32.totalorder %v396, %v887
    %v890 = vsel %vm888, 1, 0
    %v891 = vsel %vm889, 1, 0
    %v892 = vcvt.s32.f32 %v890
    %v893 = vcvt.s32.f32 %v891
    %v894 = vmax.f32 %v884, %v892
    %v895 = vmax.f32 %v885, %v893
    %v896 = vld [vmem:[%s17] sm:$0xff]
    %v897 = vld [vmem:[%s17 + $0x8] sm:$0xff]
    %v898 = vld [vmem:[%s19] sm:$0xff]
    %v899 = vld [vmem:[%s19 + $0x8] sm:$0xff]
    %v900 = vld [vmem:[%s21] sm:$0xff]
    %v901 = vld [vmem:[%s21 + $0x8] sm:$0xff]
    %v902 = vld [vmem:[%s23] sm:$0x3f]
    %v903 = vld [vmem:[#allocation14] sm:$0x1]
    %v905 = vlaneseq
    %v906 = vshrl.u32 %v905, 7
    %v907 = vsub.s32 0, %v906
    %v908 = vrot.slane %v903, %v907
    %vm910 = vcmask 48128
    %v912 = vsel %vm910, %v896, 0
    %v915 = vsel %vm910, %v897, 0
    %vm917 = vcmask 1045504
    %v919 = vsel %vm917, %v902, 0
    %921 = vmatprep.subr.mxu0 0.0
    %922 = vmatpush1.msra.mxu0 0.0
    %923 = vmatprep.subr.mxu0 0.0
    %924 = vmatpush1.msra.mxu0 0.0
    %925 = vmatprep.subr.mxu0 0.0
    %926 = vmatpush1.msra.mxu0 0.0
    %927 = vmatprep.subr.mxu0 0.0
    %928 = vmatpush1.msra.mxu0 0.0
    %929 = vmatprep.subr.mxu0 0.0
    %930 = vmatpush1.msra.mxu0 0.0
    %931 = vmatprep.subr.mxu0 0.0
    %932 = vmatpush1.msra.mxu0 0.0
    %933 = vmatprep.subr.mxu0 0.0
    %934 = vmatpush1.msra.mxu0 0.0
    %935 = vmatprep.subr.mxu0 0.0
    %936 = vmatpush1.msra.mxu0 0.0
    %937 = vmatprep.subr.mxu0 0.0
    %938 = vmatpush1.msra.mxu0 0.0
    %939 = vmatprep.subr.mxu0 0.0
    %940 = vmatpush1.msra.mxu0 0.0
    %941 = vmatprep.subr.mxu0 0.0
    %942 = vmatpush1.msra.mxu0 0.0
    %943 = vmatprep.subr.mxu0 0.0
    %944 = vmatpush1.msra.mxu0 0.0
    %945 = vmatprep.subr.mxu0 0.0
    %946 = vmatpush1.msra.mxu0 0.0
    %947 = vmatprep.subr.mxu0 0.0
    %948 = vmatpush1.msra.mxu0 0.0
    %949 = vmatprep.subr.mxu0 0.0
    %950 = vmatpush1.msra.mxu0 0.0
    %951 = vmatprep.subr.mxu0 0.0
    %952 = vmatpush1.msra.mxu0 %v919
    %953 = vmatprep.subr.mxu0 0.0
    %954 = vmatpush2.msra.mxu0 0.0
    %955 = vmatprep.subr.mxu0 0.0
    %956 = vmatpush2.msra.mxu0 0.0
    %957 = vmatprep.subr.mxu0 0.0
    %958 = vmatpush2.msra.mxu0 0.0
    %959 = vmatprep.subr.mxu0 0.0
    %960 = vmatpush2.msra.mxu0 0.0
    %961 = vmatprep.subr.mxu0 0.0
    %962 = vmatpush2.msra.mxu0 0.0
    %963 = vmatprep.subr.mxu0 0.0
    %964 = vmatpush2.msra.mxu0 0.0
    %965 = vmatprep.subr.mxu0 0.0
    %966 = vmatpush2.msra.mxu0 0.0
    %967 = vmatprep.subr.mxu0 0.0
    %968 = vmatpush2.msra.mxu0 0.0
    %969 = vmatprep.subr.mxu0 0.0
    %970 = vmatpush2.msra.mxu0 0.0
    %971 = vmatprep.subr.mxu0 0.0
    %972 = vmatpush2.msra.mxu0 0.0
    %973 = vmatprep.subr.mxu0 0.0
    %974 = vmatpush2.msra.mxu0 0.0
    %975 = vmatprep.subr.mxu0 0.0
    %976 = vmatpush2.msra.mxu0 0.0
    %977 = vmatprep.subr.mxu0 0.0
    %978 = vmatpush2.msra.mxu0 0.0
    %979 = vmatprep.subr.mxu0 0.0
    %980 = vmatpush2.msra.mxu0 0.0
    %981 = vmatprep.subr.mxu0 0.0
    %982 = vmatpush2.msra.mxu0 0.0
    %983 = vmatprep.subr.mxu0 0.0
    %984 = vmatpush2.msra.mxu0 0.0
    %985 = vmatprep.mubr.f32.mxu0 0.0
    %986 = vmatmul.mubr.f32.gmra.mxu0 %v912
    %v987 = vpop.f32.mrf.mxu0
    %v988 = vadd.f32 %v908, %v987
    %v989 = vpop.f32.mrf.mxu0
    %990 = vmatprep.mubr.f32.mxu0 0.0
    %991 = vmatmul.mubr.f32.gmra.mxu0 %v915
    %v992 = vpop.f32.mrf.mxu0
    %v993 = vadd.f32 %v908, %v992
    %v994 = vpop.f32.mrf.mxu0
    %995 = vdwg.mxu0
    %v996 = vld [vmem:[%s27] sm:$0xff]
    %v997 = vld [vmem:[%s29] sm:$0x1]
    %v999 = vlaneseq
    %v1000 = vshrl.u32 %v999, 7
    %v1001 = vsub.s32 0, %v1000
    %v1002 = vrot.slane %v997, %v1001
    %vm1004 = vcmask 64512
    %v1006 = vsel %vm1004, %v900, 0
    %v1009 = vsel %vm1004, %v901, 0
    %1011 = vmatprep.subr.mxu0 0.0
    %1012 = vmatpush1.msra.mxu0 0.0
    %1013 = vmatprep.subr.mxu0 0.0
    %1014 = vmatpush1.msra.mxu0 0.0
    %1015 = vmatprep.subr.mxu0 0.0
    %1016 = vmatpush1.msra.mxu0 0.0
    %1017 = vmatprep.subr.mxu0 0.0
    %1018 = vmatpush1.msra.mxu0 0.0
    %1019 = vmatprep.subr.mxu0 0.0
    %1020 = vmatpush1.msra.mxu0 0.0
    %1021 = vmatprep.subr.mxu0 0.0
    %1022 = vmatpush1.msra.mxu0 0.0
    %1023 = vmatprep.subr.mxu0 0.0
    %1024 = vmatpush1.msra.mxu0 0.0
    %1025 = vmatprep.subr.mxu0 0.0
    %1026 = vmatpush1.msra.mxu0 0.0
    %1027 = vmatprep.subr.mxu0 0.0
    %1028 = vmatpush1.msra.mxu0 0.0
    %1029 = vmatprep.subr.mxu0 0.0
    %1030 = vmatpush1.msra.mxu0 0.0
    %1031 = vmatprep.subr.mxu0 0.0
    %1032 = vmatpush1.msra.mxu0 0.0
    %1033 = vmatprep.subr.mxu0 0.0
    %1034 = vmatpush1.msra.mxu0 0.0
    %1035 = vmatprep.subr.mxu0 0.0
    %1036 = vmatpush1.msra.mxu0 0.0
    %1037 = vmatprep.subr.mxu0 0.0
    %1038 = vmatpush1.msra.mxu0 0.0
    %1039 = vmatprep.subr.mxu0 0.0
    %1040 = vmatpush1.msra.mxu0 0.0
    %1041 = vmatprep.subr.mxu0 0.0
    %1042 = vmatpush1.msra.mxu0 %v996
    %1043 = vmatprep.subr.mxu0 0.0
    %1044 = vmatpush2.msra.mxu0 0.0
    %1045 = vmatprep.subr.mxu0 0.0
    %1046 = vmatpush2.msra.mxu0 0.0
    %1047 = vmatprep.subr.mxu0 0.0
    %1048 = vmatpush2.msra.mxu0 0.0
    %1049 = vmatprep.subr.mxu0 0.0
    %1050 = vmatpush2.msra.mxu0 0.0
    %1051 = vmatprep.subr.mxu0 0.0
    %1052 = vmatpush2.msra.mxu0 0.0
    %1053 = vmatprep.subr.mxu0 0.0
    %1054 = vmatpush2.msra.mxu0 0.0
    %1055 = vmatprep.subr.mxu0 0.0
    %1056 = vmatpush2.msra.mxu0 0.0
    %1057 = vmatprep.subr.mxu0 0.0
    %1058 = vmatpush2.msra.mxu0 0.0
    %1059 = vmatprep.subr.mxu0 0.0
    %1060 = vmatpush2.msra.mxu0 0.0
    %1061 = vmatprep.subr.mxu0 0.0
    %1062 = vmatpush2.msra.mxu0 0.0
    %1063 = vmatprep.subr.mxu0 0.0
    %1064 = vmatpush2.msra.mxu0 0.0
    %1065 = vmatprep.subr.mxu0 0.0
    %1066 = vmatpush2.msra.mxu0 0.0
    %1067 = vmatprep.subr.mxu0 0.0
    %1068 = vmatpush2.msra.mxu0 0.0
    %1069 = vmatprep.subr.mxu0 0.0
    %1070 = vmatpush2.msra.mxu0 0.0
    %1071 = vmatprep.subr.mxu0 0.0
    %1072 = vmatpush2.msra.mxu0 0.0
    %1073 = vmatprep.subr.mxu0 0.0
    %1074 = vmatpush2.msra.mxu0 0.0
    %1075 = vmatprep.mubr.f32.mxu0 0.0
    %1076 = vmatmul.mubr.f32.gmra.mxu0 %v1006
    %v1077 = vpop.f32.mrf.mxu0
    %v1078 = vadd.f32 %v1002, %v1077
    %v1079 = vpop.f32.mrf.mxu0
    %1080 = vmatprep.mubr.f32.mxu0 0.0
    %1081 = vmatmul.mubr.f32.gmra.mxu0 %v1009
    %v1082 = vpop.f32.mrf.mxu0
    %v1083 = vadd.f32 %v1002, %v1082
    %v1084 = vpop.f32.mrf.mxu0
    %1085 = vdwg.mxu0
    %v1086 = vld [vmem:[#allocation15] sm:$0x1]
    %v1087 = vld [vmem:[#allocation17] sm:$0x1]
    %vm1088 = vcmask 261120
    %v1090 = vsel %vm1088, %v1086, 0
    %v1093 = vsel %vm1088, %v988, 0
    %v1096 = vsel %vm1088, %v993, 0
    %1098 = vmatprep.subr.mxu0 0.0
    %1099 = vmatpush1.xpose.msra.mxu0 0.0
    %1100 = vmatprep.subr.mxu0 0.0
    %1101 = vmatpush1.xpose.msra.mxu0 0.0
    %1102 = vmatprep.subr.mxu0 0.0
    %1103 = vmatpush1.xpose.msra.mxu0 0.0
    %1104 = vmatprep.subr.mxu0 0.0
    %1105 = vmatpush1.xpose.msra.mxu0 0.0
    %1106 = vmatprep.subr.mxu0 0.0
    %1107 = vmatpush1.xpose.msra.mxu0 0.0
    %1108 = vmatprep.subr.mxu0 0.0
    %1109 = vmatpush1.xpose.msra.mxu0 0.0
    %1110 = vmatprep.subr.mxu0 0.0
    %1111 = vmatpush1.xpose.msra.mxu0 0.0
    %1112 = vmatprep.subr.mxu0 0.0
    %1113 = vmatpush1.xpose.msra.mxu0 0.0
    %1114 = vmatprep.subr.mxu0 0.0
    %1115 = vmatpush1.xpose.msra.mxu0 0.0
    %1116 = vmatprep.subr.mxu0 0.0
    %1117 = vmatpush1.xpose.msra.mxu0 0.0
    %1118 = vmatprep.subr.mxu0 0.0
    %1119 = vmatpush1.xpose.msra.mxu0 0.0
    %1120 = vmatprep.subr.mxu0 0.0
    %1121 = vmatpush1.xpose.msra.mxu0 0.0
    %1122 = vmatprep.subr.mxu0 0.0
    %1123 = vmatpush1.xpose.msra.mxu0 0.0
    %1124 = vmatprep.subr.mxu0 0.0
    %1125 = vmatpush1.xpose.msra.mxu0 0.0
    %1126 = vmatprep.subr.mxu0 0.0
    %1127 = vmatpush1.xpose.msra.mxu0 %v1096
    %1128 = vmatprep.subr.mxu0 0.0
    %1129 = vmatpush1.xpose.msra.mxu0 %v1093
    %1130 = vmatprep.subr.mxu0 0.0
    %1131 = vmatpush2.xpose.msra.mxu0 0.0
    %1132 = vmatprep.subr.mxu0 0.0
    %1133 = vmatpush2.xpose.msra.mxu0 0.0
    %1134 = vmatprep.subr.mxu0 0.0
    %1135 = vmatpush2.xpose.msra.mxu0 0.0
    %1136 = vmatprep.subr.mxu0 0.0
    %1137 = vmatpush2.xpose.msra.mxu0 0.0
    %1138 = vmatprep.subr.mxu0 0.0
    %1139 = vmatpush2.xpose.msra.mxu0 0.0
    %1140 = vmatprep.subr.mxu0 0.0
    %1141 = vmatpush2.xpose.msra.mxu0 0.0
    %1142 = vmatprep.subr.mxu0 0.0
    %1143 = vmatpush2.xpose.msra.mxu0 0.0
    %1144 = vmatprep.subr.mxu0 0.0
    %1145 = vmatpush2.xpose.msra.mxu0 0.0
    %1146 = vmatprep.subr.mxu0 0.0
    %1147 = vmatpush2.xpose.msra.mxu0 0.0
    %1148 = vmatprep.subr.mxu0 0.0
    %1149 = vmatpush2.xpose.msra.mxu0 0.0
    %1150 = vmatprep.subr.mxu0 0.0
    %1151 = vmatpush2.xpose.msra.mxu0 0.0
    %1152 = vmatprep.subr.mxu0 0.0
    %1153 = vmatpush2.xpose.msra.mxu0 0.0
    %1154 = vmatprep.subr.mxu0 0.0
    %1155 = vmatpush2.xpose.msra.mxu0 0.0
    %1156 = vmatprep.subr.mxu0 0.0
    %1157 = vmatpush2.xpose.msra.mxu0 0.0
    %1158 = vmatprep.subr.mxu0 0.0
    %1159 = vmatpush2.xpose.msra.mxu0 0.0
    %1160 = vmatprep.subr.mxu0 0.0
    %1161 = vmatpush2.xpose.msra.mxu0 0.0
    %1162 = vmatprep.mubr.f32.mxu0 0.0
    %1163 = vmatmul.mubr.f32.gmra.mxu0 %v1090
    %v1164 = vpop.f32.mrf.mxu0
    %v1165 = vadd.f32 0.0, %v1164
    %v1166 = vpop.f32.mrf.mxu0
    %1167 = vdwg.mxu0
    %vm1168 = vcmp.ge.f32.partialorder %v1165, 0.0
    %v1169 = vmul.f32 %v1165, 0.2
    %v1170 = vsel %vm1168, %v1165, %v1169
    %v1171 = vsub.f32 1.0, %v506
    %v1172 = vsub.f32 1.0, %v507
    %v1173 = vmul.f32 %v1171, -1e+30
    %v1174 = vmul.f32 %v1172, -1e+30
    %v1175 = vlaneseq
    %v1176 = vshrl.u32 %v1175, 7
    %v1177 = vsub.s32 0, %v1176
    %v1178 = vrot.slane %v1170, %v1177
    %v1179 = vadd.f32 %v1178, %v1173
    %v1180 = vadd.f32 %v1178, %v1174
    %vm1181 = vcmask 130048
    %v1182 = vsel %vm1181, %v1179, -inf
    %1183 = vmax.xlane.f32.xlu0 %v1182
    %v1184 = vpop.xlane.xlu0 %1183
    %v1185 = vsel %vm1181, %v1180, -inf
    %1186 = vmax.xlane.f32.xlu0 %v1185
    %v1187 = vpop.xlane.xlu0 %1186
    %v1188 = vsub.f32 %v1178, %v1184
    %v1189 = vsub.f32 %v1178, %v1187
    %v1190 = vmin.f32 %v1188, 0.0
    %v1191 = vmin.f32 %v1189, 0.0
    %v1192 = vmul.f32 %v1190, 1.442695
    %v1193 = vpow.pop %v1192
    %v1194 = vmul.f32 %v1191, 1.442695
    %v1195 = vpow.pop %v1194
    %v1196 = vmul.f32 %v1193, %v506
    %v1197 = vmul.f32 %v1195, %v507
    %v1198 = vsel %vm1181, %v1196, 0.0
    %1199 = vadd.xlane.f32.xlu0 %v1198
    %v1200 = vpop.xlane.xlu0 %1199
    %v1201 = vsel %vm1181, %v1197, 0.0
    %1202 = vadd.xlane.f32.xlu0 %v1201
    %v1203 = vpop.xlane.xlu0 %1202
    %v1205 = vsel %vm1181, %v1196, 0
    %v1208 = vsel %vm1181, %v1197, 0
    %1210 = vmatprep.subr.mxu0 0.0
    %1211 = vmatpush1.msra.mxu0 0.0
    %1212 = vmatprep.subr.mxu0 0.0
    %1213 = vmatpush1.msra.mxu0 0.0
    %1214 = vmatprep.subr.mxu0 0.0
    %1215 = vmatpush1.msra.mxu0 0.0
    %1216 = vmatprep.subr.mxu0 0.0
    %1217 = vmatpush1.msra.mxu0 0.0
    %1218 = vmatprep.subr.mxu0 0.0
    %1219 = vmatpush1.msra.mxu0 0.0
    %1220 = vmatprep.subr.mxu0 0.0
    %1221 = vmatpush1.msra.mxu0 0.0
    %1222 = vmatprep.subr.mxu0 0.0
    %1223 = vmatpush1.msra.mxu0 0.0
    %1224 = vmatprep.subr.mxu0 0.0
    %1225 = vmatpush1.msra.mxu0 0.0
    %1226 = vmatprep.subr.mxu0 0.0
    %1227 = vmatpush1.msra.mxu0 0.0
    %1228 = vmatprep.subr.mxu0 0.0
    %1229 = vmatpush1.msra.mxu0 0.0
    %1230 = vmatprep.subr.mxu0 0.0
    %1231 = vmatpush1.msra.mxu0 0.0
    %1232 = vmatprep.subr.mxu0 0.0
    %1233 = vmatpush1.msra.mxu0 0.0
    %1234 = vmatprep.subr.mxu0 0.0
    %1235 = vmatpush1.msra.mxu0 0.0
    %1236 = vmatprep.subr.mxu0 0.0
    %1237 = vmatpush1.msra.mxu0 0.0
    %1238 = vmatprep.subr.mxu0 0.0
    %1239 = vmatpush1.msra.mxu0 %v993
    %1240 = vmatprep.subr.mxu0 0.0
    %1241 = vmatpush1.msra.mxu0 %v988
    %1242 = vmatprep.subr.mxu0 0.0
    %1243 = vmatpush2.msra.mxu0 0.0
    %1244 = vmatprep.subr.mxu0 0.0
    %1245 = vmatpush2.msra.mxu0 0.0
    %1246 = vmatprep.subr.mxu0 0.0
    %1247 = vmatpush2.msra.mxu0 0.0
    %1248 = vmatprep.subr.mxu0 0.0
    %1249 = vmatpush2.msra.mxu0 0.0
    %1250 = vmatprep.subr.mxu0 0.0
    %1251 = vmatpush2.msra.mxu0 0.0
    %1252 = vmatprep.subr.mxu0 0.0
    %1253 = vmatpush2.msra.mxu0 0.0
    %1254 = vmatprep.subr.mxu0 0.0
    %1255 = vmatpush2.msra.mxu0 0.0
    %1256 = vmatprep.subr.mxu0 0.0
    %1257 = vmatpush2.msra.mxu0 0.0
    %1258 = vmatprep.subr.mxu0 0.0
    %1259 = vmatpush2.msra.mxu0 0.0
    %1260 = vmatprep.subr.mxu0 0.0
    %1261 = vmatpush2.msra.mxu0 0.0
    %1262 = vmatprep.subr.mxu0 0.0
    %1263 = vmatpush2.msra.mxu0 0.0
    %1264 = vmatprep.subr.mxu0 0.0
    %1265 = vmatpush2.msra.mxu0 0.0
    %1266 = vmatprep.subr.mxu0 0.0
    %1267 = vmatpush2.msra.mxu0 0.0
    %1268 = vmatprep.subr.mxu0 0.0
    %1269 = vmatpush2.msra.mxu0 0.0
    %1270 = vmatprep.subr.mxu0 0.0
    %1271 = vmatpush2.msra.mxu0 0.0
    %1272 = vmatprep.subr.mxu0 0.0
    %1273 = vmatpush2.msra.mxu0 0.0
    %1274 = vmatprep.mubr.f32.mxu0 0.0
    %1275 = vmatmul.mubr.f32.gmra.mxu0 %v1205
    %v1276 = vpop.f32.mrf.mxu0
    %v1277 = vadd.f32 0.0, %v1276
    %v1278 = vpop.f32.mrf.mxu0
    %1279 = vmatprep.mubr.f32.mxu0 0.0
    %1280 = vmatmul.mubr.f32.gmra.mxu0 %v1208
    %v1281 = vpop.f32.mrf.mxu0
    %v1282 = vadd.f32 0.0, %v1281
    %v1283 = vpop.f32.mrf.mxu0
    %1284 = vdwg.mxu0
    %v1285 = vadd.f32 %v1200, 1e-16
    %v1286 = vadd.f32 %v1203, 1e-16
    %v1287 = vrcp.pop %v1285
    %v1288 = vrcp.pop %v1286
    %v1289 = vmul.f32 %v1277, %v1287
    %v1290 = vmul.f32 %v1282, %v1288
    %v1292 = vlaneseq
    %v1293 = vshrl.u32 %v1292, 7
    %v1294 = vsub.s32 0, %v1293
    %v1295 = vrot.slane %v1087, %v1294
    %v1297 = vadd.f32 %v1289, %v1295
    %v1298 = vadd.f32 %v1290, %v1295
    %v1299 = vadd.f32 %v1297, %v1078
    %v1300 = vadd.f32 %v1298, %v1083
    %v1301 = vmax.f32 %v1299, 0.0
    %v1302 = vmax.f32 %v1300, 0.0
    %v1303 = vld [vmem:[%s35] sm:$0x1f]
    %v1304 = vld [vmem:[#allocation18] sm:$0x1]
    %v1306 = vlaneseq
    %v1307 = vshrl.u32 %v1306, 7
    %v1308 = vsub.s32 0, %v1307
    %v1309 = vrot.slane %v1304, %v1308
    %vm1311 = vcmask 39936
    %v1313 = vsel %vm1311, %v898, 0
    %v1316 = vsel %vm1311, %v899, 0
    %vm1318 = vcmask 1044480
    %v1320 = vsel %vm1318, %v1303, 0
    %1322 = vmatprep.subr.mxu0 0.0
    %1323 = vmatpush1.msra.mxu0 0.0
    %1324 = vmatprep.subr.mxu0 0.0
    %1325 = vmatpush1.msra.mxu0 0.0
    %1326 = vmatprep.subr.mxu0 0.0
    %1327 = vmatpush1.msra.mxu0 0.0
    %1328 = vmatprep.subr.mxu0 0.0
    %1329 = vmatpush1.msra.mxu0 0.0
    %1330 = vmatprep.subr.mxu0 0.0
    %1331 = vmatpush1.msra.mxu0 0.0
    %1332 = vmatprep.subr.mxu0 0.0
    %1333 = vmatpush1.msra.mxu0 0.0
    %1334 = vmatprep.subr.mxu0 0.0
    %1335 = vmatpush1.msra.mxu0 0.0
    %1336 = vmatprep.subr.mxu0 0.0
    %1337 = vmatpush1.msra.mxu0 0.0
    %1338 = vmatprep.subr.mxu0 0.0
    %1339 = vmatpush1.msra.mxu0 0.0
    %1340 = vmatprep.subr.mxu0 0.0
    %1341 = vmatpush1.msra.mxu0 0.0
    %1342 = vmatprep.subr.mxu0 0.0
    %1343 = vmatpush1.msra.mxu0 0.0
    %1344 = vmatprep.subr.mxu0 0.0
    %1345 = vmatpush1.msra.mxu0 0.0
    %1346 = vmatprep.subr.mxu0 0.0
    %1347 = vmatpush1.msra.mxu0 0.0
    %1348 = vmatprep.subr.mxu0 0.0
    %1349 = vmatpush1.msra.mxu0 0.0
    %1350 = vmatprep.subr.mxu0 0.0
    %1351 = vmatpush1.msra.mxu0 0.0
    %1352 = vmatprep.subr.mxu0 0.0
    %1353 = vmatpush1.msra.mxu0 %v1320
    %1354 = vmatprep.subr.mxu0 0.0
    %1355 = vmatpush2.msra.mxu0 0.0
    %1356 = vmatprep.subr.mxu0 0.0
    %1357 = vmatpush2.msra.mxu0 0.0
    %1358 = vmatprep.subr.mxu0 0.0
    %1359 = vmatpush2.msra.mxu0 0.0
    %1360 = vmatprep.subr.mxu0 0.0
    %1361 = vmatpush2.msra.mxu0 0.0
    %1362 = vmatprep.subr.mxu0 0.0
    %1363 = vmatpush2.msra.mxu0 0.0
    %1364 = vmatprep.subr.mxu0 0.0
    %1365 = vmatpush2.msra.mxu0 0.0
    %1366 = vmatprep.subr.mxu0 0.0
    %1367 = vmatpush2.msra.mxu0 0.0
    %1368 = vmatprep.subr.mxu0 0.0
    %1369 = vmatpush2.msra.mxu0 0.0
    %1370 = vmatprep.subr.mxu0 0.0
    %1371 = vmatpush2.msra.mxu0 0.0
    %1372 = vmatprep.subr.mxu0 0.0
    %1373 = vmatpush2.msra.mxu0 0.0
    %1374 = vmatprep.subr.mxu0 0.0
    %1375 = vmatpush2.msra.mxu0 0.0
    %1376 = vmatprep.subr.mxu0 0.0
    %1377 = vmatpush2.msra.mxu0 0.0
    %1378 = vmatprep.subr.mxu0 0.0
    %1379 = vmatpush2.msra.mxu0 0.0
    %1380 = vmatprep.subr.mxu0 0.0
    %1381 = vmatpush2.msra.mxu0 0.0
    %1382 = vmatprep.subr.mxu0 0.0
    %1383 = vmatpush2.msra.mxu0 0.0
    %1384 = vmatprep.subr.mxu0 0.0
    %1385 = vmatpush2.msra.mxu0 0.0
    %1386 = vmatprep.mubr.f32.mxu0 0.0
    %1387 = vmatmul.mubr.f32.gmra.mxu0 %v1313
    %v1388 = vpop.f32.mrf.mxu0
    %v1389 = vadd.f32 %v1309, %v1388
    %v1390 = vpop.f32.mrf.mxu0
    %1391 = vmatprep.mubr.f32.mxu0 0.0
    %1392 = vmatmul.mubr.f32.gmra.mxu0 %v1316
    %v1393 = vpop.f32.mrf.mxu0
    %v1394 = vadd.f32 %v1309, %v1393
    %v1395 = vpop.f32.mrf.mxu0
    %1396 = vdwg.mxu0
    %v1397 = vld [vmem:[%s39] sm:$0xff]
    %v1398 = vld [vmem:[#allocation20] sm:$0x1]
    %v1400 = vlaneseq
    %v1401 = vshrl.u32 %v1400, 7
    %v1402 = vsub.s32 0, %v1401
    %v1403 = vrot.slane %v1398, %v1402
    %1405 = vmatprep.subr.mxu0 0.0
    %1406 = vmatpush1.msra.mxu0 0.0
    %1407 = vmatprep.subr.mxu0 0.0
    %1408 = vmatpush1.msra.mxu0 0.0
    %1409 = vmatprep.subr.mxu0 0.0
    %1410 = vmatpush1.msra.mxu0 0.0
    %1411 = vmatprep.subr.mxu0 0.0
    %1412 = vmatpush1.msra.mxu0 0.0
    %1413 = vmatprep.subr.mxu0 0.0
    %1414 = vmatpush1.msra.mxu0 0.0
    %1415 = vmatprep.subr.mxu0 0.0
    %1416 = vmatpush1.msra.mxu0 0.0
    %1417 = vmatprep.subr.mxu0 0.0
    %1418 = vmatpush1.msra.mxu0 0.0
    %1419 = vmatprep.subr.mxu0 0.0
    %1420 = vmatpush1.msra.mxu0 0.0
    %1421 = vmatprep.subr.mxu0 0.0
    %1422 = vmatpush1.msra.mxu0 0.0
    %1423 = vmatprep.subr.mxu0 0.0
    %1424 = vmatpush1.msra.mxu0 0.0
    %1425 = vmatprep.subr.mxu0 0.0
    %1426 = vmatpush1.msra.mxu0 0.0
    %1427 = vmatprep.subr.mxu0 0.0
    %1428 = vmatpush1.msra.mxu0 0.0
    %1429 = vmatprep.subr.mxu0 0.0
    %1430 = vmatpush1.msra.mxu0 0.0
    %1431 = vmatprep.subr.mxu0 0.0
    %1432 = vmatpush1.msra.mxu0 0.0
    %1433 = vmatprep.subr.mxu0 0.0
    %1434 = vmatpush1.msra.mxu0 0.0
    %1435 = vmatprep.subr.mxu0 0.0
    %1436 = vmatpush1.msra.mxu0 %v1397
    %1437 = vmatprep.subr.mxu0 0.0
    %1438 = vmatpush2.msra.mxu0 0.0
    %1439 = vmatprep.subr.mxu0 0.0
    %1440 = vmatpush2.msra.mxu0 0.0
    %1441 = vmatprep.subr.mxu0 0.0
    %1442 = vmatpush2.msra.mxu0 0.0
    %1443 = vmatprep.subr.mxu0 0.0
    %1444 = vmatpush2.msra.mxu0 0.0
    %1445 = vmatprep.subr.mxu0 0.0
    %1446 = vmatpush2.msra.mxu0 0.0
    %1447 = vmatprep.subr.mxu0 0.0
    %1448 = vmatpush2.msra.mxu0 0.0
    %1449 = vmatprep.subr.mxu0 0.0
    %1450 = vmatpush2.msra.mxu0 0.0
    %1451 = vmatprep.subr.mxu0 0.0
    %1452 = vmatpush2.msra.mxu0 0.0
    %1453 = vmatprep.subr.mxu0 0.0
    %1454 = vmatpush2.msra.mxu0 0.0
    %1455 = vmatprep.subr.mxu0 0.0
    %1456 = vmatpush2.msra.mxu0 0.0
    %1457 = vmatprep.subr.mxu0 0.0
    %1458 = vmatpush2.msra.mxu0 0.0
    %1459 = vmatprep.subr.mxu0 0.0
    %1460 = vmatpush2.msra.mxu0 0.0
    %1461 = vmatprep.subr.mxu0 0.0
    %1462 = vmatpush2.msra.mxu0 0.0
    %1463 = vmatprep.subr.mxu0 0.0
    %1464 = vmatpush2.msra.mxu0 0.0
    %1465 = vmatprep.subr.mxu0 0.0
    %1466 = vmatpush2.msra.mxu0 0.0
    %1467 = vmatprep.subr.mxu0 0.0
    %1468 = vmatpush2.msra.mxu0 0.0
    %1469 = vmatprep.mubr.f32.mxu0 0.0
    %1470 = vmatmul.mubr.f32.gmra.mxu0 %v1006
    %v1471 = vpop.f32.mrf.mxu0
    %v1472 = vadd.f32 %v1403, %v1471
    %v1473 = vpop.f32.mrf.mxu0
    %1474 = vmatprep.mubr.f32.mxu0 0.0
    %1475 = vmatmul.mubr.f32.gmra.mxu0 %v1009
    %v1476 = vpop.f32.mrf.mxu0
    %v1477 = vadd.f32 %v1403, %v1476
    %v1478 = vpop.f32.mrf.mxu0
    %1479 = vdwg.mxu0
    %v1480 = vld [vmem:[#allocation21] sm:$0x1]
    %v1481 = vld [vmem:[#allocation23] sm:$0x1]
    %v1483 = vsel %vm1088, %v1480, 0
    %v1486 = vsel %vm1088, %v1389, 0
    %v1489 = vsel %vm1088, %v1394, 0
    %1491 = vmatprep.subr.mxu0 0.0
    %1492 = vmatpush1.xpose.msra.mxu0 0.0
    %1493 = vmatprep.subr.mxu0 0.0
    %1494 = vmatpush1.xpose.msra.mxu0 0.0
    %1495 = vmatprep.subr.mxu0 0.0
    %1496 = vmatpush1.xpose.msra.mxu0 0.0
    %1497 = vmatprep.subr.mxu0 0.0
    %1498 = vmatpush1.xpose.msra.mxu0 0.0
    %1499 = vmatprep.subr.mxu0 0.0
    %1500 = vmatpush1.xpose.msra.mxu0 0.0
    %1501 = vmatprep.subr.mxu0 0.0
    %1502 = vmatpush1.xpose.msra.mxu0 0.0
    %1503 = vmatprep.subr.mxu0 0.0
    %1504 = vmatpush1.xpose.msra.mxu0 0.0
    %1505 = vmatprep.subr.mxu0 0.0
    %1506 = vmatpush1.xpose.msra.mxu0 0.0
    %1507 = vmatprep.subr.mxu0 0.0
    %1508 = vmatpush1.xpose.msra.mxu0 0.0
    %1509 = vmatprep.subr.mxu0 0.0
    %1510 = vmatpush1.xpose.msra.mxu0 0.0
    %1511 = vmatprep.subr.mxu0 0.0
    %1512 = vmatpush1.xpose.msra.mxu0 0.0
    %1513 = vmatprep.subr.mxu0 0.0
    %1514 = vmatpush1.xpose.msra.mxu0 0.0
    %1515 = vmatprep.subr.mxu0 0.0
    %1516 = vmatpush1.xpose.msra.mxu0 0.0
    %1517 = vmatprep.subr.mxu0 0.0
    %1518 = vmatpush1.xpose.msra.mxu0 0.0
    %1519 = vmatprep.subr.mxu0 0.0
    %1520 = vmatpush1.xpose.msra.mxu0 %v1489
    %1521 = vmatprep.subr.mxu0 0.0
    %1522 = vmatpush1.xpose.msra.mxu0 %v1486
    %1523 = vmatprep.subr.mxu0 0.0
    %1524 = vmatpush2.xpose.msra.mxu0 0.0
    %1525 = vmatprep.subr.mxu0 0.0
    %1526 = vmatpush2.xpose.msra.mxu0 0.0
    %1527 = vmatprep.subr.mxu0 0.0
    %1528 = vmatpush2.xpose.msra.mxu0 0.0
    %1529 = vmatprep.subr.mxu0 0.0
    %1530 = vmatpush2.xpose.msra.mxu0 0.0
    %1531 = vmatprep.subr.mxu0 0.0
    %1532 = vmatpush2.xpose.msra.mxu0 0.0
    %1533 = vmatprep.subr.mxu0 0.0
    %1534 = vmatpush2.xpose.msra.mxu0 0.0
    %1535 = vmatprep.subr.mxu0 0.0
    %1536 = vmatpush2.xpose.msra.mxu0 0.0
    %1537 = vmatprep.subr.mxu0 0.0
    %1538 = vmatpush2.xpose.msra.mxu0 0.0
    %1539 = vmatprep.subr.mxu0 0.0
    %1540 = vmatpush2.xpose.msra.mxu0 0.0
    %1541 = vmatprep.subr.mxu0 0.0
    %1542 = vmatpush2.xpose.msra.mxu0 0.0
    %1543 = vmatprep.subr.mxu0 0.0
    %1544 = vmatpush2.xpose.msra.mxu0 0.0
    %1545 = vmatprep.subr.mxu0 0.0
    %1546 = vmatpush2.xpose.msra.mxu0 0.0
    %1547 = vmatprep.subr.mxu0 0.0
    %1548 = vmatpush2.xpose.msra.mxu0 0.0
    %1549 = vmatprep.subr.mxu0 0.0
    %1550 = vmatpush2.xpose.msra.mxu0 0.0
    %1551 = vmatprep.subr.mxu0 0.0
    %1552 = vmatpush2.xpose.msra.mxu0 0.0
    %1553 = vmatprep.subr.mxu0 0.0
    %1554 = vmatpush2.xpose.msra.mxu0 0.0
    %1555 = vmatprep.mubr.f32.mxu0 0.0
    %1556 = vmatmul.mubr.f32.gmra.mxu0 %v1483
    %v1557 = vpop.f32.mrf.mxu0
    %v1558 = vadd.f32 0.0, %v1557
    %v1559 = vpop.f32.mrf.mxu0
    %1560 = vdwg.mxu0
    %vm1561 = vcmp.ge.f32.partialorder %v1558, 0.0
    %v1562 = vmul.f32 %v1558, 0.2
    %v1563 = vsel %vm1561, %v1558, %v1562
    %v1564 = vsub.f32 1.0, %v695
    %v1565 = vsub.f32 1.0, %v696
    %v1566 = vmul.f32 %v1564, -1e+30
    %v1567 = vmul.f32 %v1565, -1e+30
    %v1568 = vlaneseq
    %v1569 = vshrl.u32 %v1568, 7
    %v1570 = vsub.s32 0, %v1569
    %v1571 = vrot.slane %v1563, %v1570
    %v1572 = vadd.f32 %v1571, %v1566
    %v1573 = vadd.f32 %v1571, %v1567
    %v1574 = vsel %vm1181, %v1572, -inf
    %1575 = vmax.xlane.f32.xlu0 %v1574
    %v1576 = vpop.xlane.xlu0 %1575
    %v1577 = vsel %vm1181, %v1573, -inf
    %1578 = vmax.xlane.f32.xlu0 %v1577
    %v1579 = vpop.xlane.xlu0 %1578
    %v1580 = vsub.f32 %v1571, %v1576
    %v1581 = vsub.f32 %v1571, %v1579
    %v1582 = vmin.f32 %v1580, 0.0
    %v1583 = vmin.f32 %v1581, 0.0
    %v1584 = vmul.f32 %v1582, 1.442695
    %v1585 = vpow.pop %v1584
    %v1586 = vmul.f32 %v1583, 1.442695
    %v1587 = vpow.pop %v1586
    %v1588 = vmul.f32 %v1585, %v695
    %v1589 = vmul.f32 %v1587, %v696
    %v1590 = vsel %vm1181, %v1588, 0.0
    %1591 = vadd.xlane.f32.xlu0 %v1590
    %v1592 = vpop.xlane.xlu0 %1591
    %v1593 = vsel %vm1181, %v1589, 0.0
    %1594 = vadd.xlane.f32.xlu0 %v1593
    %v1595 = vpop.xlane.xlu0 %1594
    %v1597 = vsel %vm1181, %v1588, 0
    %v1600 = vsel %vm1181, %v1589, 0
    %1602 = vmatprep.subr.mxu0 0.0
    %1603 = vmatpush1.msra.mxu0 0.0
    %1604 = vmatprep.subr.mxu0 0.0
    %1605 = vmatpush1.msra.mxu0 0.0
    %1606 = vmatprep.subr.mxu0 0.0
    %1607 = vmatpush1.msra.mxu0 0.0
    %1608 = vmatprep.subr.mxu0 0.0
    %1609 = vmatpush1.msra.mxu0 0.0
    %1610 = vmatprep.subr.mxu0 0.0
    %1611 = vmatpush1.msra.mxu0 0.0
    %1612 = vmatprep.subr.mxu0 0.0
    %1613 = vmatpush1.msra.mxu0 0.0
    %1614 = vmatprep.subr.mxu0 0.0
    %1615 = vmatpush1.msra.mxu0 0.0
    %1616 = vmatprep.subr.mxu0 0.0
    %1617 = vmatpush1.msra.mxu0 0.0
    %1618 = vmatprep.subr.mxu0 0.0
    %1619 = vmatpush1.msra.mxu0 0.0
    %1620 = vmatprep.subr.mxu0 0.0
    %1621 = vmatpush1.msra.mxu0 0.0
    %1622 = vmatprep.subr.mxu0 0.0
    %1623 = vmatpush1.msra.mxu0 0.0
    %1624 = vmatprep.subr.mxu0 0.0
    %1625 = vmatpush1.msra.mxu0 0.0
    %1626 = vmatprep.subr.mxu0 0.0
    %1627 = vmatpush1.msra.mxu0 0.0
    %1628 = vmatprep.subr.mxu0 0.0
    %1629 = vmatpush1.msra.mxu0 0.0
    %1630 = vmatprep.subr.mxu0 0.0
    %1631 = vmatpush1.msra.mxu0 %v1394
    %1632 = vmatprep.subr.mxu0 0.0
    %1633 = vmatpush1.msra.mxu0 %v1389
    %1634 = vmatprep.subr.mxu0 0.0
    %1635 = vmatpush2.msra.mxu0 0.0
    %1636 = vmatprep.subr.mxu0 0.0
    %1637 = vmatpush2.msra.mxu0 0.0
    %1638 = vmatprep.subr.mxu0 0.0
    %1639 = vmatpush2.msra.mxu0 0.0
    %1640 = vmatprep.subr.mxu0 0.0
    %1641 = vmatpush2.msra.mxu0 0.0
    %1642 = vmatprep.subr.mxu0 0.0
    %1643 = vmatpush2.msra.mxu0 0.0
    %1644 = vmatprep.subr.mxu0 0.0
    %1645 = vmatpush2.msra.mxu0 0.0
    %1646 = vmatprep.subr.mxu0 0.0
    %1647 = vmatpush2.msra.mxu0 0.0
    %1648 = vmatprep.subr.mxu0 0.0
    %1649 = vmatpush2.msra.mxu0 0.0
    %1650 = vmatprep.subr.mxu0 0.0
    %1651 = vmatpush2.msra.mxu0 0.0
    %1652 = vmatprep.subr.mxu0 0.0
    %1653 = vmatpush2.msra.mxu0 0.0
    %1654 = vmatprep.subr.mxu0 0.0
    %1655 = vmatpush2.msra.mxu0 0.0
    %1656 = vmatprep.subr.mxu0 0.0
    %1657 = vmatpush2.msra.mxu0 0.0
    %1658 = vmatprep.subr.mxu0 0.0
    %1659 = vmatpush2.msra.mxu0 0.0
    %1660 = vmatprep.subr.mxu0 0.0
    %1661 = vmatpush2.msra.mxu0 0.0
    %1662 = vmatprep.subr.mxu0 0.0
    %1663 = vmatpush2.msra.mxu0 0.0
    %1664 = vmatprep.subr.mxu0 0.0
    %1665 = vmatpush2.msra.mxu0 0.0
    %1666 = vmatprep.mubr.f32.mxu0 0.0
    %1667 = vmatmul.mubr.f32.gmra.mxu0 %v1597
    %v1668 = vpop.f32.mrf.mxu0
    %v1669 = vadd.f32 0.0, %v1668
    %v1670 = vpop.f32.mrf.mxu0
    %1671 = vmatprep.mubr.f32.mxu0 0.0
    %1672 = vmatmul.mubr.f32.gmra.mxu0 %v1600
    %v1673 = vpop.f32.mrf.mxu0
    %v1674 = vadd.f32 0.0, %v1673
    %v1675 = vpop.f32.mrf.mxu0
    %1676 = vdwg.mxu0
    %v1677 = vadd.f32 %v1592, 1e-16
    %v1678 = vadd.f32 %v1595, 1e-16
    %v1679 = vrcp.pop %v1677
    %v1680 = vrcp.pop %v1678
    %v1681 = vmul.f32 %v1669, %v1679
    %v1682 = vmul.f32 %v1674, %v1680
    %v1684 = vlaneseq
    %v1685 = vshrl.u32 %v1684, 7
    %v1686 = vsub.s32 0, %v1685
    %v1687 = vrot.slane %v1481, %v1686
    %v1689 = vadd.f32 %v1681, %v1687
    %v1690 = vadd.f32 %v1682, %v1687
    %v1691 = vadd.f32 %v1689, %v1472
    %v1692 = vadd.f32 %v1690, %v1477
    %v1693 = vmax.f32 %v1691, 0.0
    %v1694 = vmax.f32 %v1692, 0.0
    %v1695 = vld [vmem:[%s47] sm:$0xff]
    %v1696 = vld [vmem:[%s47 + $0x8] sm:$0xff]
    %v1697 = vld [vmem:[%s47 + $0x10] sm:$0xff]
    %v1698 = vld [vmem:[%s47 + $0x18] sm:$0xff]
    %v1699 = vld [vmem:[%s47 + $0x20] sm:$0xff]
    %v1700 = vld [vmem:[%s47 + $0x28] sm:$0xff]
    %v1701 = vld [vmem:[%s47 + $0x30] sm:$0xff]
    %v1702 = vld [vmem:[%s47 + $0x38] sm:$0xff]
    %v1704 = vsel %vm1088, %v1693, 0
    %v1707 = vsel %vm1088, %v1694, 0
    %1709 = vmatprep.subr.mxu0 0.0
    %1710 = vmatpush1.msra.mxu0 0.0
    %1711 = vmatprep.subr.mxu0 0.0
    %1712 = vmatpush1.msra.mxu0 0.0
    %1713 = vmatprep.subr.mxu0 0.0
    %1714 = vmatpush1.msra.mxu0 0.0
    %1715 = vmatprep.subr.mxu0 0.0
    %1716 = vmatpush1.msra.mxu0 0.0
    %1717 = vmatprep.subr.mxu0 0.0
    %1718 = vmatpush1.msra.mxu0 0.0
    %1719 = vmatprep.subr.mxu0 0.0
    %1720 = vmatpush1.msra.mxu0 0.0
    %1721 = vmatprep.subr.mxu0 0.0
    %1722 = vmatpush1.msra.mxu0 0.0
    %1723 = vmatprep.subr.mxu0 0.0
    %1724 = vmatpush1.msra.mxu0 0.0
    %1725 = vmatprep.subr.mxu0 0.0
    %1726 = vmatpush1.msra.mxu0 0.0
    %1727 = vmatprep.subr.mxu0 0.0
    %1728 = vmatpush1.msra.mxu0 0.0
    %1729 = vmatprep.subr.mxu0 0.0
    %1730 = vmatpush1.msra.mxu0 0.0
    %1731 = vmatprep.subr.mxu0 0.0
    %1732 = vmatpush1.msra.mxu0 0.0
    %1733 = vmatprep.subr.mxu0 0.0
    %1734 = vmatpush1.msra.mxu0 %v1702
    %1735 = vmatprep.subr.mxu0 0.0
    %1736 = vmatpush1.msra.mxu0 %v1701
    %1737 = vmatprep.subr.mxu0 0.0
    %1738 = vmatpush1.msra.mxu0 %v1700
    %1739 = vmatprep.subr.mxu0 0.0
    %1740 = vmatpush1.msra.mxu0 %v1699
    %1741 = vmatprep.subr.mxu0 0.0
    %1742 = vmatpush2.msra.mxu0 0.0
    %1743 = vmatprep.subr.mxu0 0.0
    %1744 = vmatpush2.msra.mxu0 0.0
    %1745 = vmatprep.subr.mxu0 0.0
    %1746 = vmatpush2.msra.mxu0 0.0
    %1747 = vmatprep.subr.mxu0 0.0
    %1748 = vmatpush2.msra.mxu0 0.0
    %1749 = vmatprep.subr.mxu0 0.0
    %1750 = vmatpush2.msra.mxu0 0.0
    %1751 = vmatprep.subr.mxu0 0.0
    %1752 = vmatpush2.msra.mxu0 0.0
    %1753 = vmatprep.subr.mxu0 0.0
    %1754 = vmatpush2.msra.mxu0 0.0
    %1755 = vmatprep.subr.mxu0 0.0
    %1756 = vmatpush2.msra.mxu0 0.0
    %1757 = vmatprep.subr.mxu0 0.0
    %1758 = vmatpush2.msra.mxu0 0.0
    %1759 = vmatprep.subr.mxu0 0.0
    %1760 = vmatpush2.msra.mxu0 0.0
    %1761 = vmatprep.subr.mxu0 0.0
    %1762 = vmatpush2.msra.mxu0 0.0
    %1763 = vmatprep.subr.mxu0 0.0
    %1764 = vmatpush2.msra.mxu0 0.0
    %1765 = vmatprep.subr.mxu0 0.0
    %1766 = vmatpush2.msra.mxu0 0.0
    %1767 = vmatprep.subr.mxu0 0.0
    %1768 = vmatpush2.msra.mxu0 0.0
    %1769 = vmatprep.subr.mxu0 0.0
    %1770 = vmatpush2.msra.mxu0 0.0
    %1771 = vmatprep.subr.mxu0 0.0
    %1772 = vmatpush2.msra.mxu0 0.0
    %1773 = vmatprep.mubr.f32.mxu0 0.0
    %1774 = vmatmul.mubr.f32.gmra.mxu0 %v1704
    %v1775 = vpop.f32.mrf.mxu0
    %v1776 = vadd.f32 0.0, %v1775
    %v1777 = vpop.f32.mrf.mxu0
    %1778 = vmatprep.mubr.f32.mxu0 0.0
    %1779 = vmatmul.mubr.f32.gmra.mxu0 %v1707
    %v1780 = vpop.f32.mrf.mxu0
    %v1781 = vadd.f32 0.0, %v1780
    %v1782 = vpop.f32.mrf.mxu0
    %1783 = vdwg.mxu0
    %v1785 = vsel %vm1088, %v1301, 0
    %v1788 = vsel %vm1088, %v1302, 0
    %1790 = vmatprep.subr.mxu0 0.0
    %1791 = vmatpush1.msra.mxu0 0.0
    %1792 = vmatprep.subr.mxu0 0.0
    %1793 = vmatpush1.msra.mxu0 0.0
    %1794 = vmatprep.subr.mxu0 0.0
    %1795 = vmatpush1.msra.mxu0 0.0
    %1796 = vmatprep.subr.mxu0 0.0
    %1797 = vmatpush1.msra.mxu0 0.0
    %1798 = vmatprep.subr.mxu0 0.0
    %1799 = vmatpush1.msra.mxu0 0.0
    %1800 = vmatprep.subr.mxu0 0.0
    %1801 = vmatpush1.msra.mxu0 0.0
    %1802 = vmatprep.subr.mxu0 0.0
    %1803 = vmatpush1.msra.mxu0 0.0
    %1804 = vmatprep.subr.mxu0 0.0
    %1805 = vmatpush1.msra.mxu0 0.0
    %1806 = vmatprep.subr.mxu0 0.0
    %1807 = vmatpush1.msra.mxu0 0.0
    %1808 = vmatprep.subr.mxu0 0.0
    %1809 = vmatpush1.msra.mxu0 0.0
    %1810 = vmatprep.subr.mxu0 0.0
    %1811 = vmatpush1.msra.mxu0 0.0
    %1812 = vmatprep.subr.mxu0 0.0
    %1813 = vmatpush1.msra.mxu0 0.0
    %1814 = vmatprep.subr.mxu0 0.0
    %1815 = vmatpush1.msra.mxu0 %v1698
    %1816 = vmatprep.subr.mxu0 0.0
    %1817 = vmatpush1.msra.mxu0 %v1697
    %1818 = vmatprep.subr.mxu0 0.0
    %1819 = vmatpush1.msra.mxu0 %v1696
    %1820 = vmatprep.subr.mxu0 0.0
    %1821 = vmatpush1.msra.mxu0 %v1695
    %1822 = vmatprep.subr.mxu0 0.0
    %1823 = vmatpush2.msra.mxu0 0.0
    %1824 = vmatprep.subr.mxu0 0.0
    %1825 = vmatpush2.msra.mxu0 0.0
    %1826 = vmatprep.subr.mxu0 0.0
    %1827 = vmatpush2.msra.mxu0 0.0
    %1828 = vmatprep.subr.mxu0 0.0
    %1829 = vmatpush2.msra.mxu0 0.0
    %1830 = vmatprep.subr.mxu0 0.0
    %1831 = vmatpush2.msra.mxu0 0.0
    %1832 = vmatprep.subr.mxu0 0.0
    %1833 = vmatpush2.msra.mxu0 0.0
    %1834 = vmatprep.subr.mxu0 0.0
    %1835 = vmatpush2.msra.mxu0 0.0
    %1836 = vmatprep.subr.mxu0 0.0
    %1837 = vmatpush2.msra.mxu0 0.0
    %1838 = vmatprep.subr.mxu0 0.0
    %1839 = vmatpush2.msra.mxu0 0.0
    %1840 = vmatprep.subr.mxu0 0.0
    %1841 = vmatpush2.msra.mxu0 0.0
    %1842 = vmatprep.subr.mxu0 0.0
    %1843 = vmatpush2.msra.mxu0 0.0
    %1844 = vmatprep.subr.mxu0 0.0
    %1845 = vmatpush2.msra.mxu0 0.0
    %1846 = vmatprep.subr.mxu0 0.0
    %1847 = vmatpush2.msra.mxu0 0.0
    %1848 = vmatprep.subr.mxu0 0.0
    %1849 = vmatpush2.msra.mxu0 0.0
    %1850 = vmatprep.subr.mxu0 0.0
    %1851 = vmatpush2.msra.mxu0 0.0
    %1852 = vmatprep.subr.mxu0 0.0
    %1853 = vmatpush2.msra.mxu0 0.0
    %1854 = vmatprep.mubr.f32.mxu0 0.0
    %1855 = vmatmul.mubr.f32.gmra.mxu0 %v1785
    %v1856 = vpop.f32.mrf.mxu0
    %v1857 = vadd.f32 %v1776, %v1856
    %v1858 = vpop.f32.mrf.mxu0
    %1859 = vmatprep.mubr.f32.mxu0 0.0
    %1860 = vmatmul.mubr.f32.gmra.mxu0 %v1788
    %v1861 = vpop.f32.mrf.mxu0
    %v1862 = vadd.f32 %v1781, %v1861
    %v1863 = vpop.f32.mrf.mxu0
    %1864 = vdwg.mxu0
    %v1865 = vld [vmem:[#allocation27] sm:$0x1]
    %v1866 = vsub.f32 1.0, %v894
    %v1867 = vsub.f32 1.0, %v895
    %v1868 = vmul.f32 %v1866, -1e+30
    %v1869 = vmul.f32 %v1867, -1e+30
    %v1870 = vld [vmem:[#allocation24] sm:$0x1]
    %v1871 = vld [vmem:[#allocation26] sm:$0x1]
    %v1873 = vsel %vm1088, %v1870, 0
    %v1876 = vsel %vm1088, %v1857, 0
    %v1879 = vsel %vm1088, %v1862, 0
    %1881 = vmatprep.subr.mxu0 0.0
    %1882 = vmatpush1.xpose.msra.mxu0 0.0
    %1883 = vmatprep.subr.mxu0 0.0
    %1884 = vmatpush1.xpose.msra.mxu0 0.0
    %1885 = vmatprep.subr.mxu0 0.0
    %1886 = vmatpush1.xpose.msra.mxu0 0.0
    %1887 = vmatprep.subr.mxu0 0.0
    %1888 = vmatpush1.xpose.msra.mxu0 0.0
    %1889 = vmatprep.subr.mxu0 0.0
    %1890 = vmatpush1.xpose.msra.mxu0 0.0
    %1891 = vmatprep.subr.mxu0 0.0
    %1892 = vmatpush1.xpose.msra.mxu0 0.0
    %1893 = vmatprep.subr.mxu0 0.0
    %1894 = vmatpush1.xpose.msra.mxu0 0.0
    %1895 = vmatprep.subr.mxu0 0.0
    %1896 = vmatpush1.xpose.msra.mxu0 0.0
    %1897 = vmatprep.subr.mxu0 0.0
    %1898 = vmatpush1.xpose.msra.mxu0 0.0
    %1899 = vmatprep.subr.mxu0 0.0
    %1900 = vmatpush1.xpose.msra.mxu0 0.0
    %1901 = vmatprep.subr.mxu0 0.0
    %1902 = vmatpush1.xpose.msra.mxu0 0.0
    %1903 = vmatprep.subr.mxu0 0.0
    %1904 = vmatpush1.xpose.msra.mxu0 0.0
    %1905 = vmatprep.subr.mxu0 0.0
    %1906 = vmatpush1.xpose.msra.mxu0 0.0
    %1907 = vmatprep.subr.mxu0 0.0
    %1908 = vmatpush1.xpose.msra.mxu0 0.0
    %1909 = vmatprep.subr.mxu0 0.0
    %1910 = vmatpush1.xpose.msra.mxu0 %v1879
    %1911 = vmatprep.subr.mxu0 0.0
    %1912 = vmatpush1.xpose.msra.mxu0 %v1876
    %1913 = vmatprep.subr.mxu0 0.0
    %1914 = vmatpush2.xpose.msra.mxu0 0.0
    %1915 = vmatprep.subr.mxu0 0.0
    %1916 = vmatpush2.xpose.msra.mxu0 0.0
    %1917 = vmatprep.subr.mxu0 0.0
    %1918 = vmatpush2.xpose.msra.mxu0 0.0
    %1919 = vmatprep.subr.mxu0 0.0
    %1920 = vmatpush2.xpose.msra.mxu0 0.0
    %1921 = vmatprep.subr.mxu0 0.0
    %1922 = vmatpush2.xpose.msra.mxu0 0.0
    %1923 = vmatprep.subr.mxu0 0.0
    %1924 = vmatpush2.xpose.msra.mxu0 0.0
    %1925 = vmatprep.subr.mxu0 0.0
    %1926 = vmatpush2.xpose.msra.mxu0 0.0
    %1927 = vmatprep.subr.mxu0 0.0
    %1928 = vmatpush2.xpose.msra.mxu0 0.0
    %1929 = vmatprep.subr.mxu0 0.0
    %1930 = vmatpush2.xpose.msra.mxu0 0.0
    %1931 = vmatprep.subr.mxu0 0.0
    %1932 = vmatpush2.xpose.msra.mxu0 0.0
    %1933 = vmatprep.subr.mxu0 0.0
    %1934 = vmatpush2.xpose.msra.mxu0 0.0
    %1935 = vmatprep.subr.mxu0 0.0
    %1936 = vmatpush2.xpose.msra.mxu0 0.0
    %1937 = vmatprep.subr.mxu0 0.0
    %1938 = vmatpush2.xpose.msra.mxu0 0.0
    %1939 = vmatprep.subr.mxu0 0.0
    %1940 = vmatpush2.xpose.msra.mxu0 0.0
    %1941 = vmatprep.subr.mxu0 0.0
    %1942 = vmatpush2.xpose.msra.mxu0 0.0
    %1943 = vmatprep.subr.mxu0 0.0
    %1944 = vmatpush2.xpose.msra.mxu0 0.0
    %1945 = vmatprep.mubr.f32.mxu0 0.0
    %1946 = vmatmul.mubr.f32.gmra.mxu0 %v1873
    %v1947 = vpop.f32.mrf.mxu0
    %v1948 = vadd.f32 0.0, %v1947
    %v1949 = vpop.f32.mrf.mxu0
    %1950 = vdwg.mxu0
    %v1951 = vlaneseq
    %v1952 = vshrl.u32 %v1951, 7
    %v1953 = vsub.s32 0, %v1952
    %v1954 = vrot.slane %v1871, %v1953
    %v1955 = vmul.f32 %v1857, %v1954
    %v1956 = vmul.f32 %v1862, %v1954
    %v1957 = vsel %vm1088, %v1955, 0.0
    %1958 = vadd.xlane.f32.xlu0 %v1957
    %v1959 = vpop.xlane.xlu0 %1958
    %v1960 = vsel %vm1088, %v1956, 0.0
    %1961 = vadd.xlane.f32.xlu0 %v1960
    %v1962 = vpop.xlane.xlu0 %1961
    %v1963 = vlaneseq
    %v1964 = vshrl.u32 %v1963, 7
    %v1965 = vsub.s32 0, %v1964
    %v1966 = vrot.slane %v1948, %v1965
    %v1967 = vadd.f32 %v1959, %v1966
    %v1968 = vadd.f32 %v1962, %v1966
    %vm1969 = vcmp.ge.f32.partialorder %v1967, 0.0
    %vm1970 = vcmp.ge.f32.partialorder %v1968, 0.0
    %v1971 = vmul.f32 %v1967, 0.2
    %v1972 = vmul.f32 %v1968, 0.2
    %v1973 = vsel %vm1969, %v1967, %v1971
    %v1974 = vsel %vm1970, %v1968, %v1972
    %v1975 = vadd.f32 %v1973, %v1868
    %v1976 = vadd.f32 %v1974, %v1869
    %v1977 = vsel %vm1181, %v1975, -inf
    %1978 = vmax.xlane.f32.xlu0 %v1977
    %v1979 = vpop.xlane.xlu0 %1978
    %v1980 = vsel %vm1181, %v1976, -inf
    %1981 = vmax.xlane.f32.xlu0 %v1980
    %v1982 = vpop.xlane.xlu0 %1981
    %v1983 = vsub.f32 %v1973, %v1979
    %v1984 = vsub.f32 %v1974, %v1982
    %v1985 = vmin.f32 %v1983, 0.0
    %v1986 = vmin.f32 %v1984, 0.0
    %v1987 = vmul.f32 %v1985, 1.442695
    %v1988 = vpow.pop %v1987
    %v1989 = vmul.f32 %v1986, 1.442695
    %v1990 = vpow.pop %v1989
    %v1991 = vmul.f32 %v1988, %v894
    %v1992 = vmul.f32 %v1990, %v895
    %v1993 = vsel %vm1181, %v1991, 0.0
    %1994 = vadd.xlane.f32.xlu0 %v1993
    %v1995 = vpop.xlane.xlu0 %1994
    %v1996 = vsel %vm1181, %v1992, 0.0
    %1997 = vadd.xlane.f32.xlu0 %v1996
    %v1998 = vpop.xlane.xlu0 %1997
    %v2000 = vsel %vm1181, %v1991, 0
    %v2003 = vsel %vm1181, %v1992, 0
    %2005 = vmatprep.subr.mxu0 0.0
    %2006 = vmatpush1.msra.mxu0 0.0
    %2007 = vmatprep.subr.mxu0 0.0
    %2008 = vmatpush1.msra.mxu0 0.0
    %2009 = vmatprep.subr.mxu0 0.0
    %2010 = vmatpush1.msra.mxu0 0.0
    %2011 = vmatprep.subr.mxu0 0.0
    %2012 = vmatpush1.msra.mxu0 0.0
    %2013 = vmatprep.subr.mxu0 0.0
    %2014 = vmatpush1.msra.mxu0 0.0
    %2015 = vmatprep.subr.mxu0 0.0
    %2016 = vmatpush1.msra.mxu0 0.0
    %2017 = vmatprep.subr.mxu0 0.0
    %2018 = vmatpush1.msra.mxu0 0.0
    %2019 = vmatprep.subr.mxu0 0.0
    %2020 = vmatpush1.msra.mxu0 0.0
    %2021 = vmatprep.subr.mxu0 0.0
    %2022 = vmatpush1.msra.mxu0 0.0
    %2023 = vmatprep.subr.mxu0 0.0
    %2024 = vmatpush1.msra.mxu0 0.0
    %2025 = vmatprep.subr.mxu0 0.0
    %2026 = vmatpush1.msra.mxu0 0.0
    %2027 = vmatprep.subr.mxu0 0.0
    %2028 = vmatpush1.msra.mxu0 0.0
    %2029 = vmatprep.subr.mxu0 0.0
    %2030 = vmatpush1.msra.mxu0 0.0
    %2031 = vmatprep.subr.mxu0 0.0
    %2032 = vmatpush1.msra.mxu0 0.0
    %2033 = vmatprep.subr.mxu0 0.0
    %2034 = vmatpush1.msra.mxu0 %v1862
    %2035 = vmatprep.subr.mxu0 0.0
    %2036 = vmatpush1.msra.mxu0 %v1857
    %2037 = vmatprep.subr.mxu0 0.0
    %2038 = vmatpush2.msra.mxu0 0.0
    %2039 = vmatprep.subr.mxu0 0.0
    %2040 = vmatpush2.msra.mxu0 0.0
    %2041 = vmatprep.subr.mxu0 0.0
    %2042 = vmatpush2.msra.mxu0 0.0
    %2043 = vmatprep.subr.mxu0 0.0
    %2044 = vmatpush2.msra.mxu0 0.0
    %2045 = vmatprep.subr.mxu0 0.0
    %2046 = vmatpush2.msra.mxu0 0.0
    %2047 = vmatprep.subr.mxu0 0.0
    %2048 = vmatpush2.msra.mxu0 0.0
    %2049 = vmatprep.subr.mxu0 0.0
    %2050 = vmatpush2.msra.mxu0 0.0
    %2051 = vmatprep.subr.mxu0 0.0
    %2052 = vmatpush2.msra.mxu0 0.0
    %2053 = vmatprep.subr.mxu0 0.0
    %2054 = vmatpush2.msra.mxu0 0.0
    %2055 = vmatprep.subr.mxu0 0.0
    %2056 = vmatpush2.msra.mxu0 0.0
    %2057 = vmatprep.subr.mxu0 0.0
    %2058 = vmatpush2.msra.mxu0 0.0
    %2059 = vmatprep.subr.mxu0 0.0
    %2060 = vmatpush2.msra.mxu0 0.0
    %2061 = vmatprep.subr.mxu0 0.0
    %2062 = vmatpush2.msra.mxu0 0.0
    %2063 = vmatprep.subr.mxu0 0.0
    %2064 = vmatpush2.msra.mxu0 0.0
    %2065 = vmatprep.subr.mxu0 0.0
    %2066 = vmatpush2.msra.mxu0 0.0
    %2067 = vmatprep.subr.mxu0 0.0
    %2068 = vmatpush2.msra.mxu0 0.0
    %2069 = vmatprep.mubr.f32.mxu0 0.0
    %2070 = vmatmul.mubr.f32.gmra.mxu0 %v2000
    %v2071 = vpop.f32.mrf.mxu0
    %v2072 = vadd.f32 0.0, %v2071
    %v2073 = vpop.f32.mrf.mxu0
    %2074 = vmatprep.mubr.f32.mxu0 0.0
    %2075 = vmatmul.mubr.f32.gmra.mxu0 %v2003
    %v2076 = vpop.f32.mrf.mxu0
    %v2077 = vadd.f32 0.0, %v2076
    %v2078 = vpop.f32.mrf.mxu0
    %2079 = vdwg.mxu0
    %v2080 = vadd.f32 %v1995, 1e-16
    %v2081 = vadd.f32 %v1998, 1e-16
    %v2082 = vrcp.pop %v2080
    %v2083 = vrcp.pop %v2081
    %v2084 = vmul.f32 %v2082, 0.25
    %v2085 = vmul.f32 %v2083, 0.25
    %v2086 = vmul.f32 %v2072, %v2084
    %v2087 = vmul.f32 %v2077, %v2085
    %v2088 = vadd.f32 %v2086, 0.0
    %v2089 = vadd.f32 %v2087, 0.0
    %v2090 = vld [vmem:[#allocation24 + $0x1] sm:$0x1]
    %v2091 = vld [vmem:[#allocation26 + $0x1] sm:$0x1]
    %2092 = vrot.lane.b32.xlu0 %v1857, 96
    %v2093 = vpop.permute.xlu0 %2092
    %2094 = vrot.lane.b32.xlu0 %v1862, 96
    %v2095 = vpop.permute.xlu0 %2094
    %v2097 = vsel %vm1088, %v2090, 0
    %v2099 = vsel %vm1088, %v2093, 0
    %v2101 = vsel %vm1088, %v2095, 0
    %2103 = vmatprep.subr.mxu0 0.0
    %2104 = vmatpush1.xpose.msra.mxu0 0.0
    %2105 = vmatprep.subr.mxu0 0.0
    %2106 = vmatpush1.xpose.msra.mxu0 0.0
    %2107 = vmatprep.subr.mxu0 0.0
    %2108 = vmatpush1.xpose.msra.mxu0 0.0
    %2109 = vmatprep.subr.mxu0 0.0
    %2110 = vmatpush1.xpose.msra.mxu0 0.0
    %2111 = vmatprep.subr.mxu0 0.0
    %2112 = vmatpush1.xpose.msra.mxu0 0.0
    %2113 = vmatprep.subr.mxu0 0.0
    %2114 = vmatpush1.xpose.msra.mxu0 0.0
    %2115 = vmatprep.subr.mxu0 0.0
    %2116 = vmatpush1.xpose.msra.mxu0 0.0
    %2117 = vmatprep.subr.mxu0 0.0
    %2118 = vmatpush1.xpose.msra.mxu0 0.0
    %2119 = vmatprep.subr.mxu0 0.0
    %2120 = vmatpush1.xpose.msra.mxu0 0.0
    %2121 = vmatprep.subr.mxu0 0.0
    %2122 = vmatpush1.xpose.msra.mxu0 0.0
    %2123 = vmatprep.subr.mxu0 0.0
    %2124 = vmatpush1.xpose.msra.mxu0 0.0
    %2125 = vmatprep.subr.mxu0 0.0
    %2126 = vmatpush1.xpose.msra.mxu0 0.0
    %2127 = vmatprep.subr.mxu0 0.0
    %2128 = vmatpush1.xpose.msra.mxu0 0.0
    %2129 = vmatprep.subr.mxu0 0.0
    %2130 = vmatpush1.xpose.msra.mxu0 0.0
    %2131 = vmatprep.subr.mxu0 0.0
    %2132 = vmatpush1.xpose.msra.mxu0 %v2101
    %2133 = vmatprep.subr.mxu0 0.0
    %2134 = vmatpush1.xpose.msra.mxu0 %v2099
    %2135 = vmatprep.subr.mxu0 0.0
    %2136 = vmatpush2.xpose.msra.mxu0 0.0
    %2137 = vmatprep.subr.mxu0 0.0
    %2138 = vmatpush2.xpose.msra.mxu0 0.0
    %2139 = vmatprep.subr.mxu0 0.0
    %2140 = vmatpush2.xpose.msra.mxu0 0.0
    %2141 = vmatprep.subr.mxu0 0.0
    %2142 = vmatpush2.xpose.msra.mxu0 0.0
    %2143 = vmatprep.subr.mxu0 0.0
    %2144 = vmatpush2.xpose.msra.mxu0 0.0
    %2145 = vmatprep.subr.mxu0 0.0
    %2146 = vmatpush2.xpose.msra.mxu0 0.0
    %2147 = vmatprep.subr.mxu0 0.0
    %2148 = vmatpush2.xpose.msra.mxu0 0.0
    %2149 = vmatprep.subr.mxu0 0.0
    %2150 = vmatpush2.xpose.msra.mxu0 0.0
    %2151 = vmatprep.subr.mxu0 0.0
    %2152 = vmatpush2.xpose.msra.mxu0 0.0
    %2153 = vmatprep.subr.mxu0 0.0
    %2154 = vmatpush2.xpose.msra.mxu0 0.0
    %2155 = vmatprep.subr.mxu0 0.0
    %2156 = vmatpush2.xpose.msra.mxu0 0.0
    %2157 = vmatprep.subr.mxu0 0.0
    %2158 = vmatpush2.xpose.msra.mxu0 0.0
    %2159 = vmatprep.subr.mxu0 0.0
    %2160 = vmatpush2.xpose.msra.mxu0 0.0
    %2161 = vmatprep.subr.mxu0 0.0
    %2162 = vmatpush2.xpose.msra.mxu0 0.0
    %2163 = vmatprep.subr.mxu0 0.0
    %2164 = vmatpush2.xpose.msra.mxu0 0.0
    %2165 = vmatprep.subr.mxu0 0.0
    %2166 = vmatpush2.xpose.msra.mxu0 0.0
    %2167 = vmatprep.mubr.f32.mxu0 0.0
    %2168 = vmatmul.mubr.f32.gmra.mxu0 %v2097
    %v2169 = vpop.f32.mrf.mxu0
    %v2170 = vadd.f32 0.0, %v2169
    %v2171 = vpop.f32.mrf.mxu0
    %2172 = vdwg.mxu0
    %v2173 = vlaneseq
    %v2174 = vshrl.u32 %v2173, 7
    %v2175 = vsub.s32 0, %v2174
    %v2176 = vrot.slane %v2091, %v2175
    %2178 = vrot.lane.b32.xlu0 %v2176, 32
    %v2179 = vpop.permute.xlu0 %2178
    %v2181 = vmul.f32 %v1857, %v2179
    %v2182 = vmul.f32 %v1862, %v2179
    %2185 = vrot.lane.b32.xlu0 %v2181, 96
    %v2186 = vpop.permute.xlu0 %2185
    %2187 = vrot.lane.b32.xlu0 %v2182, 96
    %v2188 = vpop.permute.xlu0 %2187
    %v2191 = vsel %vm1088, %v2186, 0.0
    %2192 = vadd.xlane.f32.xlu0 %v2191
    %v2193 = vpop.xlane.xlu0 %2192
    %v2194 = vsel %vm1088, %v2188, 0.0
    %2195 = vadd.xlane.f32.xlu0 %v2194
    %v2196 = vpop.xlane.xlu0 %2195
    %v2197 = vlaneseq
    %v2198 = vshrl.u32 %v2197, 7
    %v2199 = vsub.s32 0, %v2198
    %v2200 = vrot.slane %v2170, %v2199
    %v2201 = vadd.f32 %v2193, %v2200
    %v2202 = vadd.f32 %v2196, %v2200
    %vm2203 = vcmp.ge.f32.partialorder %v2201, 0.0
    %vm2204 = vcmp.ge.f32.partialorder %v2202, 0.0
    %v2205 = vmul.f32 %v2201, 0.2
    %v2206 = vmul.f32 %v2202, 0.2
    %v2207 = vsel %vm2203, %v2201, %v2205
    %v2208 = vsel %vm2204, %v2202, %v2206
    %v2209 = vadd.f32 %v2207, %v1868
    %v2210 = vadd.f32 %v2208, %v1869
    %v2211 = vsel %vm1181, %v2209, -inf
    %2212 = vmax.xlane.f32.xlu0 %v2211
    %v2213 = vpop.xlane.xlu0 %2212
    %v2214 = vsel %vm1181, %v2210, -inf
    %2215 = vmax.xlane.f32.xlu0 %v2214
    %v2216 = vpop.xlane.xlu0 %2215
    %v2217 = vsub.f32 %v2207, %v2213
    %v2218 = vsub.f32 %v2208, %v2216
    %v2219 = vmin.f32 %v2217, 0.0
    %v2220 = vmin.f32 %v2218, 0.0
    %v2221 = vmul.f32 %v2219, 1.442695
    %v2222 = vpow.pop %v2221
    %v2223 = vmul.f32 %v2220, 1.442695
    %v2224 = vpow.pop %v2223
    %v2225 = vmul.f32 %v2222, %v894
    %v2226 = vmul.f32 %v2224, %v895
    %v2227 = vsel %vm1181, %v2225, 0.0
    %2228 = vadd.xlane.f32.xlu0 %v2227
    %v2229 = vpop.xlane.xlu0 %2228
    %v2230 = vsel %vm1181, %v2226, 0.0
    %2231 = vadd.xlane.f32.xlu0 %v2230
    %v2232 = vpop.xlane.xlu0 %2231
    %v2236 = vsel %vm1181, %v2225, 0
    %v2239 = vsel %vm1181, %v2226, 0
    %2241 = vmatprep.subr.mxu0 0.0
    %2242 = vmatpush1.msra.mxu0 0.0
    %2243 = vmatprep.subr.mxu0 0.0
    %2244 = vmatpush1.msra.mxu0 0.0
    %2245 = vmatprep.subr.mxu0 0.0
    %2246 = vmatpush1.msra.mxu0 0.0
    %2247 = vmatprep.subr.mxu0 0.0
    %2248 = vmatpush1.msra.mxu0 0.0
    %2249 = vmatprep.subr.mxu0 0.0
    %2250 = vmatpush1.msra.mxu0 0.0
    %2251 = vmatprep.subr.mxu0 0.0
    %2252 = vmatpush1.msra.mxu0 0.0
    %2253 = vmatprep.subr.mxu0 0.0
    %2254 = vmatpush1.msra.mxu0 0.0
    %2255 = vmatprep.subr.mxu0 0.0
    %2256 = vmatpush1.msra.mxu0 0.0
    %2257 = vmatprep.subr.mxu0 0.0
    %2258 = vmatpush1.msra.mxu0 0.0
    %2259 = vmatprep.subr.mxu0 0.0
    %2260 = vmatpush1.msra.mxu0 0.0
    %2261 = vmatprep.subr.mxu0 0.0
    %2262 = vmatpush1.msra.mxu0 0.0
    %2263 = vmatprep.subr.mxu0 0.0
    %2264 = vmatpush1.msra.mxu0 0.0
    %2265 = vmatprep.subr.mxu0 0.0
    %2266 = vmatpush1.msra.mxu0 0.0
    %2267 = vmatprep.subr.mxu0 0.0
    %2268 = vmatpush1.msra.mxu0 0.0
    %2269 = vmatprep.subr.mxu0 0.0
    %2270 = vmatpush1.msra.mxu0 %v2095
    %2271 = vmatprep.subr.mxu0 0.0
    %2272 = vmatpush1.msra.mxu0 %v2093
    %2273 = vmatprep.subr.mxu0 0.0
    %2274 = vmatpush2.msra.mxu0 0.0
    %2275 = vmatprep.subr.mxu0 0.0
    %2276 = vmatpush2.msra.mxu0 0.0
    %2277 = vmatprep.subr.mxu0 0.0
    %2278 = vmatpush2.msra.mxu0 0.0
    %2279 = vmatprep.subr.mxu0 0.0
    %2280 = vmatpush2.msra.mxu0 0.0
    %2281 = vmatprep.subr.mxu0 0.0
    %2282 = vmatpush2.msra.mxu0 0.0
    %2283 = vmatprep.subr.mxu0 0.0
    %2284 = vmatpush2.msra.mxu0 0.0
    %2285 = vmatprep.subr.mxu0 0.0
    %2286 = vmatpush2.msra.mxu0 0.0
    %2287 = vmatprep.subr.mxu0 0.0
    %2288 = vmatpush2.msra.mxu0 0.0
    %2289 = vmatprep.subr.mxu0 0.0
    %2290 = vmatpush2.msra.mxu0 0.0
    %2291 = vmatprep.subr.mxu0 0.0
    %2292 = vmatpush2.msra.mxu0 0.0
    %2293 = vmatprep.subr.mxu0 0.0
    %2294 = vmatpush2.msra.mxu0 0.0
    %2295 = vmatprep.subr.mxu0 0.0
    %2296 = vmatpush2.msra.mxu0 0.0
    %2297 = vmatprep.subr.mxu0 0.0
    %2298 = vmatpush2.msra.mxu0 0.0
    %2299 = vmatprep.subr.mxu0 0.0
    %2300 = vmatpush2.msra.mxu0 0.0
    %2301 = vmatprep.subr.mxu0 0.0
    %2302 = vmatpush2.msra.mxu0 0.0
    %2303 = vmatprep.subr.mxu0 0.0
    %2304 = vmatpush2.msra.mxu0 0.0
    %2305 = vmatprep.mubr.f32.mxu0 0.0
    %2306 = vmatmul.mubr.f32.gmra.mxu0 %v2236
    %v2307 = vpop.f32.mrf.mxu0
    %v2308 = vadd.f32 0.0, %v2307
    %v2309 = vpop.f32.mrf.mxu0
    %2310 = vmatprep.mubr.f32.mxu0 0.0
    %2311 = vmatmul.mubr.f32.gmra.mxu0 %v2239
    %v2312 = vpop.f32.mrf.mxu0
    %v2313 = vadd.f32 0.0, %v2312
    %v2314 = vpop.f32.mrf.mxu0
    %2315 = vdwg.mxu0
    %v2316 = vadd.f32 %v2229, 1e-16
    %v2317 = vadd.f32 %v2232, 1e-16
    %v2318 = vrcp.pop %v2316
    %v2319 = vrcp.pop %v2317
    %v2320 = vmul.f32 %v2318, 0.25
    %v2321 = vmul.f32 %v2319, 0.25
    %v2322 = vmul.f32 %v2308, %v2320
    %v2323 = vmul.f32 %v2313, %v2321
    %v2324 = vadd.f32 %v2088, %v2322
    %v2325 = vadd.f32 %v2089, %v2323
    %v2326 = vld [vmem:[#allocation24 + $0x2] sm:$0x1]
    %v2327 = vld [vmem:[#allocation26 + $0x2] sm:$0x1]
    %2328 = vrot.lane.b32.xlu0 %v1857, 64
    %v2329 = vpop.permute.xlu0 %2328
    %2330 = vrot.lane.b32.xlu0 %v1862, 64
    %v2331 = vpop.permute.xlu0 %2330
    %v2333 = vsel %vm1088, %v2326, 0
    %v2335 = vsel %vm1088, %v2329, 0
    %v2337 = vsel %vm1088, %v2331, 0
    %2339 = vmatprep.subr.mxu0 0.0
    %2340 = vmatpush1.xpose.msra.mxu0 0.0
    %2341 = vmatprep.subr.mxu0 0.0
    %2342 = vmatpush1.xpose.msra.mxu0 0.0
    %2343 = vmatprep.subr.mxu0 0.0
    %2344 = vmatpush1.xpose.msra.mxu0 0.0
    %2345 = vmatprep.subr.mxu0 0.0
    %2346 = vmatpush1.xpose.msra.mxu0 0.0
    %2347 = vmatprep.subr.mxu0 0.0
    %2348 = vmatpush1.xpose.msra.mxu0 0.0
    %2349 = vmatprep.subr.mxu0 0.0
    %2350 = vmatpush1.xpose.msra.mxu0 0.0
    %2351 = vmatprep.subr.mxu0 0.0
    %2352 = vmatpush1.xpose.msra.mxu0 0.0
    %2353 = vmatprep.subr.mxu0 0.0
    %2354 = vmatpush1.xpose.msra.mxu0 0.0
    %2355 = vmatprep.subr.mxu0 0.0
    %2356 = vmatpush1.xpose.msra.mxu0 0.0
    %2357 = vmatprep.subr.mxu0 0.0
    %2358 = vmatpush1.xpose.msra.mxu0 0.0
    %2359 = vmatprep.subr.mxu0 0.0
    %2360 = vmatpush1.xpose.msra.mxu0 0.0
    %2361 = vmatprep.subr.mxu0 0.0
    %2362 = vmatpush1.xpose.msra.mxu0 0.0
    %2363 = vmatprep.subr.mxu0 0.0
    %2364 = vmatpush1.xpose.msra.mxu0 0.0
    %2365 = vmatprep.subr.mxu0 0.0
    %2366 = vmatpush1.xpose.msra.mxu0 0.0
    %2367 = vmatprep.subr.mxu0 0.0
    %2368 = vmatpush1.xpose.msra.mxu0 %v2337
    %2369 = vmatprep.subr.mxu0 0.0
    %2370 = vmatpush1.xpose.msra.mxu0 %v2335
    %2371 = vmatprep.subr.mxu0 0.0
    %2372 = vmatpush2.xpose.msra.mxu0 0.0
    %2373 = vmatprep.subr.mxu0 0.0
    %2374 = vmatpush2.xpose.msra.mxu0 0.0
    %2375 = vmatprep.subr.mxu0 0.0
    %2376 = vmatpush2.xpose.msra.mxu0 0.0
    %2377 = vmatprep.subr.mxu0 0.0
    %2378 = vmatpush2.xpose.msra.mxu0 0.0
    %2379 = vmatprep.subr.mxu0 0.0
    %2380 = vmatpush2.xpose.msra.mxu0 0.0
    %2381 = vmatprep.subr.mxu0 0.0
    %2382 = vmatpush2.xpose.msra.mxu0 0.0
    %2383 = vmatprep.subr.mxu0 0.0
    %2384 = vmatpush2.xpose.msra.mxu0 0.0
    %2385 = vmatprep.subr.mxu0 0.0
    %2386 = vmatpush2.xpose.msra.mxu0 0.0
    %2387 = vmatprep.subr.mxu0 0.0
    %2388 = vmatpush2.xpose.msra.mxu0 0.0
    %2389 = vmatprep.subr.mxu0 0.0
    %2390 = vmatpush2.xpose.msra.mxu0 0.0
    %2391 = vmatprep.subr.mxu0 0.0
    %2392 = vmatpush2.xpose.msra.mxu0 0.0
    %2393 = vmatprep.subr.mxu0 0.0
    %2394 = vmatpush2.xpose.msra.mxu0 0.0
    %2395 = vmatprep.subr.mxu0 0.0
    %2396 = vmatpush2.xpose.msra.mxu0 0.0
    %2397 = vmatprep.subr.mxu0 0.0
    %2398 = vmatpush2.xpose.msra.mxu0 0.0
    %2399 = vmatprep.subr.mxu0 0.0
    %2400 = vmatpush2.xpose.msra.mxu0 0.0
    %2401 = vmatprep.subr.mxu0 0.0
    %2402 = vmatpush2.xpose.msra.mxu0 0.0
    %2403 = vmatprep.mubr.f32.mxu0 0.0
    %2404 = vmatmul.mubr.f32.gmra.mxu0 %v2333
    %v2405 = vpop.f32.mrf.mxu0
    %v2406 = vadd.f32 0.0, %v2405
    %v2407 = vpop.f32.mrf.mxu0
    %2408 = vdwg.mxu0
    %v2409 = vlaneseq
    %v2410 = vshrl.u32 %v2409, 7
    %v2411 = vsub.s32 0, %v2410
    %v2412 = vrot.slane %v2327, %v2411
    %2414 = vrot.lane.b32.xlu0 %v2412, 64
    %v2415 = vpop.permute.xlu0 %2414
    %v2417 = vmul.f32 %v1857, %v2415
    %v2418 = vmul.f32 %v1862, %v2415
    %2421 = vrot.lane.b32.xlu0 %v2417, 64
    %v2422 = vpop.permute.xlu0 %2421
    %2423 = vrot.lane.b32.xlu0 %v2418, 64
    %v2424 = vpop.permute.xlu0 %2423
    %v2427 = vsel %vm1088, %v2422, 0.0
    %2428 = vadd.xlane.f32.xlu0 %v2427
    %v2429 = vpop.xlane.xlu0 %2428
    %v2430 = vsel %vm1088, %v2424, 0.0
    %2431 = vadd.xlane.f32.xlu0 %v2430
    %v2432 = vpop.xlane.xlu0 %2431
    %v2433 = vlaneseq
    %v2434 = vshrl.u32 %v2433, 7
    %v2435 = vsub.s32 0, %v2434
    %v2436 = vrot.slane %v2406, %v2435
    %v2437 = vadd.f32 %v2429, %v2436
    %v2438 = vadd.f32 %v2432, %v2436
    %vm2439 = vcmp.ge.f32.partialorder %v2437, 0.0
    %vm2440 = vcmp.ge.f32.partialorder %v2438, 0.0
    %v2441 = vmul.f32 %v2437, 0.2
    %v2442 = vmul.f32 %v2438, 0.2
    %v2443 = vsel %vm2439, %v2437, %v2441
    %v2444 = vsel %vm2440, %v2438, %v2442
    %v2445 = vadd.f32 %v2443, %v1868
    %v2446 = vadd.f32 %v2444, %v1869
    %v2447 = vsel %vm1181, %v2445, -inf
    %2448 = vmax.xlane.f32.xlu0 %v2447
    %v2449 = vpop.xlane.xlu0 %2448
    %v2450 = vsel %vm1181, %v2446, -inf
    %2451 = vmax.xlane.f32.xlu0 %v2450
    %v2452 = vpop.xlane.xlu0 %2451
    %v2453 = vsub.f32 %v2443, %v2449
    %v2454 = vsub.f32 %v2444, %v2452
    %v2455 = vmin.f32 %v2453, 0.0
    %v2456 = vmin.f32 %v2454, 0.0
    %v2457 = vmul.f32 %v2455, 1.442695
    %v2458 = vpow.pop %v2457
    %v2459 = vmul.f32 %v2456, 1.442695
    %v2460 = vpow.pop %v2459
    %v2461 = vmul.f32 %v2458, %v894
    %v2462 = vmul.f32 %v2460, %v895
    %v2463 = vsel %vm1181, %v2461, 0.0
    %2464 = vadd.xlane.f32.xlu0 %v2463
    %v2465 = vpop.xlane.xlu0 %2464
    %v2466 = vsel %vm1181, %v2462, 0.0
    %2467 = vadd.xlane.f32.xlu0 %v2466
    %v2468 = vpop.xlane.xlu0 %2467
    %v2472 = vsel %vm1181, %v2461, 0
    %v2475 = vsel %vm1181, %v2462, 0
    %2477 = vmatprep.subr.mxu0 0.0
    %2478 = vmatpush1.msra.mxu0 0.0
    %2479 = vmatprep.subr.mxu0 0.0
    %2480 = vmatpush1.msra.mxu0 0.0
    %2481 = vmatprep.subr.mxu0 0.0
    %2482 = vmatpush1.msra.mxu0 0.0
    %2483 = vmatprep.subr.mxu0 0.0
    %2484 = vmatpush1.msra.mxu0 0.0
    %2485 = vmatprep.subr.mxu0 0.0
    %2486 = vmatpush1.msra.mxu0 0.0
    %2487 = vmatprep.subr.mxu0 0.0
    %2488 = vmatpush1.msra.mxu0 0.0
    %2489 = vmatprep.subr.mxu0 0.0
    %2490 = vmatpush1.msra.mxu0 0.0
    %2491 = vmatprep.subr.mxu0 0.0
    %2492 = vmatpush1.msra.mxu0 0.0
    %2493 = vmatprep.subr.mxu0 0.0
    %2494 = vmatpush1.msra.mxu0 0.0
    %2495 = vmatprep.subr.mxu0 0.0
    %2496 = vmatpush1.msra.mxu0 0.0
    %2497 = vmatprep.subr.mxu0 0.0
    %2498 = vmatpush1.msra.mxu0 0.0
    %2499 = vmatprep.subr.mxu0 0.0
    %2500 = vmatpush1.msra.mxu0 0.0
    %2501 = vmatprep.subr.mxu0 0.0
    %2502 = vmatpush1.msra.mxu0 0.0
    %2503 = vmatprep.subr.mxu0 0.0
    %2504 = vmatpush1.msra.mxu0 0.0
    %2505 = vmatprep.subr.mxu0 0.0
    %2506 = vmatpush1.msra.mxu0 %v2331
    %2507 = vmatprep.subr.mxu0 0.0
    %2508 = vmatpush1.msra.mxu0 %v2329
    %2509 = vmatprep.subr.mxu0 0.0
    %2510 = vmatpush2.msra.mxu0 0.0
    %2511 = vmatprep.subr.mxu0 0.0
    %2512 = vmatpush2.msra.mxu0 0.0
    %2513 = vmatprep.subr.mxu0 0.0
    %2514 = vmatpush2.msra.mxu0 0.0
    %2515 = vmatprep.subr.mxu0 0.0
    %2516 = vmatpush2.msra.mxu0 0.0
    %2517 = vmatprep.subr.mxu0 0.0
    %2518 = vmatpush2.msra.mxu0 0.0
    %2519 = vmatprep.subr.mxu0 0.0
    %2520 = vmatpush2.msra.mxu0 0.0
    %2521 = vmatprep.subr.mxu0 0.0
    %2522 = vmatpush2.msra.mxu0 0.0
    %2523 = vmatprep.subr.mxu0 0.0
    %2524 = vmatpush2.msra.mxu0 0.0
    %2525 = vmatprep.subr.mxu0 0.0
    %2526 = vmatpush2.msra.mxu0 0.0
    %2527 = vmatprep.subr.mxu0 0.0
    %2528 = vmatpush2.msra.mxu0 0.0
    %2529 = vmatprep.subr.mxu0 0.0
    %2530 = vmatpush2.msra.mxu0 0.0
    %2531 = vmatprep.subr.mxu0 0.0
    %2532 = vmatpush2.msra.mxu0 0.0
    %2533 = vmatprep.subr.mxu0 0.0
    %2534 = vmatpush2.msra.mxu0 0.0
    %2535 = vmatprep.subr.mxu0 0.0
    %2536 = vmatpush2.msra.mxu0 0.0
    %2537 = vmatprep.subr.mxu0 0.0
    %2538 = vmatpush2.msra.mxu0 0.0
    %2539 = vmatprep.subr.mxu0 0.0
    %2540 = vmatpush2.msra.mxu0 0.0
    %2541 = vmatprep.mubr.f32.mxu0 0.0
    %2542 = vmatmul.mubr.f32.gmra.mxu0 %v2472
    %v2543 = vpop.f32.mrf.mxu0
    %v2544 = vadd.f32 0.0, %v2543
    %v2545 = vpop.f32.mrf.mxu0
    %2546 = vmatprep.mubr.f32.mxu0 0.0
    %2547 = vmatmul.mubr.f32.gmra.mxu0 %v2475
    %v2548 = vpop.f32.mrf.mxu0
    %v2549 = vadd.f32 0.0, %v2548
    %v2550 = vpop.f32.mrf.mxu0
    %2551 = vdwg.mxu0
    %v2552 = vadd.f32 %v2465, 1e-16
    %v2553 = vadd.f32 %v2468, 1e-16
    %v2554 = vrcp.pop %v2552
    %v2555 = vrcp.pop %v2553
    %v2556 = vmul.f32 %v2554, 0.25
    %v2557 = vmul.f32 %v2555, 0.25
    %v2558 = vmul.f32 %v2544, %v2556
    %v2559 = vmul.f32 %v2549, %v2557
    %v2560 = vadd.f32 %v2324, %v2558
    %v2561 = vadd.f32 %v2325, %v2559
    %v2562 = vld [vmem:[#allocation24 + $0x3] sm:$0x1]
    %v2563 = vld [vmem:[#allocation26 + $0x3] sm:$0x1]
    %2564 = vrot.lane.b32.xlu0 %v1857, 32
    %v2565 = vpop.permute.xlu0 %2564
    %2566 = vrot.lane.b32.xlu0 %v1862, 32
    %v2567 = vpop.permute.xlu0 %2566
    %v2569 = vsel %vm1088, %v2562, 0
    %v2571 = vsel %vm1088, %v2565, 0
    %v2573 = vsel %vm1088, %v2567, 0
    %2575 = vmatprep.subr.mxu0 0.0
    %2576 = vmatpush1.xpose.msra.mxu0 0.0
    %2577 = vmatprep.subr.mxu0 0.0
    %2578 = vmatpush1.xpose.msra.mxu0 0.0
    %2579 = vmatprep.subr.mxu0 0.0
    %2580 = vmatpush1.xpose.msra.mxu0 0.0
    %2581 = vmatprep.subr.mxu0 0.0
    %2582 = vmatpush1.xpose.msra.mxu0 0.0
    %2583 = vmatprep.subr.mxu0 0.0
    %2584 = vmatpush1.xpose.msra.mxu0 0.0
    %2585 = vmatprep.subr.mxu0 0.0
    %2586 = vmatpush1.xpose.msra.mxu0 0.0
    %2587 = vmatprep.subr.mxu0 0.0
    %2588 = vmatpush1.xpose.msra.mxu0 0.0
    %2589 = vmatprep.subr.mxu0 0.0
    %2590 = vmatpush1.xpose.msra.mxu0 0.0
    %2591 = vmatprep.subr.mxu0 0.0
    %2592 = vmatpush1.xpose.msra.mxu0 0.0
    %2593 = vmatprep.subr.mxu0 0.0
    %2594 = vmatpush1.xpose.msra.mxu0 0.0
    %2595 = vmatprep.subr.mxu0 0.0
    %2596 = vmatpush1.xpose.msra.mxu0 0.0
    %2597 = vmatprep.subr.mxu0 0.0
    %2598 = vmatpush1.xpose.msra.mxu0 0.0
    %2599 = vmatprep.subr.mxu0 0.0
    %2600 = vmatpush1.xpose.msra.mxu0 0.0
    %2601 = vmatprep.subr.mxu0 0.0
    %2602 = vmatpush1.xpose.msra.mxu0 0.0
    %2603 = vmatprep.subr.mxu0 0.0
    %2604 = vmatpush1.xpose.msra.mxu0 %v2573
    %2605 = vmatprep.subr.mxu0 0.0
    %2606 = vmatpush1.xpose.msra.mxu0 %v2571
    %2607 = vmatprep.subr.mxu0 0.0
    %2608 = vmatpush2.xpose.msra.mxu0 0.0
    %2609 = vmatprep.subr.mxu0 0.0
    %2610 = vmatpush2.xpose.msra.mxu0 0.0
    %2611 = vmatprep.subr.mxu0 0.0
    %2612 = vmatpush2.xpose.msra.mxu0 0.0
    %2613 = vmatprep.subr.mxu0 0.0
    %2614 = vmatpush2.xpose.msra.mxu0 0.0
    %2615 = vmatprep.subr.mxu0 0.0
    %2616 = vmatpush2.xpose.msra.mxu0 0.0
    %2617 = vmatprep.subr.mxu0 0.0
    %2618 = vmatpush2.xpose.msra.mxu0 0.0
    %2619 = vmatprep.subr.mxu0 0.0
    %2620 = vmatpush2.xpose.msra.mxu0 0.0
    %2621 = vmatprep.subr.mxu0 0.0
    %2622 = vmatpush2.xpose.msra.mxu0 0.0
    %2623 = vmatprep.subr.mxu0 0.0
    %2624 = vmatpush2.xpose.msra.mxu0 0.0
    %2625 = vmatprep.subr.mxu0 0.0
    %2626 = vmatpush2.xpose.msra.mxu0 0.0
    %2627 = vmatprep.subr.mxu0 0.0
    %2628 = vmatpush2.xpose.msra.mxu0 0.0
    %2629 = vmatprep.subr.mxu0 0.0
    %2630 = vmatpush2.xpose.msra.mxu0 0.0
    %2631 = vmatprep.subr.mxu0 0.0
    %2632 = vmatpush2.xpose.msra.mxu0 0.0
    %2633 = vmatprep.subr.mxu0 0.0
    %2634 = vmatpush2.xpose.msra.mxu0 0.0
    %2635 = vmatprep.subr.mxu0 0.0
    %2636 = vmatpush2.xpose.msra.mxu0 0.0
    %2637 = vmatprep.subr.mxu0 0.0
    %2638 = vmatpush2.xpose.msra.mxu0 0.0
    %2639 = vmatprep.mubr.f32.mxu0 0.0
    %2640 = vmatmul.mubr.f32.gmra.mxu0 %v2569
    %v2641 = vpop.f32.mrf.mxu0
    %v2642 = vadd.f32 0.0, %v2641
    %v2643 = vpop.f32.mrf.mxu0
    %2644 = vdwg.mxu0
    %v2645 = vlaneseq
    %v2646 = vshrl.u32 %v2645, 7
    %v2647 = vsub.s32 0, %v2646
    %v2648 = vrot.slane %v2563, %v2647
    %2650 = vrot.lane.b32.xlu0 %v2648, 96
    %v2651 = vpop.permute.xlu0 %2650
    %v2653 = vmul.f32 %v1857, %v2651
    %v2654 = vmul.f32 %v1862, %v2651
    %2657 = vrot.lane.b32.xlu0 %v2653, 32
    %v2658 = vpop.permute.xlu0 %2657
    %2659 = vrot.lane.b32.xlu0 %v2654, 32
    %v2660 = vpop.permute.xlu0 %2659
    %v2663 = vsel %vm1088, %v2658, 0.0
    %2664 = vadd.xlane.f32.xlu0 %v2663
    %v2665 = vpop.xlane.xlu0 %2664
    %v2666 = vsel %vm1088, %v2660, 0.0
    %2667 = vadd.xlane.f32.xlu0 %v2666
    %v2668 = vpop.xlane.xlu0 %2667
    %v2669 = vlaneseq
    %v2670 = vshrl.u32 %v2669, 7
    %v2671 = vsub.s32 0, %v2670
    %v2672 = vrot.slane %v2642, %v2671
    %v2673 = vadd.f32 %v2665, %v2672
    %v2674 = vadd.f32 %v2668, %v2672
    %vm2675 = vcmp.ge.f32.partialorder %v2673, 0.0
    %vm2676 = vcmp.ge.f32.partialorder %v2674, 0.0
    %v2677 = vmul.f32 %v2673, 0.2
    %v2678 = vmul.f32 %v2674, 0.2
    %v2679 = vsel %vm2675, %v2673, %v2677
    %v2680 = vsel %vm2676, %v2674, %v2678
    %v2681 = vadd.f32 %v2679, %v1868
    %v2682 = vadd.f32 %v2680, %v1869
    %v2683 = vsel %vm1181, %v2681, -inf
    %2684 = vmax.xlane.f32.xlu0 %v2683
    %v2685 = vpop.xlane.xlu0 %2684
    %v2686 = vsel %vm1181, %v2682, -inf
    %2687 = vmax.xlane.f32.xlu0 %v2686
    %v2688 = vpop.xlane.xlu0 %2687
    %v2689 = vsub.f32 %v2679, %v2685
    %v2690 = vsub.f32 %v2680, %v2688
    %v2691 = vmin.f32 %v2689, 0.0
    %v2692 = vmin.f32 %v2690, 0.0
    %v2693 = vmul.f32 %v2691, 1.442695
    %v2694 = vpow.pop %v2693
    %v2695 = vmul.f32 %v2692, 1.442695
    %v2696 = vpow.pop %v2695
    %v2697 = vmul.f32 %v2694, %v894
    %v2698 = vmul.f32 %v2696, %v895
    %v2699 = vsel %vm1181, %v2697, 0.0
    %2700 = vadd.xlane.f32.xlu0 %v2699
    %v2701 = vpop.xlane.xlu0 %2700
    %v2702 = vsel %vm1181, %v2698, 0.0
    %2703 = vadd.xlane.f32.xlu0 %v2702
    %v2704 = vpop.xlane.xlu0 %2703
    %v2708 = vsel %vm1181, %v2697, 0
    %v2711 = vsel %vm1181, %v2698, 0
    %2713 = vmatprep.subr.mxu0 0.0
    %2714 = vmatpush1.msra.mxu0 0.0
    %2715 = vmatprep.subr.mxu0 0.0
    %2716 = vmatpush1.msra.mxu0 0.0
    %2717 = vmatprep.subr.mxu0 0.0
    %2718 = vmatpush1.msra.mxu0 0.0
    %2719 = vmatprep.subr.mxu0 0.0
    %2720 = vmatpush1.msra.mxu0 0.0
    %2721 = vmatprep.subr.mxu0 0.0
    %2722 = vmatpush1.msra.mxu0 0.0
    %2723 = vmatprep.subr.mxu0 0.0
    %2724 = vmatpush1.msra.mxu0 0.0
    %2725 = vmatprep.subr.mxu0 0.0
    %2726 = vmatpush1.msra.mxu0 0.0
    %2727 = vmatprep.subr.mxu0 0.0
    %2728 = vmatpush1.msra.mxu0 0.0
    %2729 = vmatprep.subr.mxu0 0.0
    %2730 = vmatpush1.msra.mxu0 0.0
    %2731 = vmatprep.subr.mxu0 0.0
    %2732 = vmatpush1.msra.mxu0 0.0
    %2733 = vmatprep.subr.mxu0 0.0
    %2734 = vmatpush1.msra.mxu0 0.0
    %2735 = vmatprep.subr.mxu0 0.0
    %2736 = vmatpush1.msra.mxu0 0.0
    %2737 = vmatprep.subr.mxu0 0.0
    %2738 = vmatpush1.msra.mxu0 0.0
    %2739 = vmatprep.subr.mxu0 0.0
    %2740 = vmatpush1.msra.mxu0 0.0
    %2741 = vmatprep.subr.mxu0 0.0
    %2742 = vmatpush1.msra.mxu0 %v2567
    %2743 = vmatprep.subr.mxu0 0.0
    %2744 = vmatpush1.msra.mxu0 %v2565
    %2745 = vmatprep.subr.mxu0 0.0
    %2746 = vmatpush2.msra.mxu0 0.0
    %2747 = vmatprep.subr.mxu0 0.0
    %2748 = vmatpush2.msra.mxu0 0.0
    %2749 = vmatprep.subr.mxu0 0.0
    %2750 = vmatpush2.msra.mxu0 0.0
    %2751 = vmatprep.subr.mxu0 0.0
    %2752 = vmatpush2.msra.mxu0 0.0
    %2753 = vmatprep.subr.mxu0 0.0
    %2754 = vmatpush2.msra.mxu0 0.0
    %2755 = vmatprep.subr.mxu0 0.0
    %2756 = vmatpush2.msra.mxu0 0.0
    %2757 = vmatprep.subr.mxu0 0.0
    %2758 = vmatpush2.msra.mxu0 0.0
    %2759 = vmatprep.subr.mxu0 0.0
    %2760 = vmatpush2.msra.mxu0 0.0
    %2761 = vmatprep.subr.mxu0 0.0
    %2762 = vmatpush2.msra.mxu0 0.0
    %2763 = vmatprep.subr.mxu0 0.0
    %2764 = vmatpush2.msra.mxu0 0.0
    %2765 = vmatprep.subr.mxu0 0.0
    %2766 = vmatpush2.msra.mxu0 0.0
    %2767 = vmatprep.subr.mxu0 0.0
    %2768 = vmatpush2.msra.mxu0 0.0
    %2769 = vmatprep.subr.mxu0 0.0
    %2770 = vmatpush2.msra.mxu0 0.0
    %2771 = vmatprep.subr.mxu0 0.0
    %2772 = vmatpush2.msra.mxu0 0.0
    %2773 = vmatprep.subr.mxu0 0.0
    %2774 = vmatpush2.msra.mxu0 0.0
    %2775 = vmatprep.subr.mxu0 0.0
    %2776 = vmatpush2.msra.mxu0 0.0
    %2777 = vmatprep.mubr.f32.mxu0 0.0
    %2778 = vmatmul.mubr.f32.gmra.mxu0 %v2708
    %v2779 = vpop.f32.mrf.mxu0
    %v2780 = vadd.f32 0.0, %v2779
    %v2781 = vpop.f32.mrf.mxu0
    %2782 = vmatprep.mubr.f32.mxu0 0.0
    %2783 = vmatmul.mubr.f32.gmra.mxu0 %v2711
    %v2784 = vpop.f32.mrf.mxu0
    %v2785 = vadd.f32 0.0, %v2784
    %v2786 = vpop.f32.mrf.mxu0
    %2787 = vdwg.mxu0
    %v2788 = vadd.f32 %v2701, 1e-16
    %v2789 = vadd.f32 %v2704, 1e-16
    %v2790 = vrcp.pop %v2788
    %v2791 = vrcp.pop %v2789
    %v2792 = vmul.f32 %v2790, 0.25
    %v2793 = vmul.f32 %v2791, 0.25
    %v2794 = vmul.f32 %v2780, %v2792
    %v2795 = vmul.f32 %v2785, %v2793
    %v2796 = vadd.f32 %v2560, %v2794
    %v2797 = vadd.f32 %v2561, %v2795
    %v2799 = vlaneseq
    %v2800 = vshrl.u32 %v2799, 7
    %v2801 = vsub.s32 0, %v2800
    %v2802 = vrot.slane %v1865, %v2801
    %v2804 = vadd.f32 %v2796, %v2802
    %v2805 = vadd.f32 %v2797, %v2802
    %v2806 = vmax.f32 %v2804, 0.0
    %v2807 = vmax.f32 %v2805, 0.0
    %v2808 = vld [vmem:[%s55] sm:$0xff]
    %v2809 = vld [vmem:[%s55 + $0x8] sm:$0xff]
    %v2810 = vld [vmem:[%s55 + $0x10] sm:$0xff]
    %v2811 = vld [vmem:[%s55 + $0x18] sm:$0xff]
    %v2813 = vsel %vm1088, %v2806, 0
    %v2816 = vsel %vm1088, %v2807, 0
    %2818 = vmatprep.subr.mxu0 0.0
    %2819 = vmatpush1.msra.mxu0 0.0
    %2820 = vmatprep.subr.mxu0 0.0
    %2821 = vmatpush1.msra.mxu0 0.0
    %2822 = vmatprep.subr.mxu0 0.0
    %2823 = vmatpush1.msra.mxu0 0.0
    %2824 = vmatprep.subr.mxu0 0.0
    %2825 = vmatpush1.msra.mxu0 0.0
    %2826 = vmatprep.subr.mxu0 0.0
    %2827 = vmatpush1.msra.mxu0 0.0
    %2828 = vmatprep.subr.mxu0 0.0
    %2829 = vmatpush1.msra.mxu0 0.0
    %2830 = vmatprep.subr.mxu0 0.0
    %2831 = vmatpush1.msra.mxu0 0.0
    %2832 = vmatprep.subr.mxu0 0.0
    %2833 = vmatpush1.msra.mxu0 0.0
    %2834 = vmatprep.subr.mxu0 0.0
    %2835 = vmatpush1.msra.mxu0 0.0
    %2836 = vmatprep.subr.mxu0 0.0
    %2837 = vmatpush1.msra.mxu0 0.0
    %2838 = vmatprep.subr.mxu0 0.0
    %2839 = vmatpush1.msra.mxu0 0.0
    %2840 = vmatprep.subr.mxu0 0.0
    %2841 = vmatpush1.msra.mxu0 0.0
    %2842 = vmatprep.subr.mxu0 0.0
    %2843 = vmatpush1.msra.mxu0 %v2811
    %2844 = vmatprep.subr.mxu0 0.0
    %2845 = vmatpush1.msra.mxu0 %v2810
    %2846 = vmatprep.subr.mxu0 0.0
    %2847 = vmatpush1.msra.mxu0 %v2809
    %2848 = vmatprep.subr.mxu0 0.0
    %2849 = vmatpush1.msra.mxu0 %v2808
    %2850 = vmatprep.subr.mxu0 0.0
    %2851 = vmatpush2.msra.mxu0 0.0
    %2852 = vmatprep.subr.mxu0 0.0
    %2853 = vmatpush2.msra.mxu0 0.0
    %2854 = vmatprep.subr.mxu0 0.0
    %2855 = vmatpush2.msra.mxu0 0.0
    %2856 = vmatprep.subr.mxu0 0.0
    %2857 = vmatpush2.msra.mxu0 0.0
    %2858 = vmatprep.subr.mxu0 0.0
    %2859 = vmatpush2.msra.mxu0 0.0
    %2860 = vmatprep.subr.mxu0 0.0
    %2861 = vmatpush2.msra.mxu0 0.0
    %2862 = vmatprep.subr.mxu0 0.0
    %2863 = vmatpush2.msra.mxu0 0.0
    %2864 = vmatprep.subr.mxu0 0.0
    %2865 = vmatpush2.msra.mxu0 0.0
    %2866 = vmatprep.subr.mxu0 0.0
    %2867 = vmatpush2.msra.mxu0 0.0
    %2868 = vmatprep.subr.mxu0 0.0
    %2869 = vmatpush2.msra.mxu0 0.0
    %2870 = vmatprep.subr.mxu0 0.0
    %2871 = vmatpush2.msra.mxu0 0.0
    %2872 = vmatprep.subr.mxu0 0.0
    %2873 = vmatpush2.msra.mxu0 0.0
    %2874 = vmatprep.subr.mxu0 0.0
    %2875 = vmatpush2.msra.mxu0 0.0
    %2876 = vmatprep.subr.mxu0 0.0
    %2877 = vmatpush2.msra.mxu0 0.0
    %2878 = vmatprep.subr.mxu0 0.0
    %2879 = vmatpush2.msra.mxu0 0.0
    %2880 = vmatprep.subr.mxu0 0.0
    %2881 = vmatpush2.msra.mxu0 0.0
    %2882 = vmatprep.mubr.f32.mxu0 0.0
    %2883 = vmatmul.mubr.f32.gmra.mxu0 %v2813
    %v2884 = vpop.f32.mrf.mxu0
    %v2885 = vadd.f32 0.0, %v2884
    %v2886 = vpop.f32.mrf.mxu0
    %2887 = vmatprep.mubr.f32.mxu0 0.0
    %2888 = vmatmul.mubr.f32.gmra.mxu0 %v2816
    %v2889 = vpop.f32.mrf.mxu0
    %v2890 = vadd.f32 0.0, %v2889
    %v2891 = vpop.f32.mrf.mxu0
    %2892 = vdwg.mxu0
    %v2893 = vld [vmem:[%s61] sm:$0x1]
    %v2894 = vld [vmem:[%s57] sm:$0x1]
    %v2895 = vld [vmem:[%s59] sm:$0x1]
    %v2897 = vsel %vm1088, %v2894, 0
    %v2900 = vsel %vm1088, %v2885, 0
    %v2903 = vsel %vm1088, %v2890, 0
    %2905 = vmatprep.subr.mxu0 0.0
    %2906 = vmatpush1.xpose.msra.mxu0 0.0
    %2907 = vmatprep.subr.mxu0 0.0
    %2908 = vmatpush1.xpose.msra.mxu0 0.0
    %2909 = vmatprep.subr.mxu0 0.0
    %2910 = vmatpush1.xpose.msra.mxu0 0.0
    %2911 = vmatprep.subr.mxu0 0.0
    %2912 = vmatpush1.xpose.msra.mxu0 0.0
    %2913 = vmatprep.subr.mxu0 0.0
    %2914 = vmatpush1.xpose.msra.mxu0 0.0
    %2915 = vmatprep.subr.mxu0 0.0
    %2916 = vmatpush1.xpose.msra.mxu0 0.0
    %2917 = vmatprep.subr.mxu0 0.0
    %2918 = vmatpush1.xpose.msra.mxu0 0.0
    %2919 = vmatprep.subr.mxu0 0.0
    %2920 = vmatpush1.xpose.msra.mxu0 0.0
    %2921 = vmatprep.subr.mxu0 0.0
    %2922 = vmatpush1.xpose.msra.mxu0 0.0
    %2923 = vmatprep.subr.mxu0 0.0
    %2924 = vmatpush1.xpose.msra.mxu0 0.0
    %2925 = vmatprep.subr.mxu0 0.0
    %2926 = vmatpush1.xpose.msra.mxu0 0.0
    %2927 = vmatprep.subr.mxu0 0.0
    %2928 = vmatpush1.xpose.msra.mxu0 0.0
    %2929 = vmatprep.subr.mxu0 0.0
    %2930 = vmatpush1.xpose.msra.mxu0 0.0
    %2931 = vmatprep.subr.mxu0 0.0
    %2932 = vmatpush1.xpose.msra.mxu0 0.0
    %2933 = vmatprep.subr.mxu0 0.0
    %2934 = vmatpush1.xpose.msra.mxu0 %v2903
    %2935 = vmatprep.subr.mxu0 0.0
    %2936 = vmatpush1.xpose.msra.mxu0 %v2900
    %2937 = vmatprep.subr.mxu0 0.0
    %2938 = vmatpush2.xpose.msra.mxu0 0.0
    %2939 = vmatprep.subr.mxu0 0.0
    %2940 = vmatpush2.xpose.msra.mxu0 0.0
    %2941 = vmatprep.subr.mxu0 0.0
    %2942 = vmatpush2.xpose.msra.mxu0 0.0
    %2943 = vmatprep.subr.mxu0 0.0
    %2944 = vmatpush2.xpose.msra.mxu0 0.0
    %2945 = vmatprep.subr.mxu0 0.0
    %2946 = vmatpush2.xpose.msra.mxu0 0.0
    %2947 = vmatprep.subr.mxu0 0.0
    %2948 = vmatpush2.xpose.msra.mxu0 0.0
    %2949 = vmatprep.subr.mxu0 0.0
    %2950 = vmatpush2.xpose.msra.mxu0 0.0
    %2951 = vmatprep.subr.mxu0 0.0
    %2952 = vmatpush2.xpose.msra.mxu0 0.0
    %2953 = vmatprep.subr.mxu0 0.0
    %2954 = vmatpush2.xpose.msra.mxu0 0.0
    %2955 = vmatprep.subr.mxu0 0.0
    %2956 = vmatpush2.xpose.msra.mxu0 0.0
    %2957 = vmatprep.subr.mxu0 0.0
    %2958 = vmatpush2.xpose.msra.mxu0 0.0
    %2959 = vmatprep.subr.mxu0 0.0
    %2960 = vmatpush2.xpose.msra.mxu0 0.0
    %2961 = vmatprep.subr.mxu0 0.0
    %2962 = vmatpush2.xpose.msra.mxu0 0.0
    %2963 = vmatprep.subr.mxu0 0.0
    %2964 = vmatpush2.xpose.msra.mxu0 0.0
    %2965 = vmatprep.subr.mxu0 0.0
    %2966 = vmatpush2.xpose.msra.mxu0 0.0
    %2967 = vmatprep.subr.mxu0 0.0
    %2968 = vmatpush2.xpose.msra.mxu0 0.0
    %2969 = vmatprep.mubr.f32.mxu0 0.0
    %2970 = vmatmul.mubr.f32.gmra.mxu0 %v2897
    %v2971 = vpop.f32.mrf.mxu0
    %v2972 = vadd.f32 0.0, %v2971
    %v2973 = vpop.f32.mrf.mxu0
    %2974 = vdwg.mxu0
    %v2976 = vlaneseq
    %v2977 = vshrl.u32 %v2976, 7
    %v2978 = vsub.s32 0, %v2977
    %v2979 = vrot.slane %v2895, %v2978
    %v2981 = vmul.f32 %v2885, %v2979
    %v2982 = vmul.f32 %v2890, %v2979
    %v2983 = vsel %vm1088, %v2981, 0.0
    %2984 = vadd.xlane.f32.xlu0 %v2983
    %v2985 = vpop.xlane.xlu0 %2984
    %v2986 = vsel %vm1088, %v2982, 0.0
    %2987 = vadd.xlane.f32.xlu0 %v2986
    %v2988 = vpop.xlane.xlu0 %2987
    %v2989 = vlaneseq
    %v2990 = vshrl.u32 %v2989, 7
    %v2991 = vsub.s32 0, %v2990
    %v2992 = vrot.slane %v2972, %v2991
    %v2993 = vadd.f32 %v2985, %v2992
    %v2994 = vadd.f32 %v2988, %v2992
    %vm2995 = vcmp.ge.f32.partialorder %v2993, 0.0
    %vm2996 = vcmp.ge.f32.partialorder %v2994, 0.0
    %v2997 = vmul.f32 %v2993, 0.2
    %v2998 = vmul.f32 %v2994, 0.2
    %v2999 = vsel %vm2995, %v2993, %v2997
    %v3000 = vsel %vm2996, %v2994, %v2998
    %v3001 = vadd.f32 %v2999, %v1868
    %v3002 = vadd.f32 %v3000, %v1869
    %v3003 = vsel %vm1181, %v3001, -inf
    %3004 = vmax.xlane.f32.xlu0 %v3003
    %v3005 = vpop.xlane.xlu0 %3004
    %v3006 = vsel %vm1181, %v3002, -inf
    %3007 = vmax.xlane.f32.xlu0 %v3006
    %v3008 = vpop.xlane.xlu0 %3007
    %v3009 = vsub.f32 %v2999, %v3005
    %v3010 = vsub.f32 %v3000, %v3008
    %v3011 = vmin.f32 %v3009, 0.0
    %v3012 = vmin.f32 %v3010, 0.0
    %v3013 = vmul.f32 %v3011, 1.442695
    %v3014 = vpow.pop %v3013
    %v3015 = vmul.f32 %v3012, 1.442695
    %v3016 = vpow.pop %v3015
    %v3017 = vmul.f32 %v3014, %v894
    %v3018 = vmul.f32 %v3016, %v895
    %v3019 = vsel %vm1181, %v3017, 0.0
    %3020 = vadd.xlane.f32.xlu0 %v3019
    %v3021 = vpop.xlane.xlu0 %3020
    %v3022 = vsel %vm1181, %v3018, 0.0
    %3023 = vadd.xlane.f32.xlu0 %v3022
    %v3024 = vpop.xlane.xlu0 %3023
    %v3026 = vsel %vm1181, %v3017, 0
    %v3029 = vsel %vm1181, %v3018, 0
    %3031 = vmatprep.subr.mxu0 0.0
    %3032 = vmatpush1.msra.mxu0 0.0
    %3033 = vmatprep.subr.mxu0 0.0
    %3034 = vmatpush1.msra.mxu0 0.0
    %3035 = vmatprep.subr.mxu0 0.0
    %3036 = vmatpush1.msra.mxu0 0.0
    %3037 = vmatprep.subr.mxu0 0.0
    %3038 = vmatpush1.msra.mxu0 0.0
    %3039 = vmatprep.subr.mxu0 0.0
    %3040 = vmatpush1.msra.mxu0 0.0
    %3041 = vmatprep.subr.mxu0 0.0
    %3042 = vmatpush1.msra.mxu0 0.0
    %3043 = vmatprep.subr.mxu0 0.0
    %3044 = vmatpush1.msra.mxu0 0.0
    %3045 = vmatprep.subr.mxu0 0.0
    %3046 = vmatpush1.msra.mxu0 0.0
    %3047 = vmatprep.subr.mxu0 0.0
    %3048 = vmatpush1.msra.mxu0 0.0
    %3049 = vmatprep.subr.mxu0 0.0
    %3050 = vmatpush1.msra.mxu0 0.0
    %3051 = vmatprep.subr.mxu0 0.0
    %3052 = vmatpush1.msra.mxu0 0.0
    %3053 = vmatprep.subr.mxu0 0.0
    %3054 = vmatpush1.msra.mxu0 0.0
    %3055 = vmatprep.subr.mxu0 0.0
    %3056 = vmatpush1.msra.mxu0 0.0
    %3057 = vmatprep.subr.mxu0 0.0
    %3058 = vmatpush1.msra.mxu0 0.0
    %3059 = vmatprep.subr.mxu0 0.0
    %3060 = vmatpush1.msra.mxu0 %v2890
    %3061 = vmatprep.subr.mxu0 0.0
    %3062 = vmatpush1.msra.mxu0 %v2885
    %3063 = vmatprep.subr.mxu0 0.0
    %3064 = vmatpush2.msra.mxu0 0.0
    %3065 = vmatprep.subr.mxu0 0.0
    %3066 = vmatpush2.msra.mxu0 0.0
    %3067 = vmatprep.subr.mxu0 0.0
    %3068 = vmatpush2.msra.mxu0 0.0
    %3069 = vmatprep.subr.mxu0 0.0
    %3070 = vmatpush2.msra.mxu0 0.0
    %3071 = vmatprep.subr.mxu0 0.0
    %3072 = vmatpush2.msra.mxu0 0.0
    %3073 = vmatprep.subr.mxu0 0.0
    %3074 = vmatpush2.msra.mxu0 0.0
    %3075 = vmatprep.subr.mxu0 0.0
    %3076 = vmatpush2.msra.mxu0 0.0
    %3077 = vmatprep.subr.mxu0 0.0
    %3078 = vmatpush2.msra.mxu0 0.0
    %3079 = vmatprep.subr.mxu0 0.0
    %3080 = vmatpush2.msra.mxu0 0.0
    %3081 = vmatprep.subr.mxu0 0.0
    %3082 = vmatpush2.msra.mxu0 0.0
    %3083 = vmatprep.subr.mxu0 0.0
    %3084 = vmatpush2.msra.mxu0 0.0
    %3085 = vmatprep.subr.mxu0 0.0
    %3086 = vmatpush2.msra.mxu0 0.0
    %3087 = vmatprep.subr.mxu0 0.0
    %3088 = vmatpush2.msra.mxu0 0.0
    %3089 = vmatprep.subr.mxu0 0.0
    %3090 = vmatpush2.msra.mxu0 0.0
    %3091 = vmatprep.subr.mxu0 0.0
    %3092 = vmatpush2.msra.mxu0 0.0
    %3093 = vmatprep.subr.mxu0 0.0
    %3094 = vmatpush2.msra.mxu0 0.0
    %3095 = vmatprep.mubr.f32.mxu0 0.0
    %3096 = vmatmul.mubr.f32.gmra.mxu0 %v3026
    %v3097 = vpop.f32.mrf.mxu0
    %v3098 = vadd.f32 0.0, %v3097
    %v3099 = vpop.f32.mrf.mxu0
    %3100 = vmatprep.mubr.f32.mxu0 0.0
    %3101 = vmatmul.mubr.f32.gmra.mxu0 %v3029
    %v3102 = vpop.f32.mrf.mxu0
    %v3103 = vadd.f32 0.0, %v3102
    %v3104 = vpop.f32.mrf.mxu0
    %3105 = vdwg.mxu0
    %v3106 = vadd.f32 %v3021, 1e-16
    %v3107 = vadd.f32 %v3024, 1e-16
    %v3108 = vrcp.pop %v3106
    %v3109 = vrcp.pop %v3107
    %v3110 = vmul.f32 %v3098, %v3108
    %v3111 = vmul.f32 %v3103, %v3109
    %v3112 = vadd.f32 %v3110, 0.0
    %v3113 = vadd.f32 %v3111, 0.0
    %v3115 = vlaneseq
    %v3116 = vshrl.u32 %v3115, 7
    %v3117 = vsub.s32 0, %v3116
    %v3118 = vrot.slane %v2893, %v3117
    %v3120 = vadd.f32 %v3112, %v3118
    %v3121 = vadd.f32 %v3113, %v3118
    %v3122 = vtanh.pop %v3120
    %v3123 = vtanh.pop %v3121
    %v3124 = vld [vmem:[%s67] sm:$0xff]
    %v3125 = vld [vmem:[%s67 + $0x8] sm:$0xff]
    %v3126 = vld [vmem:[%s67 + $0x10] sm:$0xff]
    %v3127 = vld [vmem:[%s67 + $0x18] sm:$0xff]
    %v3128 = vld [vmem:[%s69] sm:$0x1]
    %v3130 = vlaneseq
    %v3131 = vshrl.u32 %v3130, 7
    %v3132 = vsub.s32 0, %v3131
    %v3133 = vrot.slane %v3128, %v3132
    %v3136 = vsel %vm1088, %v3122, 0
    %v3139 = vsel %vm1088, %v3123, 0
    %3141 = vmatprep.subr.mxu0 0.0
    %3142 = vmatpush1.msra.mxu0 0.0
    %3143 = vmatprep.subr.mxu0 0.0
    %3144 = vmatpush1.msra.mxu0 0.0
    %3145 = vmatprep.subr.mxu0 0.0
    %3146 = vmatpush1.msra.mxu0 0.0
    %3147 = vmatprep.subr.mxu0 0.0
    %3148 = vmatpush1.msra.mxu0 0.0
    %3149 = vmatprep.subr.mxu0 0.0
    %3150 = vmatpush1.msra.mxu0 0.0
    %3151 = vmatprep.subr.mxu0 0.0
    %3152 = vmatpush1.msra.mxu0 0.0
    %3153 = vmatprep.subr.mxu0 0.0
    %3154 = vmatpush1.msra.mxu0 0.0
    %3155 = vmatprep.subr.mxu0 0.0
    %3156 = vmatpush1.msra.mxu0 0.0
    %3157 = vmatprep.subr.mxu0 0.0
    %3158 = vmatpush1.msra.mxu0 0.0
    %3159 = vmatprep.subr.mxu0 0.0
    %3160 = vmatpush1.msra.mxu0 0.0
    %3161 = vmatprep.subr.mxu0 0.0
    %3162 = vmatpush1.msra.mxu0 0.0
    %3163 = vmatprep.subr.mxu0 0.0
    %3164 = vmatpush1.msra.mxu0 0.0
    %3165 = vmatprep.subr.mxu0 0.0
    %3166 = vmatpush1.msra.mxu0 %v3127
    %3167 = vmatprep.subr.mxu0 0.0
    %3168 = vmatpush1.msra.mxu0 %v3126
    %3169 = vmatprep.subr.mxu0 0.0
    %3170 = vmatpush1.msra.mxu0 %v3125
    %3171 = vmatprep.subr.mxu0 0.0
    %3172 = vmatpush1.msra.mxu0 %v3124
    %3173 = vmatprep.subr.mxu0 0.0
    %3174 = vmatpush2.msra.mxu0 0.0
    %3175 = vmatprep.subr.mxu0 0.0
    %3176 = vmatpush2.msra.mxu0 0.0
    %3177 = vmatprep.subr.mxu0 0.0
    %3178 = vmatpush2.msra.mxu0 0.0
    %3179 = vmatprep.subr.mxu0 0.0
    %3180 = vmatpush2.msra.mxu0 0.0
    %3181 = vmatprep.subr.mxu0 0.0
    %3182 = vmatpush2.msra.mxu0 0.0
    %3183 = vmatprep.subr.mxu0 0.0
    %3184 = vmatpush2.msra.mxu0 0.0
    %3185 = vmatprep.subr.mxu0 0.0
    %3186 = vmatpush2.msra.mxu0 0.0
    %3187 = vmatprep.subr.mxu0 0.0
    %3188 = vmatpush2.msra.mxu0 0.0
    %3189 = vmatprep.subr.mxu0 0.0
    %3190 = vmatpush2.msra.mxu0 0.0
    %3191 = vmatprep.subr.mxu0 0.0
    %3192 = vmatpush2.msra.mxu0 0.0
    %3193 = vmatprep.subr.mxu0 0.0
    %3194 = vmatpush2.msra.mxu0 0.0
    %3195 = vmatprep.subr.mxu0 0.0
    %3196 = vmatpush2.msra.mxu0 0.0
    %3197 = vmatprep.subr.mxu0 0.0
    %3198 = vmatpush2.msra.mxu0 0.0
    %3199 = vmatprep.subr.mxu0 0.0
    %3200 = vmatpush2.msra.mxu0 0.0
    %3201 = vmatprep.subr.mxu0 0.0
    %3202 = vmatpush2.msra.mxu0 0.0
    %3203 = vmatprep.subr.mxu0 0.0
    %3204 = vmatpush2.msra.mxu0 0.0
    %3205 = vmatprep.mubr.f32.mxu0 0.0
    %3206 = vmatmul.mubr.f32.gmra.mxu0 %v3136
    %v3207 = vpop.f32.mrf.mxu0
    %v3208 = vadd.f32 %v3133, %v3207
    %v3209 = vpop.f32.mrf.mxu0
    %3210 = vmatprep.mubr.f32.mxu0 0.0
    %3211 = vmatmul.mubr.f32.gmra.mxu0 %v3139
    %v3212 = vpop.f32.mrf.mxu0
    %v3213 = vadd.f32 %v3133, %v3212
    %v3214 = vpop.f32.mrf.mxu0
    %3215 = vdwg.mxu0
    %v3216 = vld [vmem:[%s63] sm:$0x3f]
    %v3217 = vld [vmem:[%s65] sm:$0x1]
    %v3219 = vlaneseq
    %v3220 = vshrl.u32 %v3219, 7
    %v3221 = vsub.s32 0, %v3220
    %v3222 = vrot.slane %v3217, %v3221
    %v3225 = vsel %vm917, %v3216, 0
    %3227 = vmatprep.subr.mxu0 0.0
    %3228 = vmatpush1.msra.mxu0 0.0
    %3229 = vmatprep.subr.mxu0 0.0
    %3230 = vmatpush1.msra.mxu0 0.0
    %3231 = vmatprep.subr.mxu0 0.0
    %3232 = vmatpush1.msra.mxu0 0.0
    %3233 = vmatprep.subr.mxu0 0.0
    %3234 = vmatpush1.msra.mxu0 0.0
    %3235 = vmatprep.subr.mxu0 0.0
    %3236 = vmatpush1.msra.mxu0 0.0
    %3237 = vmatprep.subr.mxu0 0.0
    %3238 = vmatpush1.msra.mxu0 0.0
    %3239 = vmatprep.subr.mxu0 0.0
    %3240 = vmatpush1.msra.mxu0 0.0
    %3241 = vmatprep.subr.mxu0 0.0
    %3242 = vmatpush1.msra.mxu0 0.0
    %3243 = vmatprep.subr.mxu0 0.0
    %3244 = vmatpush1.msra.mxu0 0.0
    %3245 = vmatprep.subr.mxu0 0.0
    %3246 = vmatpush1.msra.mxu0 0.0
    %3247 = vmatprep.subr.mxu0 0.0
    %3248 = vmatpush1.msra.mxu0 0.0
    %3249 = vmatprep.subr.mxu0 0.0
    %3250 = vmatpush1.msra.mxu0 0.0
    %3251 = vmatprep.subr.mxu0 0.0
    %3252 = vmatpush1.msra.mxu0 0.0
    %3253 = vmatprep.subr.mxu0 0.0
    %3254 = vmatpush1.msra.mxu0 0.0
    %3255 = vmatprep.subr.mxu0 0.0
    %3256 = vmatpush1.msra.mxu0 0.0
    %3257 = vmatprep.subr.mxu0 0.0
    %3258 = vmatpush1.msra.mxu0 %v3225
    %3259 = vmatprep.subr.mxu0 0.0
    %3260 = vmatpush2.msra.mxu0 0.0
    %3261 = vmatprep.subr.mxu0 0.0
    %3262 = vmatpush2.msra.mxu0 0.0
    %3263 = vmatprep.subr.mxu0 0.0
    %3264 = vmatpush2.msra.mxu0 0.0
    %3265 = vmatprep.subr.mxu0 0.0
    %3266 = vmatpush2.msra.mxu0 0.0
    %3267 = vmatprep.subr.mxu0 0.0
    %3268 = vmatpush2.msra.mxu0 0.0
    %3269 = vmatprep.subr.mxu0 0.0
    %3270 = vmatpush2.msra.mxu0 0.0
    %3271 = vmatprep.subr.mxu0 0.0
    %3272 = vmatpush2.msra.mxu0 0.0
    %3273 = vmatprep.subr.mxu0 0.0
    %3274 = vmatpush2.msra.mxu0 0.0
    %3275 = vmatprep.subr.mxu0 0.0
    %3276 = vmatpush2.msra.mxu0 0.0
    %3277 = vmatprep.subr.mxu0 0.0
    %3278 = vmatpush2.msra.mxu0 0.0
    %3279 = vmatprep.subr.mxu0 0.0
    %3280 = vmatpush2.msra.mxu0 0.0
    %3281 = vmatprep.subr.mxu0 0.0
    %3282 = vmatpush2.msra.mxu0 0.0
    %3283 = vmatprep.subr.mxu0 0.0
    %3284 = vmatpush2.msra.mxu0 0.0
    %3285 = vmatprep.subr.mxu0 0.0
    %3286 = vmatpush2.msra.mxu0 0.0
    %3287 = vmatprep.subr.mxu0 0.0
    %3288 = vmatpush2.msra.mxu0 0.0
    %3289 = vmatprep.subr.mxu0 0.0
    %3290 = vmatpush2.msra.mxu0 0.0
    %3291 = vmatprep.mubr.f32.mxu0 0.0
    %3292 = vmatmul.mubr.f32.gmra.mxu0 %v912
    %v3293 = vpop.f32.mrf.mxu0
    %v3294 = vadd.f32 %v3222, %v3293
    %v3295 = vpop.f32.mrf.mxu0
    %3296 = vmatprep.mubr.f32.mxu0 0.0
    %3297 = vmatmul.mubr.f32.gmra.mxu0 %v915
    %v3298 = vpop.f32.mrf.mxu0
    %v3299 = vadd.f32 %v3222, %v3298
    %v3300 = vpop.f32.mrf.mxu0
    %3301 = vdwg.mxu0
    %v3302 = vld [vmem:[%s71] sm:$0x1]
    %v3303 = vld [vmem:[%s73] sm:$0x1]
    %v3305 = vsel %vm1088, %v3302, 0
    %v3308 = vsel %vm1088, %v3208, 0
    %v3311 = vsel %vm1088, %v3213, 0
    %3313 = vmatprep.subr.mxu0 0.0
    %3314 = vmatpush1.xpose.msra.mxu0 0.0
    %3315 = vmatprep.subr.mxu0 0.0
    %3316 = vmatpush1.xpose.msra.mxu0 0.0
    %3317 = vmatprep.subr.mxu0 0.0
    %3318 = vmatpush1.xpose.msra.mxu0 0.0
    %3319 = vmatprep.subr.mxu0 0.0
    %3320 = vmatpush1.xpose.msra.mxu0 0.0
    %3321 = vmatprep.subr.mxu0 0.0
    %3322 = vmatpush1.xpose.msra.mxu0 0.0
    %3323 = vmatprep.subr.mxu0 0.0
    %3324 = vmatpush1.xpose.msra.mxu0 0.0
    %3325 = vmatprep.subr.mxu0 0.0
    %3326 = vmatpush1.xpose.msra.mxu0 0.0
    %3327 = vmatprep.subr.mxu0 0.0
    %3328 = vmatpush1.xpose.msra.mxu0 0.0
    %3329 = vmatprep.subr.mxu0 0.0
    %3330 = vmatpush1.xpose.msra.mxu0 0.0
    %3331 = vmatprep.subr.mxu0 0.0
    %3332 = vmatpush1.xpose.msra.mxu0 0.0
    %3333 = vmatprep.subr.mxu0 0.0
    %3334 = vmatpush1.xpose.msra.mxu0 0.0
    %3335 = vmatprep.subr.mxu0 0.0
    %3336 = vmatpush1.xpose.msra.mxu0 0.0
    %3337 = vmatprep.subr.mxu0 0.0
    %3338 = vmatpush1.xpose.msra.mxu0 0.0
    %3339 = vmatprep.subr.mxu0 0.0
    %3340 = vmatpush1.xpose.msra.mxu0 0.0
    %3341 = vmatprep.subr.mxu0 0.0
    %3342 = vmatpush1.xpose.msra.mxu0 %v3311
    %3343 = vmatprep.subr.mxu0 0.0
    %3344 = vmatpush1.xpose.msra.mxu0 %v3308
    %3345 = vmatprep.subr.mxu0 0.0
    %3346 = vmatpush2.xpose.msra.mxu0 0.0
    %3347 = vmatprep.subr.mxu0 0.0
    %3348 = vmatpush2.xpose.msra.mxu0 0.0
    %3349 = vmatprep.subr.mxu0 0.0
    %3350 = vmatpush2.xpose.msra.mxu0 0.0
    %3351 = vmatprep.subr.mxu0 0.0
    %3352 = vmatpush2.xpose.msra.mxu0 0.0
    %3353 = vmatprep.subr.mxu0 0.0
    %3354 = vmatpush2.xpose.msra.mxu0 0.0
    %3355 = vmatprep.subr.mxu0 0.0
    %3356 = vmatpush2.xpose.msra.mxu0 0.0
    %3357 = vmatprep.subr.mxu0 0.0
    %3358 = vmatpush2.xpose.msra.mxu0 0.0
    %3359 = vmatprep.subr.mxu0 0.0
    %3360 = vmatpush2.xpose.msra.mxu0 0.0
    %3361 = vmatprep.subr.mxu0 0.0
    %3362 = vmatpush2.xpose.msra.mxu0 0.0
    %3363 = vmatprep.subr.mxu0 0.0
    %3364 = vmatpush2.xpose.msra.mxu0 0.0
    %3365 = vmatprep.subr.mxu0 0.0
    %3366 = vmatpush2.xpose.msra.mxu0 0.0
    %3367 = vmatprep.subr.mxu0 0.0
    %3368 = vmatpush2.xpose.msra.mxu0 0.0
    %3369 = vmatprep.subr.mxu0 0.0
    %3370 = vmatpush2.xpose.msra.mxu0 0.0
    %3371 = vmatprep.subr.mxu0 0.0
    %3372 = vmatpush2.xpose.msra.mxu0 0.0
    %3373 = vmatprep.subr.mxu0 0.0
    %3374 = vmatpush2.xpose.msra.mxu0 0.0
    %3375 = vmatprep.subr.mxu0 0.0
    %3376 = vmatpush2.xpose.msra.mxu0 0.0
    %3377 = vmatprep.mubr.f32.mxu0 0.0
    %3378 = vmatmul.mubr.f32.gmra.mxu0 %v3305
    %v3379 = vpop.f32.mrf.mxu0
    %v3380 = vadd.f32 0.0, %v3379
    %v3381 = vpop.f32.mrf.mxu0
    %3382 = vdwg.mxu0
    %vm3383 = vcmp.ge.f32.partialorder %v3380, 0.0
    %v3384 = vmul.f32 %v3380, 0.2
    %v3385 = vsel %vm3383, %v3380, %v3384
    %v3386 = vsub.f32 1.0, %v583
    %v3387 = vsub.f32 1.0, %v584
    %v3388 = vmul.f32 %v3386, -1e+30
    %v3389 = vmul.f32 %v3387, -1e+30
    %v3390 = vlaneseq
    %v3391 = vshrl.u32 %v3390, 7
    %v3392 = vsub.s32 0, %v3391
    %v3393 = vrot.slane %v3385, %v3392
    %v3394 = vadd.f32 %v3393, %v3388
    %v3395 = vadd.f32 %v3393, %v3389
    %v3396 = vsel %vm1181, %v3394, -inf
    %3397 = vmax.xlane.f32.xlu0 %v3396
    %v3398 = vpop.xlane.xlu0 %3397
    %v3399 = vsel %vm1181, %v3395, -inf
    %3400 = vmax.xlane.f32.xlu0 %v3399
    %v3401 = vpop.xlane.xlu0 %3400
    %v3402 = vsub.f32 %v3393, %v3398
    %v3403 = vsub.f32 %v3393, %v3401
    %v3404 = vmin.f32 %v3402, 0.0
    %v3405 = vmin.f32 %v3403, 0.0
    %v3406 = vmul.f32 %v3404, 1.442695
    %v3407 = vpow.pop %v3406
    %v3408 = vmul.f32 %v3405, 1.442695
    %v3409 = vpow.pop %v3408
    %v3410 = vmul.f32 %v3407, %v583
    %v3411 = vmul.f32 %v3409, %v584
    %v3412 = vsel %vm1181, %v3410, 0.0
    %3413 = vadd.xlane.f32.xlu0 %v3412
    %v3414 = vpop.xlane.xlu0 %3413
    %v3415 = vsel %vm1181, %v3411, 0.0
    %3416 = vadd.xlane.f32.xlu0 %v3415
    %v3417 = vpop.xlane.xlu0 %3416
    %v3419 = vsel %vm1181, %v3410, 0
    %v3422 = vsel %vm1181, %v3411, 0
    %3424 = vmatprep.subr.mxu0 0.0
    %3425 = vmatpush1.msra.mxu0 0.0
    %3426 = vmatprep.subr.mxu0 0.0
    %3427 = vmatpush1.msra.mxu0 0.0
    %3428 = vmatprep.subr.mxu0 0.0
    %3429 = vmatpush1.msra.mxu0 0.0
    %3430 = vmatprep.subr.mxu0 0.0
    %3431 = vmatpush1.msra.mxu0 0.0
    %3432 = vmatprep.subr.mxu0 0.0
    %3433 = vmatpush1.msra.mxu0 0.0
    %3434 = vmatprep.subr.mxu0 0.0
    %3435 = vmatpush1.msra.mxu0 0.0
    %3436 = vmatprep.subr.mxu0 0.0
    %3437 = vmatpush1.msra.mxu0 0.0
    %3438 = vmatprep.subr.mxu0 0.0
    %3439 = vmatpush1.msra.mxu0 0.0
    %3440 = vmatprep.subr.mxu0 0.0
    %3441 = vmatpush1.msra.mxu0 0.0
    %3442 = vmatprep.subr.mxu0 0.0
    %3443 = vmatpush1.msra.mxu0 0.0
    %3444 = vmatprep.subr.mxu0 0.0
    %3445 = vmatpush1.msra.mxu0 0.0
    %3446 = vmatprep.subr.mxu0 0.0
    %3447 = vmatpush1.msra.mxu0 0.0
    %3448 = vmatprep.subr.mxu0 0.0
    %3449 = vmatpush1.msra.mxu0 0.0
    %3450 = vmatprep.subr.mxu0 0.0
    %3451 = vmatpush1.msra.mxu0 0.0
    %3452 = vmatprep.subr.mxu0 0.0
    %3453 = vmatpush1.msra.mxu0 %v3213
    %3454 = vmatprep.subr.mxu0 0.0
    %3455 = vmatpush1.msra.mxu0 %v3208
    %3456 = vmatprep.subr.mxu0 0.0
    %3457 = vmatpush2.msra.mxu0 0.0
    %3458 = vmatprep.subr.mxu0 0.0
    %3459 = vmatpush2.msra.mxu0 0.0
    %3460 = vmatprep.subr.mxu0 0.0
    %3461 = vmatpush2.msra.mxu0 0.0
    %3462 = vmatprep.subr.mxu0 0.0
    %3463 = vmatpush2.msra.mxu0 0.0
    %3464 = vmatprep.subr.mxu0 0.0
    %3465 = vmatpush2.msra.mxu0 0.0
    %3466 = vmatprep.subr.mxu0 0.0
    %3467 = vmatpush2.msra.mxu0 0.0
    %3468 = vmatprep.subr.mxu0 0.0
    %3469 = vmatpush2.msra.mxu0 0.0
    %3470 = vmatprep.subr.mxu0 0.0
    %3471 = vmatpush2.msra.mxu0 0.0
    %3472 = vmatprep.subr.mxu0 0.0
    %3473 = vmatpush2.msra.mxu0 0.0
    %3474 = vmatprep.subr.mxu0 0.0
    %3475 = vmatpush2.msra.mxu0 0.0
    %3476 = vmatprep.subr.mxu0 0.0
    %3477 = vmatpush2.msra.mxu0 0.0
    %3478 = vmatprep.subr.mxu0 0.0
    %3479 = vmatpush2.msra.mxu0 0.0
    %3480 = vmatprep.subr.mxu0 0.0
    %3481 = vmatpush2.msra.mxu0 0.0
    %3482 = vmatprep.subr.mxu0 0.0
    %3483 = vmatpush2.msra.mxu0 0.0
    %3484 = vmatprep.subr.mxu0 0.0
    %3485 = vmatpush2.msra.mxu0 0.0
    %3486 = vmatprep.subr.mxu0 0.0
    %3487 = vmatpush2.msra.mxu0 0.0
    %3488 = vmatprep.mubr.f32.mxu0 0.0
    %3489 = vmatmul.mubr.f32.gmra.mxu0 %v3419
    %v3490 = vpop.f32.mrf.mxu0
    %v3491 = vadd.f32 0.0, %v3490
    %v3492 = vpop.f32.mrf.mxu0
    %3493 = vmatprep.mubr.f32.mxu0 0.0
    %3494 = vmatmul.mubr.f32.gmra.mxu0 %v3422
    %v3495 = vpop.f32.mrf.mxu0
    %v3496 = vadd.f32 0.0, %v3495
    %v3497 = vpop.f32.mrf.mxu0
    %3498 = vdwg.mxu0
    %v3499 = vadd.f32 %v3414, 1e-16
    %v3500 = vadd.f32 %v3417, 1e-16
    %v3501 = vrcp.pop %v3499
    %v3502 = vrcp.pop %v3500
    %v3503 = vmul.f32 %v3491, %v3501
    %v3504 = vmul.f32 %v3496, %v3502
    %v3506 = vlaneseq
    %v3507 = vshrl.u32 %v3506, 7
    %v3508 = vsub.s32 0, %v3507
    %v3509 = vrot.slane %v3303, %v3508
    %v3511 = vadd.f32 %v3503, %v3509
    %v3512 = vadd.f32 %v3504, %v3509
    %v3513 = vadd.f32 %v3511, %v3294
    %v3514 = vadd.f32 %v3512, %v3299
    %v3515 = vmax.f32 %v3513, 0.0
    %v3516 = vmax.f32 %v3514, 0.0
    %v3517 = vld [vmem:[%s79] sm:$0xff]
    %v3518 = vld [vmem:[%s79 + $0x8] sm:$0xff]
    %v3519 = vld [vmem:[%s79 + $0x10] sm:$0xff]
    %v3520 = vld [vmem:[%s79 + $0x18] sm:$0xff]
    %v3521 = vld [vmem:[%s81] sm:$0x1]
    %v3523 = vlaneseq
    %v3524 = vshrl.u32 %v3523, 7
    %v3525 = vsub.s32 0, %v3524
    %v3526 = vrot.slane %v3521, %v3525
    %3528 = vmatprep.subr.mxu0 0.0
    %3529 = vmatpush1.msra.mxu0 0.0
    %3530 = vmatprep.subr.mxu0 0.0
    %3531 = vmatpush1.msra.mxu0 0.0
    %3532 = vmatprep.subr.mxu0 0.0
    %3533 = vmatpush1.msra.mxu0 0.0
    %3534 = vmatprep.subr.mxu0 0.0
    %3535 = vmatpush1.msra.mxu0 0.0
    %3536 = vmatprep.subr.mxu0 0.0
    %3537 = vmatpush1.msra.mxu0 0.0
    %3538 = vmatprep.subr.mxu0 0.0
    %3539 = vmatpush1.msra.mxu0 0.0
    %3540 = vmatprep.subr.mxu0 0.0
    %3541 = vmatpush1.msra.mxu0 0.0
    %3542 = vmatprep.subr.mxu0 0.0
    %3543 = vmatpush1.msra.mxu0 0.0
    %3544 = vmatprep.subr.mxu0 0.0
    %3545 = vmatpush1.msra.mxu0 0.0
    %3546 = vmatprep.subr.mxu0 0.0
    %3547 = vmatpush1.msra.mxu0 0.0
    %3548 = vmatprep.subr.mxu0 0.0
    %3549 = vmatpush1.msra.mxu0 0.0
    %3550 = vmatprep.subr.mxu0 0.0
    %3551 = vmatpush1.msra.mxu0 0.0
    %3552 = vmatprep.subr.mxu0 0.0
    %3553 = vmatpush1.msra.mxu0 %v3520
    %3554 = vmatprep.subr.mxu0 0.0
    %3555 = vmatpush1.msra.mxu0 %v3519
    %3556 = vmatprep.subr.mxu0 0.0
    %3557 = vmatpush1.msra.mxu0 %v3518
    %3558 = vmatprep.subr.mxu0 0.0
    %3559 = vmatpush1.msra.mxu0 %v3517
    %3560 = vmatprep.subr.mxu0 0.0
    %3561 = vmatpush2.msra.mxu0 0.0
    %3562 = vmatprep.subr.mxu0 0.0
    %3563 = vmatpush2.msra.mxu0 0.0
    %3564 = vmatprep.subr.mxu0 0.0
    %3565 = vmatpush2.msra.mxu0 0.0
    %3566 = vmatprep.subr.mxu0 0.0
    %3567 = vmatpush2.msra.mxu0 0.0
    %3568 = vmatprep.subr.mxu0 0.0
    %3569 = vmatpush2.msra.mxu0 0.0
    %3570 = vmatprep.subr.mxu0 0.0
    %3571 = vmatpush2.msra.mxu0 0.0
    %3572 = vmatprep.subr.mxu0 0.0
    %3573 = vmatpush2.msra.mxu0 0.0
    %3574 = vmatprep.subr.mxu0 0.0
    %3575 = vmatpush2.msra.mxu0 0.0
    %3576 = vmatprep.subr.mxu0 0.0
    %3577 = vmatpush2.msra.mxu0 0.0
    %3578 = vmatprep.subr.mxu0 0.0
    %3579 = vmatpush2.msra.mxu0 0.0
    %3580 = vmatprep.subr.mxu0 0.0
    %3581 = vmatpush2.msra.mxu0 0.0
    %3582 = vmatprep.subr.mxu0 0.0
    %3583 = vmatpush2.msra.mxu0 0.0
    %3584 = vmatprep.subr.mxu0 0.0
    %3585 = vmatpush2.msra.mxu0 0.0
    %3586 = vmatprep.subr.mxu0 0.0
    %3587 = vmatpush2.msra.mxu0 0.0
    %3588 = vmatprep.subr.mxu0 0.0
    %3589 = vmatpush2.msra.mxu0 0.0
    %3590 = vmatprep.subr.mxu0 0.0
    %3591 = vmatpush2.msra.mxu0 0.0
    %3592 = vmatprep.mubr.f32.mxu0 0.0
    %3593 = vmatmul.mubr.f32.gmra.mxu0 %v3136
    %v3594 = vpop.f32.mrf.mxu0
    %v3595 = vadd.f32 %v3526, %v3594
    %v3596 = vpop.f32.mrf.mxu0
    %3597 = vmatprep.mubr.f32.mxu0 0.0
    %3598 = vmatmul.mubr.f32.gmra.mxu0 %v3139
    %v3599 = vpop.f32.mrf.mxu0
    %v3600 = vadd.f32 %v3526, %v3599
    %v3601 = vpop.f32.mrf.mxu0
    %3602 = vdwg.mxu0
    %v3603 = vld [vmem:[%s75] sm:$0x1f]
    %v3604 = vld [vmem:[%s77] sm:$0x1]
    %v3606 = vlaneseq
    %v3607 = vshrl.u32 %v3606, 7
    %v3608 = vsub.s32 0, %v3607
    %v3609 = vrot.slane %v3604, %v3608
    %v3612 = vsel %vm1318, %v3603, 0
    %3614 = vmatprep.subr.mxu0 0.0
    %3615 = vmatpush1.msra.mxu0 0.0
    %3616 = vmatprep.subr.mxu0 0.0
    %3617 = vmatpush1.msra.mxu0 0.0
    %3618 = vmatprep.subr.mxu0 0.0
    %3619 = vmatpush1.msra.mxu0 0.0
    %3620 = vmatprep.subr.mxu0 0.0
    %3621 = vmatpush1.msra.mxu0 0.0
    %3622 = vmatprep.subr.mxu0 0.0
    %3623 = vmatpush1.msra.mxu0 0.0
    %3624 = vmatprep.subr.mxu0 0.0
    %3625 = vmatpush1.msra.mxu0 0.0
    %3626 = vmatprep.subr.mxu0 0.0
    %3627 = vmatpush1.msra.mxu0 0.0
    %3628 = vmatprep.subr.mxu0 0.0
    %3629 = vmatpush1.msra.mxu0 0.0
    %3630 = vmatprep.subr.mxu0 0.0
    %3631 = vmatpush1.msra.mxu0 0.0
    %3632 = vmatprep.subr.mxu0 0.0
    %3633 = vmatpush1.msra.mxu0 0.0
    %3634 = vmatprep.subr.mxu0 0.0
    %3635 = vmatpush1.msra.mxu0 0.0
    %3636 = vmatprep.subr.mxu0 0.0
    %3637 = vmatpush1.msra.mxu0 0.0
    %3638 = vmatprep.subr.mxu0 0.0
    %3639 = vmatpush1.msra.mxu0 0.0
    %3640 = vmatprep.subr.mxu0 0.0
    %3641 = vmatpush1.msra.mxu0 0.0
    %3642 = vmatprep.subr.mxu0 0.0
    %3643 = vmatpush1.msra.mxu0 0.0
    %3644 = vmatprep.subr.mxu0 0.0
    %3645 = vmatpush1.msra.mxu0 %v3612
    %3646 = vmatprep.subr.mxu0 0.0
    %3647 = vmatpush2.msra.mxu0 0.0
    %3648 = vmatprep.subr.mxu0 0.0
    %3649 = vmatpush2.msra.mxu0 0.0
    %3650 = vmatprep.subr.mxu0 0.0
    %3651 = vmatpush2.msra.mxu0 0.0
    %3652 = vmatprep.subr.mxu0 0.0
    %3653 = vmatpush2.msra.mxu0 0.0
    %3654 = vmatprep.subr.mxu0 0.0
    %3655 = vmatpush2.msra.mxu0 0.0
    %3656 = vmatprep.subr.mxu0 0.0
    %3657 = vmatpush2.msra.mxu0 0.0
    %3658 = vmatprep.subr.mxu0 0.0
    %3659 = vmatpush2.msra.mxu0 0.0
    %3660 = vmatprep.subr.mxu0 0.0
    %3661 = vmatpush2.msra.mxu0 0.0
    %3662 = vmatprep.subr.mxu0 0.0
    %3663 = vmatpush2.msra.mxu0 0.0
    %3664 = vmatprep.subr.mxu0 0.0
    %3665 = vmatpush2.msra.mxu0 0.0
    %3666 = vmatprep.subr.mxu0 0.0
    %3667 = vmatpush2.msra.mxu0 0.0
    %3668 = vmatprep.subr.mxu0 0.0
    %3669 = vmatpush2.msra.mxu0 0.0
    %3670 = vmatprep.subr.mxu0 0.0
    %3671 = vmatpush2.msra.mxu0 0.0
    %3672 = vmatprep.subr.mxu0 0.0
    %3673 = vmatpush2.msra.mxu0 0.0
    %3674 = vmatprep.subr.mxu0 0.0
    %3675 = vmatpush2.msra.mxu0 0.0
    %3676 = vmatprep.subr.mxu0 0.0
    %3677 = vmatpush2.msra.mxu0 0.0
    %3678 = vmatprep.mubr.f32.mxu0 0.0
    %3679 = vmatmul.mubr.f32.gmra.mxu0 %v1313
    %v3680 = vpop.f32.mrf.mxu0
    %v3681 = vadd.f32 %v3609, %v3680
    %v3682 = vpop.f32.mrf.mxu0
    %3683 = vmatprep.mubr.f32.mxu0 0.0
    %3684 = vmatmul.mubr.f32.gmra.mxu0 %v1316
    %v3685 = vpop.f32.mrf.mxu0
    %v3686 = vadd.f32 %v3609, %v3685
    %v3687 = vpop.f32.mrf.mxu0
    %3688 = vdwg.mxu0
    %v3689 = vld [vmem:[%s83] sm:$0x1]
    %v3690 = vld [vmem:[%s85] sm:$0x1]
    %v3692 = vsel %vm1088, %v3689, 0
    %v3695 = vsel %vm1088, %v3595, 0
    %v3698 = vsel %vm1088, %v3600, 0
    %3700 = vmatprep.subr.mxu0 0.0
    %3701 = vmatpush1.xpose.msra.mxu0 0.0
    %3702 = vmatprep.subr.mxu0 0.0
    %3703 = vmatpush1.xpose.msra.mxu0 0.0
    %3704 = vmatprep.subr.mxu0 0.0
    %3705 = vmatpush1.xpose.msra.mxu0 0.0
    %3706 = vmatprep.subr.mxu0 0.0
    %3707 = vmatpush1.xpose.msra.mxu0 0.0
    %3708 = vmatprep.subr.mxu0 0.0
    %3709 = vmatpush1.xpose.msra.mxu0 0.0
    %3710 = vmatprep.subr.mxu0 0.0
    %3711 = vmatpush1.xpose.msra.mxu0 0.0
    %3712 = vmatprep.subr.mxu0 0.0
    %3713 = vmatpush1.xpose.msra.mxu0 0.0
    %3714 = vmatprep.subr.mxu0 0.0
    %3715 = vmatpush1.xpose.msra.mxu0 0.0
    %3716 = vmatprep.subr.mxu0 0.0
    %3717 = vmatpush1.xpose.msra.mxu0 0.0
    %3718 = vmatprep.subr.mxu0 0.0
    %3719 = vmatpush1.xpose.msra.mxu0 0.0
    %3720 = vmatprep.subr.mxu0 0.0
    %3721 = vmatpush1.xpose.msra.mxu0 0.0
    %3722 = vmatprep.subr.mxu0 0.0
    %3723 = vmatpush1.xpose.msra.mxu0 0.0
    %3724 = vmatprep.subr.mxu0 0.0
    %3725 = vmatpush1.xpose.msra.mxu0 0.0
    %3726 = vmatprep.subr.mxu0 0.0
    %3727 = vmatpush1.xpose.msra.mxu0 0.0
    %3728 = vmatprep.subr.mxu0 0.0
    %3729 = vmatpush1.xpose.msra.mxu0 %v3698
    %3730 = vmatprep.subr.mxu0 0.0
    %3731 = vmatpush1.xpose.msra.mxu0 %v3695
    %3732 = vmatprep.subr.mxu0 0.0
    %3733 = vmatpush2.xpose.msra.mxu0 0.0
    %3734 = vmatprep.subr.mxu0 0.0
    %3735 = vmatpush2.xpose.msra.mxu0 0.0
    %3736 = vmatprep.subr.mxu0 0.0
    %3737 = vmatpush2.xpose.msra.mxu0 0.0
    %3738 = vmatprep.subr.mxu0 0.0
    %3739 = vmatpush2.xpose.msra.mxu0 0.0
    %3740 = vmatprep.subr.mxu0 0.0
    %3741 = vmatpush2.xpose.msra.mxu0 0.0
    %3742 = vmatprep.subr.mxu0 0.0
    %3743 = vmatpush2.xpose.msra.mxu0 0.0
    %3744 = vmatprep.subr.mxu0 0.0
    %3745 = vmatpush2.xpose.msra.mxu0 0.0
    %3746 = vmatprep.subr.mxu0 0.0
    %3747 = vmatpush2.xpose.msra.mxu0 0.0
    %3748 = vmatprep.subr.mxu0 0.0
    %3749 = vmatpush2.xpose.msra.mxu0 0.0
    %3750 = vmatprep.subr.mxu0 0.0
    %3751 = vmatpush2.xpose.msra.mxu0 0.0
    %3752 = vmatprep.subr.mxu0 0.0
    %3753 = vmatpush2.xpose.msra.mxu0 0.0
    %3754 = vmatprep.subr.mxu0 0.0
    %3755 = vmatpush2.xpose.msra.mxu0 0.0
    %3756 = vmatprep.subr.mxu0 0.0
    %3757 = vmatpush2.xpose.msra.mxu0 0.0
    %3758 = vmatprep.subr.mxu0 0.0
    %3759 = vmatpush2.xpose.msra.mxu0 0.0
    %3760 = vmatprep.subr.mxu0 0.0
    %3761 = vmatpush2.xpose.msra.mxu0 0.0
    %3762 = vmatprep.subr.mxu0 0.0
    %3763 = vmatpush2.xpose.msra.mxu0 0.0
    %3764 = vmatprep.mubr.f32.mxu0 0.0
    %3765 = vmatmul.mubr.f32.gmra.mxu0 %v3692
    %v3766 = vpop.f32.mrf.mxu0
    %v3767 = vadd.f32 0.0, %v3766
    %v3768 = vpop.f32.mrf.mxu0
    %3769 = vdwg.mxu0
    %vm3770 = vcmp.ge.f32.partialorder %v3767, 0.0
    %v3771 = vmul.f32 %v3767, 0.2
    %v3772 = vsel %vm3770, %v3767, %v3771
    %v3773 = vsub.f32 1.0, %v772
    %v3774 = vsub.f32 1.0, %v773
    %v3775 = vmul.f32 %v3773, -1e+30
    %v3776 = vmul.f32 %v3774, -1e+30
    %v3777 = vlaneseq
    %v3778 = vshrl.u32 %v3777, 7
    %v3779 = vsub.s32 0, %v3778
    %v3780 = vrot.slane %v3772, %v3779
    %v3781 = vadd.f32 %v3780, %v3775
    %v3782 = vadd.f32 %v3780, %v3776
    %v3783 = vsel %vm1181, %v3781, -inf
    %3784 = vmax.xlane.f32.xlu0 %v3783
    %v3785 = vpop.xlane.xlu0 %3784
    %v3786 = vsel %vm1181, %v3782, -inf
    %3787 = vmax.xlane.f32.xlu0 %v3786
    %v3788 = vpop.xlane.xlu0 %3787
    %v3789 = vsub.f32 %v3780, %v3785
    %v3790 = vsub.f32 %v3780, %v3788
    %v3791 = vmin.f32 %v3789, 0.0
    %v3792 = vmin.f32 %v3790, 0.0
    %v3793 = vmul.f32 %v3791, 1.442695
    %v3794 = vpow.pop %v3793
    %v3795 = vmul.f32 %v3792, 1.442695
    %v3796 = vpow.pop %v3795
    %v3797 = vmul.f32 %v3794, %v772
    %v3798 = vmul.f32 %v3796, %v773
    %v3799 = vsel %vm1181, %v3797, 0.0
    %3800 = vadd.xlane.f32.xlu0 %v3799
    %v3801 = vpop.xlane.xlu0 %3800
    %v3802 = vsel %vm1181, %v3798, 0.0
    %3803 = vadd.xlane.f32.xlu0 %v3802
    %v3804 = vpop.xlane.xlu0 %3803
    %v3806 = vsel %vm1181, %v3797, 0
    %v3809 = vsel %vm1181, %v3798, 0
    %3811 = vmatprep.subr.mxu0 0.0
    %3812 = vmatpush1.msra.mxu0 0.0
    %3813 = vmatprep.subr.mxu0 0.0
    %3814 = vmatpush1.msra.mxu0 0.0
    %3815 = vmatprep.subr.mxu0 0.0
    %3816 = vmatpush1.msra.mxu0 0.0
    %3817 = vmatprep.subr.mxu0 0.0
    %3818 = vmatpush1.msra.mxu0 0.0
    %3819 = vmatprep.subr.mxu0 0.0
    %3820 = vmatpush1.msra.mxu0 0.0
    %3821 = vmatprep.subr.mxu0 0.0
    %3822 = vmatpush1.msra.mxu0 0.0
    %3823 = vmatprep.subr.mxu0 0.0
    %3824 = vmatpush1.msra.mxu0 0.0
    %3825 = vmatprep.subr.mxu0 0.0
    %3826 = vmatpush1.msra.mxu0 0.0
    %3827 = vmatprep.subr.mxu0 0.0
    %3828 = vmatpush1.msra.mxu0 0.0
    %3829 = vmatprep.subr.mxu0 0.0
    %3830 = vmatpush1.msra.mxu0 0.0
    %3831 = vmatprep.subr.mxu0 0.0
    %3832 = vmatpush1.msra.mxu0 0.0
    %3833 = vmatprep.subr.mxu0 0.0
    %3834 = vmatpush1.msra.mxu0 0.0
    %3835 = vmatprep.subr.mxu0 0.0
    %3836 = vmatpush1.msra.mxu0 0.0
    %3837 = vmatprep.subr.mxu0 0.0
    %3838 = vmatpush1.msra.mxu0 0.0
    %3839 = vmatprep.subr.mxu0 0.0
    %3840 = vmatpush1.msra.mxu0 %v3600
    %3841 = vmatprep.subr.mxu0 0.0
    %3842 = vmatpush1.msra.mxu0 %v3595
    %3843 = vmatprep.subr.mxu0 0.0
    %3844 = vmatpush2.msra.mxu0 0.0
    %3845 = vmatprep.subr.mxu0 0.0
    %3846 = vmatpush2.msra.mxu0 0.0
    %3847 = vmatprep.subr.mxu0 0.0
    %3848 = vmatpush2.msra.mxu0 0.0
    %3849 = vmatprep.subr.mxu0 0.0
    %3850 = vmatpush2.msra.mxu0 0.0
    %3851 = vmatprep.subr.mxu0 0.0
    %3852 = vmatpush2.msra.mxu0 0.0
    %3853 = vmatprep.subr.mxu0 0.0
    %3854 = vmatpush2.msra.mxu0 0.0
    %3855 = vmatprep.subr.mxu0 0.0
    %3856 = vmatpush2.msra.mxu0 0.0
    %3857 = vmatprep.subr.mxu0 0.0
    %3858 = vmatpush2.msra.mxu0 0.0
    %3859 = vmatprep.subr.mxu0 0.0
    %3860 = vmatpush2.msra.mxu0 0.0
    %3861 = vmatprep.subr.mxu0 0.0
    %3862 = vmatpush2.msra.mxu0 0.0
    %3863 = vmatprep.subr.mxu0 0.0
    %3864 = vmatpush2.msra.mxu0 0.0
    %3865 = vmatprep.subr.mxu0 0.0
    %3866 = vmatpush2.msra.mxu0 0.0
    %3867 = vmatprep.subr.mxu0 0.0
    %3868 = vmatpush2.msra.mxu0 0.0
    %3869 = vmatprep.subr.mxu0 0.0
    %3870 = vmatpush2.msra.mxu0 0.0
    %3871 = vmatprep.subr.mxu0 0.0
    %3872 = vmatpush2.msra.mxu0 0.0
    %3873 = vmatprep.subr.mxu0 0.0
    %3874 = vmatpush2.msra.mxu0 0.0
    %3875 = vmatprep.mubr.f32.mxu0 0.0
    %3876 = vmatmul.mubr.f32.gmra.mxu0 %v3806
    %v3877 = vpop.f32.mrf.mxu0
    %v3878 = vadd.f32 0.0, %v3877
    %v3879 = vpop.f32.mrf.mxu0
    %3880 = vmatprep.mubr.f32.mxu0 0.0
    %3881 = vmatmul.mubr.f32.gmra.mxu0 %v3809
    %v3882 = vpop.f32.mrf.mxu0
    %v3883 = vadd.f32 0.0, %v3882
    %v3884 = vpop.f32.mrf.mxu0
    %3885 = vdwg.mxu0
    %v3886 = vadd.f32 %v3801, 1e-16
    %v3887 = vadd.f32 %v3804, 1e-16
    %v3888 = vrcp.pop %v3886
    %v3889 = vrcp.pop %v3887
    %v3890 = vmul.f32 %v3878, %v3888
    %v3891 = vmul.f32 %v3883, %v3889
    %v3893 = vlaneseq
    %v3894 = vshrl.u32 %v3893, 7
    %v3895 = vsub.s32 0, %v3894
    %v3896 = vrot.slane %v3690, %v3895
    %v3898 = vadd.f32 %v3890, %v3896
    %v3899 = vadd.f32 %v3891, %v3896
    %v3900 = vadd.f32 %v3898, %v3681
    %v3901 = vadd.f32 %v3899, %v3686
    %v3902 = vmax.f32 %v3900, 0.0
    %v3903 = vmax.f32 %v3901, 0.0
    %v3904 = vld [vmem:[%s13] sm:$0xff]
    %3905 = vset.pattern.permute.xlu0 0
    %3906 = vperm.xlu0 %3905, %v3904
    %v3907 = vpop.permute.xlu0 %3906
    %vm3908 = vcmp.eq.s32.totalorder %v3907, %v887
    %v3909 = vsel %vm3908, 1, 0
    %v3910 = vcvt.s32.f32 %v3909
    %v3911 = vld [vmem:[%s15] sm:$0xff]
    %3912 = vset.pattern.permute.xlu0 0
    %3913 = vperm.xlu0 %3912, %v3911
    %v3914 = vpop.permute.xlu0 %3913
    %vm3915 = vcmp.eq.s32.totalorder %v3914, %v887
    %v3916 = vsel %vm3915, 1, 0
    %v3917 = vcvt.s32.f32 %v3916
    %v3919 = vsel %vm1181, %v3910, 0
    %3921 = vmatprep.subr.mxu0 0.0
    %3922 = vmatpush1.msra.mxu0 0.0
    %3923 = vmatprep.subr.mxu0 0.0
    %3924 = vmatpush1.msra.mxu0 0.0
    %3925 = vmatprep.subr.mxu0 0.0
    %3926 = vmatpush1.msra.mxu0 0.0
    %3927 = vmatprep.subr.mxu0 0.0
    %3928 = vmatpush1.msra.mxu0 0.0
    %3929 = vmatprep.subr.mxu0 0.0
    %3930 = vmatpush1.msra.mxu0 0.0
    %3931 = vmatprep.subr.mxu0 0.0
    %3932 = vmatpush1.msra.mxu0 0.0
    %3933 = vmatprep.subr.mxu0 0.0
    %3934 = vmatpush1.msra.mxu0 0.0
    %3935 = vmatprep.subr.mxu0 0.0
    %3936 = vmatpush1.msra.mxu0 0.0
    %3937 = vmatprep.subr.mxu0 0.0
    %3938 = vmatpush1.msra.mxu0 0.0
    %3939 = vmatprep.subr.mxu0 0.0
    %3940 = vmatpush1.msra.mxu0 0.0
    %3941 = vmatprep.subr.mxu0 0.0
    %3942 = vmatpush1.msra.mxu0 0.0
    %3943 = vmatprep.subr.mxu0 0.0
    %3944 = vmatpush1.msra.mxu0 0.0
    %3945 = vmatprep.subr.mxu0 0.0
    %3946 = vmatpush1.msra.mxu0 0.0
    %3947 = vmatprep.subr.mxu0 0.0
    %3948 = vmatpush1.msra.mxu0 0.0
    %3949 = vmatprep.subr.mxu0 0.0
    %3950 = vmatpush1.msra.mxu0 %v3516
    %3951 = vmatprep.subr.mxu0 0.0
    %3952 = vmatpush1.msra.mxu0 %v3515
    %3953 = vmatprep.subr.mxu0 0.0
    %3954 = vmatpush2.msra.mxu0 0.0
    %3955 = vmatprep.subr.mxu0 0.0
    %3956 = vmatpush2.msra.mxu0 0.0
    %3957 = vmatprep.subr.mxu0 0.0
    %3958 = vmatpush2.msra.mxu0 0.0
    %3959 = vmatprep.subr.mxu0 0.0
    %3960 = vmatpush2.msra.mxu0 0.0
    %3961 = vmatprep.subr.mxu0 0.0
    %3962 = vmatpush2.msra.mxu0 0.0
    %3963 = vmatprep.subr.mxu0 0.0
    %3964 = vmatpush2.msra.mxu0 0.0
    %3965 = vmatprep.subr.mxu0 0.0
    %3966 = vmatpush2.msra.mxu0 0.0
    %3967 = vmatprep.subr.mxu0 0.0
    %3968 = vmatpush2.msra.mxu0 0.0
    %3969 = vmatprep.subr.mxu0 0.0
    %3970 = vmatpush2.msra.mxu0 0.0
    %3971 = vmatprep.subr.mxu0 0.0
    %3972 = vmatpush2.msra.mxu0 0.0
    %3973 = vmatprep.subr.mxu0 0.0
    %3974 = vmatpush2.msra.mxu0 0.0
    %3975 = vmatprep.subr.mxu0 0.0
    %3976 = vmatpush2.msra.mxu0 0.0
    %3977 = vmatprep.subr.mxu0 0.0
    %3978 = vmatpush2.msra.mxu0 0.0
    %3979 = vmatprep.subr.mxu0 0.0
    %3980 = vmatpush2.msra.mxu0 0.0
    %3981 = vmatprep.subr.mxu0 0.0
    %3982 = vmatpush2.msra.mxu0 0.0
    %3983 = vmatprep.subr.mxu0 0.0
    %3984 = vmatpush2.msra.mxu0 0.0
    %3985 = vmatprep.mubr.f32.mxu0 0.0
    %3986 = vmatmul.mubr.f32.gmra.mxu0 %v3919
    %v3987 = vpop.f32.mrf.mxu0
    %v3988 = vadd.f32 0.0, %v3987
    %v3989 = vpop.f32.mrf.mxu0
    %3990 = vdwg.mxu0
    %v3992 = vsel %vm1181, %v3917, 0
    %3994 = vmatprep.subr.mxu0 0.0
    %3995 = vmatpush1.msra.mxu0 0.0
    %3996 = vmatprep.subr.mxu0 0.0
    %3997 = vmatpush1.msra.mxu0 0.0
    %3998 = vmatprep.subr.mxu0 0.0
    %3999 = vmatpush1.msra.mxu0 0.0
    %4000 = vmatprep.subr.mxu0 0.0
    %4001 = vmatpush1.msra.mxu0 0.0
    %4002 = vmatprep.subr.mxu0 0.0
    %4003 = vmatpush1.msra.mxu0 0.0
    %4004 = vmatprep.subr.mxu0 0.0
    %4005 = vmatpush1.msra.mxu0 0.0
    %4006 = vmatprep.subr.mxu0 0.0
    %4007 = vmatpush1.msra.mxu0 0.0
    %4008 = vmatprep.subr.mxu0 0.0
    %4009 = vmatpush1.msra.mxu0 0.0
    %4010 = vmatprep.subr.mxu0 0.0
    %4011 = vmatpush1.msra.mxu0 0.0
    %4012 = vmatprep.subr.mxu0 0.0
    %4013 = vmatpush1.msra.mxu0 0.0
    %4014 = vmatprep.subr.mxu0 0.0
    %4015 = vmatpush1.msra.mxu0 0.0
    %4016 = vmatprep.subr.mxu0 0.0
    %4017 = vmatpush1.msra.mxu0 0.0
    %4018 = vmatprep.subr.mxu0 0.0
    %4019 = vmatpush1.msra.mxu0 0.0
    %4020 = vmatprep.subr.mxu0 0.0
    %4021 = vmatpush1.msra.mxu0 0.0
    %4022 = vmatprep.subr.mxu0 0.0
    %4023 = vmatpush1.msra.mxu0 %v3903
    %4024 = vmatprep.subr.mxu0 0.0
    %4025 = vmatpush1.msra.mxu0 %v3902
    %4026 = vmatprep.subr.mxu0 0.0
    %4027 = vmatpush2.msra.mxu0 0.0
    %4028 = vmatprep.subr.mxu0 0.0
    %4029 = vmatpush2.msra.mxu0 0.0
    %4030 = vmatprep.subr.mxu0 0.0
    %4031 = vmatpush2.msra.mxu0 0.0
    %4032 = vmatprep.subr.mxu0 0.0
    %4033 = vmatpush2.msra.mxu0 0.0
    %4034 = vmatprep.subr.mxu0 0.0
    %4035 = vmatpush2.msra.mxu0 0.0
    %4036 = vmatprep.subr.mxu0 0.0
    %4037 = vmatpush2.msra.mxu0 0.0
    %4038 = vmatprep.subr.mxu0 0.0
    %4039 = vmatpush2.msra.mxu0 0.0
    %4040 = vmatprep.subr.mxu0 0.0
    %4041 = vmatpush2.msra.mxu0 0.0
    %4042 = vmatprep.subr.mxu0 0.0
    %4043 = vmatpush2.msra.mxu0 0.0
    %4044 = vmatprep.subr.mxu0 0.0
    %4045 = vmatpush2.msra.mxu0 0.0
    %4046 = vmatprep.subr.mxu0 0.0
    %4047 = vmatpush2.msra.mxu0 0.0
    %4048 = vmatprep.subr.mxu0 0.0
    %4049 = vmatpush2.msra.mxu0 0.0
    %4050 = vmatprep.subr.mxu0 0.0
    %4051 = vmatpush2.msra.mxu0 0.0
    %4052 = vmatprep.subr.mxu0 0.0
    %4053 = vmatpush2.msra.mxu0 0.0
    %4054 = vmatprep.subr.mxu0 0.0
    %4055 = vmatpush2.msra.mxu0 0.0
    %4056 = vmatprep.subr.mxu0 0.0
    %4057 = vmatpush2.msra.mxu0 0.0
    %4058 = vmatprep.mubr.f32.mxu0 0.0
    %4059 = vmatmul.mubr.f32.gmra.mxu0 %v3992
    %v4060 = vpop.f32.mrf.mxu0
    %v4061 = vadd.f32 0.0, %v4060
    %v4062 = vpop.f32.mrf.mxu0
    %4063 = vdwg.mxu0
    %v4064 = vld [vmem:[%s87] sm:$0xff]
    %v4065 = vld [vmem:[%s87 + $0x8] sm:$0xff]
    %v4066 = vld [vmem:[%s87 + $0x10] sm:$0xff]
    %v4067 = vld [vmem:[%s87 + $0x18] sm:$0xff]
    %v4068 = vld [vmem:[%s87 + $0x20] sm:$0xff]
    %v4069 = vld [vmem:[%s87 + $0x28] sm:$0xff]
    %v4070 = vld [vmem:[%s87 + $0x30] sm:$0xff]
    %v4071 = vld [vmem:[%s87 + $0x38] sm:$0xff]
    %v4073 = vsel %vm1088, %v4061, 0
    %4075 = vmatprep.subr.mxu0 0.0
    %4076 = vmatpush1.msra.mxu0 0.0
    %4077 = vmatprep.subr.mxu0 0.0
    %4078 = vmatpush1.msra.mxu0 0.0
    %4079 = vmatprep.subr.mxu0 0.0
    %4080 = vmatpush1.msra.mxu0 0.0
    %4081 = vmatprep.subr.mxu0 0.0
    %4082 = vmatpush1.msra.mxu0 0.0
    %4083 = vmatprep.subr.mxu0 0.0
    %4084 = vmatpush1.msra.mxu0 0.0
    %4085 = vmatprep.subr.mxu0 0.0
    %4086 = vmatpush1.msra.mxu0 0.0
    %4087 = vmatprep.subr.mxu0 0.0
    %4088 = vmatpush1.msra.mxu0 0.0
    %4089 = vmatprep.subr.mxu0 0.0
    %4090 = vmatpush1.msra.mxu0 0.0
    %4091 = vmatprep.subr.mxu0 0.0
    %4092 = vmatpush1.msra.mxu0 0.0
    %4093 = vmatprep.subr.mxu0 0.0
    %4094 = vmatpush1.msra.mxu0 0.0
    %4095 = vmatprep.subr.mxu0 0.0
    %4096 = vmatpush1.msra.mxu0 0.0
    %4097 = vmatprep.subr.mxu0 0.0
    %4098 = vmatpush1.msra.mxu0 0.0
    %4099 = vmatprep.subr.mxu0 0.0
    %4100 = vmatpush1.msra.mxu0 %v4071
    %4101 = vmatprep.subr.mxu0 0.0
    %4102 = vmatpush1.msra.mxu0 %v4070
    %4103 = vmatprep.subr.mxu0 0.0
    %4104 = vmatpush1.msra.mxu0 %v4069
    %4105 = vmatprep.subr.mxu0 0.0
    %4106 = vmatpush1.msra.mxu0 %v4068
    %4107 = vmatprep.subr.mxu0 0.0
    %4108 = vmatpush2.msra.mxu0 0.0
    %4109 = vmatprep.subr.mxu0 0.0
    %4110 = vmatpush2.msra.mxu0 0.0
    %4111 = vmatprep.subr.mxu0 0.0
    %4112 = vmatpush2.msra.mxu0 0.0
    %4113 = vmatprep.subr.mxu0 0.0
    %4114 = vmatpush2.msra.mxu0 0.0
    %4115 = vmatprep.subr.mxu0 0.0
    %4116 = vmatpush2.msra.mxu0 0.0
    %4117 = vmatprep.subr.mxu0 0.0
    %4118 = vmatpush2.msra.mxu0 0.0
    %4119 = vmatprep.subr.mxu0 0.0
    %4120 = vmatpush2.msra.mxu0 0.0
    %4121 = vmatprep.subr.mxu0 0.0
    %4122 = vmatpush2.msra.mxu0 0.0
    %4123 = vmatprep.subr.mxu0 0.0
    %4124 = vmatpush2.msra.mxu0 0.0
    %4125 = vmatprep.subr.mxu0 0.0
    %4126 = vmatpush2.msra.mxu0 0.0
    %4127 = vmatprep.subr.mxu0 0.0
    %4128 = vmatpush2.msra.mxu0 0.0
    %4129 = vmatprep.subr.mxu0 0.0
    %4130 = vmatpush2.msra.mxu0 0.0
    %4131 = vmatprep.subr.mxu0 0.0
    %4132 = vmatpush2.msra.mxu0 0.0
    %4133 = vmatprep.subr.mxu0 0.0
    %4134 = vmatpush2.msra.mxu0 0.0
    %4135 = vmatprep.subr.mxu0 0.0
    %4136 = vmatpush2.msra.mxu0 0.0
    %4137 = vmatprep.subr.mxu0 0.0
    %4138 = vmatpush2.msra.mxu0 0.0
    %4139 = vmatprep.mubr.f32.mxu0 0.0
    %4140 = vmatmul.mubr.f32.gmra.mxu0 %v4073
    %v4141 = vpop.f32.mrf.mxu0
    %v4142 = vadd.f32 0.0, %v4141
    %v4143 = vpop.f32.mrf.mxu0
    %4144 = vdwg.mxu0
    %v4146 = vsel %vm1088, %v3988, 0
    %4148 = vmatprep.subr.mxu0 0.0
    %4149 = vmatpush1.msra.mxu0 0.0
    %4150 = vmatprep.subr.mxu0 0.0
    %4151 = vmatpush1.msra.mxu0 0.0
    %4152 = vmatprep.subr.mxu0 0.0
    %4153 = vmatpush1.msra.mxu0 0.0
    %4154 = vmatprep.subr.mxu0 0.0
    %4155 = vmatpush1.msra.mxu0 0.0
    %4156 = vmatprep.subr.mxu0 0.0
    %4157 = vmatpush1.msra.mxu0 0.0
    %4158 = vmatprep.subr.mxu0 0.0
    %4159 = vmatpush1.msra.mxu0 0.0
    %4160 = vmatprep.subr.mxu0 0.0
    %4161 = vmatpush1.msra.mxu0 0.0
    %4162 = vmatprep.subr.mxu0 0.0
    %4163 = vmatpush1.msra.mxu0 0.0
    %4164 = vmatprep.subr.mxu0 0.0
    %4165 = vmatpush1.msra.mxu0 0.0
    %4166 = vmatprep.subr.mxu0 0.0
    %4167 = vmatpush1.msra.mxu0 0.0
    %4168 = vmatprep.subr.mxu0 0.0
    %4169 = vmatpush1.msra.mxu0 0.0
    %4170 = vmatprep.subr.mxu0 0.0
    %4171 = vmatpush1.msra.mxu0 0.0
    %4172 = vmatprep.subr.mxu0 0.0
    %4173 = vmatpush1.msra.mxu0 %v4067
    %4174 = vmatprep.subr.mxu0 0.0
    %4175 = vmatpush1.msra.mxu0 %v4066
    %4176 = vmatprep.subr.mxu0 0.0
    %4177 = vmatpush1.msra.mxu0 %v4065
    %4178 = vmatprep.subr.mxu0 0.0
    %4179 = vmatpush1.msra.mxu0 %v4064
    %4180 = vmatprep.subr.mxu0 0.0
    %4181 = vmatpush2.msra.mxu0 0.0
    %4182 = vmatprep.subr.mxu0 0.0
    %4183 = vmatpush2.msra.mxu0 0.0
    %4184 = vmatprep.subr.mxu0 0.0
    %4185 = vmatpush2.msra.mxu0 0.0
    %4186 = vmatprep.subr.mxu0 0.0
    %4187 = vmatpush2.msra.mxu0 0.0
    %4188 = vmatprep.subr.mxu0 0.0
    %4189 = vmatpush2.msra.mxu0 0.0
    %4190 = vmatprep.subr.mxu0 0.0
    %4191 = vmatpush2.msra.mxu0 0.0
    %4192 = vmatprep.subr.mxu0 0.0
    %4193 = vmatpush2.msra.mxu0 0.0
    %4194 = vmatprep.subr.mxu0 0.0
    %4195 = vmatpush2.msra.mxu0 0.0
    %4196 = vmatprep.subr.mxu0 0.0
    %4197 = vmatpush2.msra.mxu0 0.0
    %4198 = vmatprep.subr.mxu0 0.0
    %4199 = vmatpush2.msra.mxu0 0.0
    %4200 = vmatprep.subr.mxu0 0.0
    %4201 = vmatpush2.msra.mxu0 0.0
    %4202 = vmatprep.subr.mxu0 0.0
    %4203 = vmatpush2.msra.mxu0 0.0
    %4204 = vmatprep.subr.mxu0 0.0
    %4205 = vmatpush2.msra.mxu0 0.0
    %4206 = vmatprep.subr.mxu0 0.0
    %4207 = vmatpush2.msra.mxu0 0.0
    %4208 = vmatprep.subr.mxu0 0.0
    %4209 = vmatpush2.msra.mxu0 0.0
    %4210 = vmatprep.subr.mxu0 0.0
    %4211 = vmatpush2.msra.mxu0 0.0
    %4212 = vmatprep.mubr.f32.mxu0 0.0
    %4213 = vmatmul.mubr.f32.gmra.mxu0 %v4146
    %v4214 = vpop.f32.mrf.mxu0
    %v4215 = vadd.f32 %v4142, %v4214
    %v4216 = vpop.f32.mrf.mxu0
    %4217 = vdwg.mxu0
    %v4218 = vld [vmem:[%s89] sm:$0x1]
    %v4220 = vlaneseq
    %v4221 = vshrl.u32 %v4220, 7
    %v4222 = vsub.s32 0, %v4221
    %v4223 = vrot.slane %v4218, %v4222
    %v4225 = vadd.f32 %v4215, %v4223
    %v4226 = vmax.f32 %v4225, 0.0
    %v4227 = vld [vmem:[%s91] sm:$0xff]
    %v4228 = vld [vmem:[%s91 + $0x8] sm:$0xff]
    %v4229 = vld [vmem:[%s91 + $0x10] sm:$0xff]
    %v4230 = vld [vmem:[%s91 + $0x18] sm:$0xff]
    %v4231 = vld [vmem:[%s93] sm:$0x1]
    %v4233 = vlaneseq
    %v4234 = vshrl.u32 %v4233, 7
    %v4235 = vsub.s32 0, %v4234
    %v4236 = vrot.slane %v4231, %v4235
    %v4239 = vsel %vm1088, %v4226, 0
    %4241 = vmatprep.subr.mxu0 0.0
    %4242 = vmatpush1.msra.mxu0 0.0
    %4243 = vmatprep.subr.mxu0 0.0
    %4244 = vmatpush1.msra.mxu0 0.0
    %4245 = vmatprep.subr.mxu0 0.0
    %4246 = vmatpush1.msra.mxu0 0.0
    %4247 = vmatprep.subr.mxu0 0.0
    %4248 = vmatpush1.msra.mxu0 0.0
    %4249 = vmatprep.subr.mxu0 0.0
    %4250 = vmatpush1.msra.mxu0 0.0
    %4251 = vmatprep.subr.mxu0 0.0
    %4252 = vmatpush1.msra.mxu0 0.0
    %4253 = vmatprep.subr.mxu0 0.0
    %4254 = vmatpush1.msra.mxu0 0.0
    %4255 = vmatprep.subr.mxu0 0.0
    %4256 = vmatpush1.msra.mxu0 0.0
    %4257 = vmatprep.subr.mxu0 0.0
    %4258 = vmatpush1.msra.mxu0 0.0
    %4259 = vmatprep.subr.mxu0 0.0
    %4260 = vmatpush1.msra.mxu0 0.0
    %4261 = vmatprep.subr.mxu0 0.0
    %4262 = vmatpush1.msra.mxu0 0.0
    %4263 = vmatprep.subr.mxu0 0.0
    %4264 = vmatpush1.msra.mxu0 0.0
    %4265 = vmatprep.subr.mxu0 0.0
    %4266 = vmatpush1.msra.mxu0 %v4230
    %4267 = vmatprep.subr.mxu0 0.0
    %4268 = vmatpush1.msra.mxu0 %v4229
    %4269 = vmatprep.subr.mxu0 0.0
    %4270 = vmatpush1.msra.mxu0 %v4228
    %4271 = vmatprep.subr.mxu0 0.0
    %4272 = vmatpush1.msra.mxu0 %v4227
    %4273 = vmatprep.subr.mxu0 0.0
    %4274 = vmatpush2.msra.mxu0 0.0
    %4275 = vmatprep.subr.mxu0 0.0
    %4276 = vmatpush2.msra.mxu0 0.0
    %4277 = vmatprep.subr.mxu0 0.0
    %4278 = vmatpush2.msra.mxu0 0.0
    %4279 = vmatprep.subr.mxu0 0.0
    %4280 = vmatpush2.msra.mxu0 0.0
    %4281 = vmatprep.subr.mxu0 0.0
    %4282 = vmatpush2.msra.mxu0 0.0
    %4283 = vmatprep.subr.mxu0 0.0
    %4284 = vmatpush2.msra.mxu0 0.0
    %4285 = vmatprep.subr.mxu0 0.0
    %4286 = vmatpush2.msra.mxu0 0.0
    %4287 = vmatprep.subr.mxu0 0.0
    %4288 = vmatpush2.msra.mxu0 0.0
    %4289 = vmatprep.subr.mxu0 0.0
    %4290 = vmatpush2.msra.mxu0 0.0
    %4291 = vmatprep.subr.mxu0 0.0
    %4292 = vmatpush2.msra.mxu0 0.0
    %4293 = vmatprep.subr.mxu0 0.0
    %4294 = vmatpush2.msra.mxu0 0.0
    %4295 = vmatprep.subr.mxu0 0.0
    %4296 = vmatpush2.msra.mxu0 0.0
    %4297 = vmatprep.subr.mxu0 0.0
    %4298 = vmatpush2.msra.mxu0 0.0
    %4299 = vmatprep.subr.mxu0 0.0
    %4300 = vmatpush2.msra.mxu0 0.0
    %4301 = vmatprep.subr.mxu0 0.0
    %4302 = vmatpush2.msra.mxu0 0.0
    %4303 = vmatprep.subr.mxu0 0.0
    %4304 = vmatpush2.msra.mxu0 0.0
    %4305 = vmatprep.mubr.f32.mxu0 0.0
    %4306 = vmatmul.mubr.f32.gmra.mxu0 %v4239
    %v4307 = vpop.f32.mrf.mxu0
    %v4308 = vadd.f32 %v4236, %v4307
    %v4309 = vpop.f32.mrf.mxu0
    %4310 = vdwg.mxu0
    %v4311 = vmax.f32 %v4308, 0.0
    %v4312 = vld [vmem:[%s95] sm:$0x1]
    %v4314 = vlaneseq
    %v4315 = vshrl.u32 %v4314, 7
    %v4316 = vsub.s32 0, %v4315
    %v4317 = vrot.slane %v4312, %v4316
    %v4319 = vmul.f32 %v4311, %v4317
    %v4320 = vsel %vm1181, %v4319, 0.0
    %4321 = vadd.xlane.f32.xlu0 %v4320
    %v4322 = vpop.xlane.xlu0 %4321
    %v4323 = vld [vmem:[#allocation2] sm:$0x1]
    %v4325 = vlaneseq
    %v4326 = vshrl.u32 %v4325, 7
    %v4327 = vsub.s32 0, %v4326
    %v4328 = vrot.slane %v4323, %v4327
    %v4330 = vadd.f32 %v4322, %v4328
    %v4331 = vsub.f32 0.0, %v4330
    %v4332 = vmul.f32 %v4331, 1.442695
    %v4333 = vpow.pop %v4332
    %v4334 = vadd.f32 %v4333, 1.0
    %v4335 = vrcp.pop %v4334
    %v4336 = vmul.f32 1.0, %v4335
    %vm4337 = vcmask 7168
    %4338 = vst.msk [vmem:[%s101] sm:$0xff] %vm4337, %v4336
    %vm4339 = vcmp.lt.s32.totalorder %v395, 16
    %vm4340 = vcmp.lt.s32.totalorder %v396, 16
    %v4341 = vsel %vm4339, 1, 0
    %v4342 = vsel %vm4340, 1, 0
    %v4343 = vcvt.s32.f32 %v4341
    %v4344 = vcvt.s32.f32 %v4342
    %v4345 = vmul.f32 %v3122, %v4343
    %v4346 = vmul.f32 %v3123, %v4344
    %v4347 = vadd.s32 %v395, 16
    %v4348 = vadd.s32 %v395, 24
    %vm4349 = vcmp.eq.s32.totalorder %v887, %v395
    %vm4350 = vcmp.eq.s32.totalorder %v887, %v396
    %vm4351 = vcmp.eq.s32.totalorder %v887, %v4347
    %vm4352 = vcmp.eq.s32.totalorder %v887, %v4348
    %v4353 = vsel %vm4349, 1, 0
    %v4354 = vsel %vm4350, 1, 0
    %v4355 = vsel %vm4351, 1, 0
    %v4356 = vsel %vm4352, 1, 0
    %v4357 = vcvt.s32.f32 %v4353
    %v4358 = vcvt.s32.f32 %v4354
    %v4359 = vcvt.s32.f32 %v4355
    %v4360 = vcvt.s32.f32 %v4356
    %vm4361 = vcmp.lt.s32.totalorder %v395, 12
    %vm4362 = vcmp.lt.s32.totalorder %v396, 12
    %v4363 = vsel %vm4361, 1, 0
    %v4364 = vsel %vm4362, 1, 0
    %v4365 = vcvt.s32.f32 %v4363
    %v4366 = vcvt.s32.f32 %v4364
    %v4367 = vmul.f32 %v3515, %v4365
    %v4368 = vmul.f32 %v3516, %v4366
    %v4369 = vadd.s32 %v395, 32
    %v4370 = vadd.s32 %v396, 32
    %v4371 = vadd.s32 %v4347, 32
    %v4372 = vadd.s32 %v4348, 32
    %vm4373 = vcmp.eq.s32.totalorder %v887, %v4369
    %vm4374 = vcmp.eq.s32.totalorder %v887, %v4370
    %vm4375 = vcmp.eq.s32.totalorder %v887, %v4371
    %vm4376 = vcmp.eq.s32.totalorder %v887, %v4372
    %v4377 = vsel %vm4373, 1, 0
    %v4378 = vsel %vm4374, 1, 0
    %v4379 = vsel %vm4375, 1, 0
    %v4380 = vsel %vm4376, 1, 0
    %v4381 = vcvt.s32.f32 %v4377
    %v4382 = vcvt.s32.f32 %v4378
    %v4383 = vcvt.s32.f32 %v4379
    %v4384 = vcvt.s32.f32 %v4380
    %v4386 = vsel %vm1088, %v4367, 0
    %v4389 = vsel %vm1088, %v4368, 0
    %4391 = vmatprep.subr.mxu0 0.0
    %4392 = vmatpush1.msra.mxu0 0.0
    %4393 = vmatprep.subr.mxu0 0.0
    %4394 = vmatpush1.msra.mxu0 0.0
    %4395 = vmatprep.subr.mxu0 0.0
    %4396 = vmatpush1.msra.mxu0 0.0
    %4397 = vmatprep.subr.mxu0 0.0
    %4398 = vmatpush1.msra.mxu0 0.0
    %4399 = vmatprep.subr.mxu0 0.0
    %4400 = vmatpush1.msra.mxu0 0.0
    %4401 = vmatprep.subr.mxu0 0.0
    %4402 = vmatpush1.msra.mxu0 0.0
    %4403 = vmatprep.subr.mxu0 0.0
    %4404 = vmatpush1.msra.mxu0 0.0
    %4405 = vmatprep.subr.mxu0 0.0
    %4406 = vmatpush1.msra.mxu0 0.0
    %4407 = vmatprep.subr.mxu0 0.0
    %4408 = vmatpush1.msra.mxu0 0.0
    %4409 = vmatprep.subr.mxu0 0.0
    %4410 = vmatpush1.msra.mxu0 0.0
    %4411 = vmatprep.subr.mxu0 0.0
    %4412 = vmatpush1.msra.mxu0 0.0
    %4413 = vmatprep.subr.mxu0 0.0
    %4414 = vmatpush1.msra.mxu0 0.0
    %4415 = vmatprep.subr.mxu0 0.0
    %4416 = vmatpush1.msra.mxu0 %v4384
    %4417 = vmatprep.subr.mxu0 0.0
    %4418 = vmatpush1.msra.mxu0 %v4383
    %4419 = vmatprep.subr.mxu0 0.0
    %4420 = vmatpush1.msra.mxu0 %v4382
    %4421 = vmatprep.subr.mxu0 0.0
    %4422 = vmatpush1.msra.mxu0 %v4381
    %4423 = vmatprep.subr.mxu0 0.0
    %4424 = vmatpush2.msra.mxu0 0.0
    %4425 = vmatprep.subr.mxu0 0.0
    %4426 = vmatpush2.msra.mxu0 0.0
    %4427 = vmatprep.subr.mxu0 0.0
    %4428 = vmatpush2.msra.mxu0 0.0
    %4429 = vmatprep.subr.mxu0 0.0
    %4430 = vmatpush2.msra.mxu0 0.0
    %4431 = vmatprep.subr.mxu0 0.0
    %4432 = vmatpush2.msra.mxu0 0.0
    %4433 = vmatprep.subr.mxu0 0.0
    %4434 = vmatpush2.msra.mxu0 0.0
    %4435 = vmatprep.subr.mxu0 0.0
    %4436 = vmatpush2.msra.mxu0 0.0
    %4437 = vmatprep.subr.mxu0 0.0
    %4438 = vmatpush2.msra.mxu0 0.0
    %4439 = vmatprep.subr.mxu0 0.0
    %4440 = vmatpush2.msra.mxu0 0.0
    %4441 = vmatprep.subr.mxu0 0.0
    %4442 = vmatpush2.msra.mxu0 0.0
    %4443 = vmatprep.subr.mxu0 0.0
    %4444 = vmatpush2.msra.mxu0 0.0
    %4445 = vmatprep.subr.mxu0 0.0
    %4446 = vmatpush2.msra.mxu0 0.0
    %4447 = vmatprep.subr.mxu0 0.0
    %4448 = vmatpush2.msra.mxu0 0.0
    %4449 = vmatprep.subr.mxu0 0.0
    %4450 = vmatpush2.msra.mxu0 0.0
    %4451 = vmatprep.subr.mxu0 0.0
    %4452 = vmatpush2.msra.mxu0 0.0
    %4453 = vmatprep.subr.mxu0 0.0
    %4454 = vmatpush2.msra.mxu0 0.0
    %4455 = vmatprep.mubr.f32.mxu0 0.0
    %4456 = vmatmul.mubr.f32.gmra.mxu0 %v4386
    %v4457 = vpop.f32.mrf.mxu0
    %v4458 = vadd.f32 0.0, %v4457
    %v4459 = vpop.f32.mrf.mxu0
    %4460 = vmatprep.mubr.f32.mxu0 0.0
    %4461 = vmatmul.mubr.f32.gmra.mxu0 %v4389
    %v4462 = vpop.f32.mrf.mxu0
    %v4463 = vadd.f32 0.0, %v4462
    %v4464 = vpop.f32.mrf.mxu0
    %4465 = vdwg.mxu0
    %v4467 = vsel %vm1088, %v4345, 0
    %v4470 = vsel %vm1088, %v4346, 0
    %4472 = vmatprep.subr.mxu0 0.0
    %4473 = vmatpush1.msra.mxu0 0.0
    %4474 = vmatprep.subr.mxu0 0.0
    %4475 = vmatpush1.msra.mxu0 0.0
    %4476 = vmatprep.subr.mxu0 0.0
    %4477 = vmatpush1.msra.mxu0 0.0
    %4478 = vmatprep.subr.mxu0 0.0
    %4479 = vmatpush1.msra.mxu0 0.0
    %4480 = vmatprep.subr.mxu0 0.0
    %4481 = vmatpush1.msra.mxu0 0.0
    %4482 = vmatprep.subr.mxu0 0.0
    %4483 = vmatpush1.msra.mxu0 0.0
    %4484 = vmatprep.subr.mxu0 0.0
    %4485 = vmatpush1.msra.mxu0 0.0
    %4486 = vmatprep.subr.mxu0 0.0
    %4487 = vmatpush1.msra.mxu0 0.0
    %4488 = vmatprep.subr.mxu0 0.0
    %4489 = vmatpush1.msra.mxu0 0.0
    %4490 = vmatprep.subr.mxu0 0.0
    %4491 = vmatpush1.msra.mxu0 0.0
    %4492 = vmatprep.subr.mxu0 0.0
    %4493 = vmatpush1.msra.mxu0 0.0
    %4494 = vmatprep.subr.mxu0 0.0
    %4495 = vmatpush1.msra.mxu0 0.0
    %4496 = vmatprep.subr.mxu0 0.0
    %4497 = vmatpush1.msra.mxu0 %v4360
    %4498 = vmatprep.subr.mxu0 0.0
    %4499 = vmatpush1.msra.mxu0 %v4359
    %4500 = vmatprep.subr.mxu0 0.0
    %4501 = vmatpush1.msra.mxu0 %v4358
    %4502 = vmatprep.subr.mxu0 0.0
    %4503 = vmatpush1.msra.mxu0 %v4357
    %4504 = vmatprep.subr.mxu0 0.0
    %4505 = vmatpush2.msra.mxu0 0.0
    %4506 = vmatprep.subr.mxu0 0.0
    %4507 = vmatpush2.msra.mxu0 0.0
    %4508 = vmatprep.subr.mxu0 0.0
    %4509 = vmatpush2.msra.mxu0 0.0
    %4510 = vmatprep.subr.mxu0 0.0
    %4511 = vmatpush2.msra.mxu0 0.0
    %4512 = vmatprep.subr.mxu0 0.0
    %4513 = vmatpush2.msra.mxu0 0.0
    %4514 = vmatprep.subr.mxu0 0.0
    %4515 = vmatpush2.msra.mxu0 0.0
    %4516 = vmatprep.subr.mxu0 0.0
    %4517 = vmatpush2.msra.mxu0 0.0
    %4518 = vmatprep.subr.mxu0 0.0
    %4519 = vmatpush2.msra.mxu0 0.0
    %4520 = vmatprep.subr.mxu0 0.0
    %4521 = vmatpush2.msra.mxu0 0.0
    %4522 = vmatprep.subr.mxu0 0.0
    %4523 = vmatpush2.msra.mxu0 0.0
    %4524 = vmatprep.subr.mxu0 0.0
    %4525 = vmatpush2.msra.mxu0 0.0
    %4526 = vmatprep.subr.mxu0 0.0
    %4527 = vmatpush2.msra.mxu0 0.0
    %4528 = vmatprep.subr.mxu0 0.0
    %4529 = vmatpush2.msra.mxu0 0.0
    %4530 = vmatprep.subr.mxu0 0.0
    %4531 = vmatpush2.msra.mxu0 0.0
    %4532 = vmatprep.subr.mxu0 0.0
    %4533 = vmatpush2.msra.mxu0 0.0
    %4534 = vmatprep.subr.mxu0 0.0
    %4535 = vmatpush2.msra.mxu0 0.0
    %4536 = vmatprep.mubr.f32.mxu0 0.0
    %4537 = vmatmul.mubr.f32.gmra.mxu0 %v4467
    %v4538 = vpop.f32.mrf.mxu0
    %v4539 = vadd.f32 %v4458, %v4538
    %v4540 = vpop.f32.mrf.mxu0
    %4541 = vmatprep.mubr.f32.mxu0 0.0
    %4542 = vmatmul.mubr.f32.gmra.mxu0 %v4470
    %v4543 = vpop.f32.mrf.mxu0
    %v4544 = vadd.f32 %v4463, %v4543
    %v4545 = vpop.f32.mrf.mxu0
    %4546 = vdwg.mxu0
    %vm4547 = vcmp.lt.s32.totalorder %v395, 10
    %vm4548 = vcmp.lt.s32.totalorder %v396, 10
    %v4549 = vsel %vm4547, 1, 0
    %v4550 = vsel %vm4548, 1, 0
    %v4551 = vcvt.s32.f32 %v4549
    %v4552 = vcvt.s32.f32 %v4550
    %v4553 = vmul.f32 %v3902, %v4551
    %v4554 = vmul.f32 %v3903, %v4552
    %v4555 = vadd.s32 %v395, 64
    %v4556 = vadd.s32 %v396, 64
    %v4557 = vadd.s32 %v4347, 64
    %v4558 = vadd.s32 %v4348, 64
    %vm4559 = vcmp.eq.s32.totalorder %v887, %v4555
    %vm4560 = vcmp.eq.s32.totalorder %v887, %v4556
    %vm4561 = vcmp.eq.s32.totalorder %v887, %v4557
    %vm4562 = vcmp.eq.s32.totalorder %v887, %v4558
    %v4563 = vsel %vm4559, 1, 0
    %v4564 = vsel %vm4560, 1, 0
    %v4565 = vsel %vm4561, 1, 0
    %v4566 = vsel %vm4562, 1, 0
    %v4567 = vcvt.s32.f32 %v4563
    %v4568 = vcvt.s32.f32 %v4564
    %v4569 = vcvt.s32.f32 %v4565
    %v4570 = vcvt.s32.f32 %v4566
    %v4572 = vsel %vm1088, %v4553, 0
    %v4575 = vsel %vm1088, %v4554, 0
    %4577 = vmatprep.subr.mxu0 0.0
    %4578 = vmatpush1.msra.mxu0 0.0
    %4579 = vmatprep.subr.mxu0 0.0
    %4580 = vmatpush1.msra.mxu0 0.0
    %4581 = vmatprep.subr.mxu0 0.0
    %4582 = vmatpush1.msra.mxu0 0.0
    %4583 = vmatprep.subr.mxu0 0.0
    %4584 = vmatpush1.msra.mxu0 0.0
    %4585 = vmatprep.subr.mxu0 0.0
    %4586 = vmatpush1.msra.mxu0 0.0
    %4587 = vmatprep.subr.mxu0 0.0
    %4588 = vmatpush1.msra.mxu0 0.0
    %4589 = vmatprep.subr.mxu0 0.0
    %4590 = vmatpush1.msra.mxu0 0.0
    %4591 = vmatprep.subr.mxu0 0.0
    %4592 = vmatpush1.msra.mxu0 0.0
    %4593 = vmatprep.subr.mxu0 0.0
    %4594 = vmatpush1.msra.mxu0 0.0
    %4595 = vmatprep.subr.mxu0 0.0
    %4596 = vmatpush1.msra.mxu0 0.0
    %4597 = vmatprep.subr.mxu0 0.0
    %4598 = vmatpush1.msra.mxu0 0.0
    %4599 = vmatprep.subr.mxu0 0.0
    %4600 = vmatpush1.msra.mxu0 0.0
    %4601 = vmatprep.subr.mxu0 0.0
    %4602 = vmatpush1.msra.mxu0 %v4570
    %4603 = vmatprep.subr.mxu0 0.0
    %4604 = vmatpush1.msra.mxu0 %v4569
    %4605 = vmatprep.subr.mxu0 0.0
    %4606 = vmatpush1.msra.mxu0 %v4568
    %4607 = vmatprep.subr.mxu0 0.0
    %4608 = vmatpush1.msra.mxu0 %v4567
    %4609 = vmatprep.subr.mxu0 0.0
    %4610 = vmatpush2.msra.mxu0 0.0
    %4611 = vmatprep.subr.mxu0 0.0
    %4612 = vmatpush2.msra.mxu0 0.0
    %4613 = vmatprep.subr.mxu0 0.0
    %4614 = vmatpush2.msra.mxu0 0.0
    %4615 = vmatprep.subr.mxu0 0.0
    %4616 = vmatpush2.msra.mxu0 0.0
    %4617 = vmatprep.subr.mxu0 0.0
    %4618 = vmatpush2.msra.mxu0 0.0
    %4619 = vmatprep.subr.mxu0 0.0
    %4620 = vmatpush2.msra.mxu0 0.0
    %4621 = vmatprep.subr.mxu0 0.0
    %4622 = vmatpush2.msra.mxu0 0.0
    %4623 = vmatprep.subr.mxu0 0.0
    %4624 = vmatpush2.msra.mxu0 0.0
    %4625 = vmatprep.subr.mxu0 0.0
    %4626 = vmatpush2.msra.mxu0 0.0
    %4627 = vmatprep.subr.mxu0 0.0
    %4628 = vmatpush2.msra.mxu0 0.0
    %4629 = vmatprep.subr.mxu0 0.0
    %4630 = vmatpush2.msra.mxu0 0.0
    %4631 = vmatprep.subr.mxu0 0.0
    %4632 = vmatpush2.msra.mxu0 0.0
    %4633 = vmatprep.subr.mxu0 0.0
    %4634 = vmatpush2.msra.mxu0 0.0
    %4635 = vmatprep.subr.mxu0 0.0
    %4636 = vmatpush2.msra.mxu0 0.0
    %4637 = vmatprep.subr.mxu0 0.0
    %4638 = vmatpush2.msra.mxu0 0.0
    %4639 = vmatprep.subr.mxu0 0.0
    %4640 = vmatpush2.msra.mxu0 0.0
    %4641 = vmatprep.mubr.f32.mxu0 0.0
    %4642 = vmatmul.mubr.f32.gmra.mxu0 %v4572
    %v4643 = vpop.f32.mrf.mxu0
    %v4644 = vadd.f32 0.0, %v4643
    %v4645 = vpop.f32.mrf.mxu0
    %4646 = vmatprep.mubr.f32.mxu0 0.0
    %4647 = vmatmul.mubr.f32.gmra.mxu0 %v4575
    %v4648 = vpop.f32.mrf.mxu0
    %v4649 = vadd.f32 0.0, %v4648
    %v4650 = vpop.f32.mrf.mxu0
    %4651 = vdwg.mxu0
    %v4652 = vadd.f32 %v4539, %v4644
    %v4653 = vadd.f32 %v4544, %v4649
    %4654 = vst [vmem:[#allocation29] sm:$0xff] %v4652
    %4655 = vst [vmem:[#allocation29 + $0x8] sm:$0xff] %v4653
    // Predicated region
    $region262: #{tpu_custom_call.1} parent=1 // pred_check
      _
    $region263: #{tpu_custom_call.1} parent=1 // pred_check_branch
      %4657 = sbr.rel (0) target = $region265
    $region264: #{tpu_custom_call.1} parent=1 // pred_region
      %s4659 = ssub.s32 256, 256
      %4660 = vsyncadd [#allocation5], %s4659
      %s4661 = sshll.u32 [#allocation29], 4
      %s4662 = int_to_ptr.vmem [resolvable:$true] %s4661
      %4667 = dma.vmem_to_hbm [thread:$0]  %s4662, 256, %s99, [#allocation5], 128, 128, 8
    $region265: #{tpu_custom_call.1} parent=1 // pred_fallthru
      _
    // Predicated region
    $region266: #{tpu_custom_call.1} parent=1 // pred_check
      _
    $region267: #{tpu_custom_call.1} parent=1 // pred_check_branch
      %4669 = sbr.rel (0) target = $region269
    $region268: #{tpu_custom_call.1} parent=1 // pred_region
      _
    $region269: #{tpu_custom_call.1} parent=1 // pred_fallthru
      _
    // Predicated region
    $region270: #{tpu_custom_call.1} parent=1 // pred_check
      _
    $region271: #{tpu_custom_call.1} parent=1 // pred_check_branch
      %4671 = sbr.rel (0) target = $region273
    $region272: #{tpu_custom_call.1} parent=1 // pred_region
      %4672 = dma.done [#allocation5], 256
    $region273: #{tpu_custom_call.1} parent=1 // pred_fallthru
      _
    // Predicated region
    $region274: #{tpu_custom_call.1} parent=1 // pred_check
      _
    $region275: #{tpu_custom_call.1} parent=1 // pred_check_branch
      %4674 = sbr.rel (0) target = $region277
    $region276: #{tpu_custom_call.1} parent=1 // pred_region
      _
    $region277: #{tpu_custom_call.1} parent=1 // pred_fallthru
      _
    %4675 = vsyncpa [#allocation4], 1
    %4676 = vsyncpa [#allocation7], 1
    %4677 = vsyncpa [#allocation10], 1
    %4678 = vsyncpa [#allocation13], 1
    %4679 = vsyncpa [#allocation16], 1
    %4680 = vsyncpa [#allocation19], 1
    %4681 = vsyncpa [#allocation22], 1
    %4682 = vsyncpa [#allocation25], 1
    %4683 = vsyncpa [#allocation28], 1
    %4684 = vsyncpa [#allocation5], 1

</llo_original>
